<compile_context>
chip_gen: v7x
topology: tpu7x:2x2x1
jax: 0.10.0
libtpu: 0.0.40
codegen_flags: <defaults>
</compile_context>

<pallas_src>
import functools
import math

import jax
import jax.numpy as jnp
from jax.experimental import pallas as pl
from jax.experimental.pallas import tpu as pltpu


# ---------------------------------------------------------------------------
# Fused encoder kernel (per batch element)
# ---------------------------------------------------------------------------

def _fused_encoder_kernel(x_ref, pos_ref,
                          wp_ref, bp_ref,
                          wqk_ref, bqk_ref,
                          wv_ref, bv_ref,
                          wo_ref, bo_ref,
                          g1_ref, be1_ref,
                          w1_ref, b1_ref,
                          w2_ref, b2_ref,
                          g2_ref, be2_ref,
                          o_ref,
                          *, nhead, scale, eps):
    f32 = jnp.float32
    bf16 = jnp.bfloat16

    def mm(a, w):
        # bf16 operands -> MXU, f32 accumulation.
        return jax.lax.dot_general(
            a.astype(bf16), w.astype(bf16),
            dimension_numbers=(((1,), (0,)), ((), ())),
            preferred_element_type=f32)

    def ln(x, g, b):
        mean = jnp.mean(x, axis=-1, keepdims=True)
        xc = x - mean
        var = jnp.mean(xc * xc, axis=-1, keepdims=True)
        return xc * jax.lax.rsqrt(var + eps) * g + b

    x = x_ref[0].astype(f32)                 # [S, Cp]  pooled patch tokens
    pos = pos_ref[...]                       # [S, D]

    # fused (backbone 1x1 conv) @ (input_proj 1x1 conv)
    src = mm(x, wp_ref[...]) + bp_ref[...]   # [S, D]

    D = src.shape[-1]
    Dh = D // nhead

    # DETR: q = k = src + pos, v = src
    qk = mm(src + pos, wqk_ref[...]) + bqk_ref[...]   # [S, 2D]
    q = qk[:, :D]
    k = qk[:, D:]
    v = mm(src, wv_ref[...]) + bv_ref[...]            # [S, D]

    # per-head softmax attention (static unroll; head slices stay in-register)
    heads = []
    for h in range(nhead):
        qh = q[:, h * Dh:(h + 1) * Dh]
        kh = k[:, h * Dh:(h + 1) * Dh]
        vh = v[:, h * Dh:(h + 1) * Dh]
        s = jax.lax.dot_general(
            qh.astype(bf16), kh.astype(bf16),
            dimension_numbers=(((1,), (1,)), ((), ())),
            preferred_element_type=f32) * scale        # [S, S]
        m = jnp.max(s, axis=-1, keepdims=True)
        p = jnp.exp(s - m)
        p = p * pl.reciprocal(jnp.sum(p, axis=-1, keepdims=True), approx=True)
        heads.append(mm(p, vh))                        # [S, Dh]
    attn = jnp.concatenate(heads, axis=-1)             # [S, D]

    # output projection + residual + LN1
    x1 = ln(src + mm(attn, wo_ref[...]) + bo_ref[...],
            g1_ref[...], be1_ref[...])

    # FFN + residual + LN2
    ff = jnp.maximum(mm(x1, w1_ref[...]) + b1_ref[...], 0.0)
    ff = mm(ff, w2_ref[...]) + b2_ref[...]
    x2 = ln(x1 + ff, g2_ref[...], be2_ref[...])

    o_ref[0] = x2.astype(o_ref.dtype)


# ---------------------------------------------------------------------------
# Deterministic parameter construction
# ---------------------------------------------------------------------------

def make_params(key, in_ch, backbone_ch, hidden_dim, nhead, dim_ff):
    ks = jax.random.split(key, 12)
    s = 0.02
    return {
        # synthetic backbone: 1x1 conv (patchified image -> backbone_ch features)
        "bb_w": s * jax.random.normal(ks[0], (in_ch, backbone_ch), jnp.float32),
        "bb_b": s * jax.random.normal(ks[1], (backbone_ch,), jnp.float32),
        # input_proj: nn.Conv2d(backbone_ch, hidden_dim, kernel_size=1)
        "proj_w": s * jax.random.normal(ks[2], (backbone_ch, hidden_dim), jnp.float32),
        "proj_b": s * jax.random.normal(ks[3], (hidden_dim,), jnp.float32),
        # encoder layer: multi-head self-attention
        "wq": s * jax.random.normal(ks[4], (hidden_dim, hidden_dim), jnp.float32),
        "wk": s * jax.random.normal(ks[5], (hidden_dim, hidden_dim), jnp.float32),
        "wv": s * jax.random.normal(ks[6], (hidden_dim, hidden_dim), jnp.float32),
        "wo": s * jax.random.normal(ks[7], (hidden_dim, hidden_dim), jnp.float32),
        "bq": jnp.zeros((hidden_dim,), jnp.float32),
        "bk": jnp.zeros((hidden_dim,), jnp.float32),
        "bv": jnp.zeros((hidden_dim,), jnp.float32),
        "bo": jnp.zeros((hidden_dim,), jnp.float32),
        "ln1_g": jnp.ones((hidden_dim,), jnp.float32),
        "ln1_b": jnp.zeros((hidden_dim,), jnp.float32),
        # FFN
        "w1": s * jax.random.normal(ks[8], (hidden_dim, dim_ff), jnp.float32),
        "b1": s * jax.random.normal(ks[9], (dim_ff,), jnp.float32),
        "w2": s * jax.random.normal(ks[10], (dim_ff, hidden_dim), jnp.float32),
        "b2": s * jax.random.normal(ks[11], (hidden_dim,), jnp.float32),
        "ln2_g": jnp.ones((hidden_dim,), jnp.float32),
        "ln2_b": jnp.zeros((hidden_dim,), jnp.float32),
    }


def sine_pos_embed(H, W, D, temperature=10000.0):
    """DETR-style 2D sine positional embedding -> [H*W, D] (input-independent
    constant, folded at trace time)."""
    npf = D // 2
    y = (jnp.arange(H, dtype=jnp.float32) + 1.0) / H * (2.0 * math.pi)
    x = (jnp.arange(W, dtype=jnp.float32) + 1.0) / W * (2.0 * math.pi)
    dim_t = temperature ** (2.0 * (jnp.arange(npf) // 2).astype(jnp.float32) / npf)
    pos_y = jnp.broadcast_to(y[:, None, None] / dim_t, (H, W, npf))
    pos_x = jnp.broadcast_to(x[None, :, None] / dim_t, (H, W, npf))

    def interleave(p):
        return jnp.stack([jnp.sin(p[..., 0::2]), jnp.cos(p[..., 1::2])],
                         axis=-1).reshape(H, W, npf)

    pos = jnp.concatenate([interleave(pos_y), interleave(pos_x)], axis=-1)
    return pos.reshape(H * W, D).astype(jnp.float32)


# ---------------------------------------------------------------------------
# CaptionEncoder forward
# ---------------------------------------------------------------------------

def caption_encoder_forward(params, samples, *, hidden_dim, nhead, dim_ff, patch):
    """samples: NCHW [B, 3, Himg, Wimg] float32 (PyTorch image convention)."""
    B, Cin, Himg, Wimg = samples.shape
    H, W = Himg // patch, Wimg // patch
    S, D, F = H * W, hidden_dim, dim_ff
    Dh = D // nhead

    # --- patchify average-pool backbone stem (cheap XLA glue) ---------------
    x = jnp.transpose(samples, (0, 2, 3, 1))                        # NHWC
    x_tok = (x.reshape(B, H, patch, W, patch, Cin)
              .mean(axis=(2, 4))
              .reshape(B, S, Cin))

    # --- fold backbone 1x1 conv + input_proj 1x1 conv into one linear map ---
    w_comb = params["bb_w"] @ params["proj_w"]                      # [Cin, D]
    b_comb = params["bb_b"] @ params["proj_w"] + params["proj_b"]   # [D]

    # zero-pad contraction dim to a sublane-aligned size (no effect on result)
    Cp = max(8, -(-Cin // 8) * 8)
    x_tok = jnp.pad(x_tok, ((0, 0), (0, 0), (0, Cp - Cin)))
    w_comb = jnp.pad(w_comb, ((0, Cp - Cin), (0, 0)))

    # --- fuse Q and K projections (both consume src + pos) ------------------
    wqk = jnp.concatenate([params["wq"], params["wk"]], axis=1)     # [D, 2D]
    bqk = jnp.concatenate([params["bq"], params["bk"]], axis=0)     # [2D]

    pos2d = sine_pos_embed(H, W, D)                                 # [S, D]
    mask = jnp.zeros((B, H, W), dtype=jnp.bool_)                    # all valid

    kernel = functools.partial(_fused_encoder_kernel, nhead=nhead,
                               scale=1.0 / math.sqrt(Dh), eps=1e-5)

    row = lambda a: a.reshape(1, -1)
    const2d = lambda shape: pl.BlockSpec(shape, lambda b: (0, 0))

    memory = pl.pallas_call(
        kernel,
        out_shape=jax.ShapeDtypeStruct((B, S, D), jnp.float32),
        grid=(B,),
        in_specs=[
            pl.BlockSpec((1, S, Cp), lambda b: (b, 0, 0)),   # pooled tokens
            const2d((S, D)),                                  # pos
            const2d((Cp, D)), const2d((1, D)),                # fused proj W, b
            const2d((D, 2 * D)), const2d((1, 2 * D)),         # Wq|Wk, bq|bk
            const2d((D, D)), const2d((1, D)),                 # Wv, bv
            const2d((D, D)), const2d((1, D)),                 # Wo, bo
            const2d((1, D)), const2d((1, D)),                 # LN1 gamma, beta
            const2d((D, F)), const2d((1, F)),                 # FFN W1, b1
            const2d((F, D)), const2d((1, D)),                 # FFN W2, b2
            const2d((1, D)), const2d((1, D)),                 # LN2 gamma, beta
        ],
        out_specs=pl.BlockSpec((1, S, D), lambda b: (b, 0, 0)),
        compiler_params=pltpu.CompilerParams(
            dimension_semantics=("parallel",)),
    )(
        x_tok, pos2d,
        w_comb, row(b_comb),
        wqk, row(bqk),
        params["wv"], row(params["bv"]),
        params["wo"], row(params["bo"]),
        row(params["ln1_g"]), row(params["ln1_b"]),
        params["w1"], row(params["b1"]),
        params["w2"], row(params["b2"]),
        row(params["ln2_g"]), row(params["ln2_b"]),
    )

    pos = jnp.broadcast_to(pos2d[None], (B, S, D))
    # TODO(synk): NestedTensor / nested_tensor_from_tensor_list variable-size
    # padding is represented by the explicit all-valid `mask`; ragged batching
    # has no clean single-kernel Pallas equivalent here.
    return memory, mask, pos


# ---------------------------------------------------------------------------
# Main
# ---------------------------------------------------------------------------

if __name__ == "__main__":
    key = jax.random.PRNGKey(0)
    kp, kx = jax.random.split(key)

    B, Cin, Himg, Wimg = 2, 3, 32, 32
    backbone_ch, hidden_dim, nhead, dim_ff, patch = 8, 32, 4, 128, 4

    params = make_params(kp, Cin, backbone_ch, hidden_dim, nhead, dim_ff)
    samples = jax.random.normal(kx, (B, Cin, Himg, Wimg), jnp.float32)

    fwd = jax.jit(functools.partial(
        caption_encoder_forward,
        hidden_dim=hidden_dim, nhead=nhead, dim_ff=dim_ff, patch=patch))

    memory, mask, pos = fwd(params, samples)
    jax.block_until_ready((memory, mask, pos))

    S = (Himg // patch) * (Wimg // patch)
    assert memory.shape == (B, S, hidden_dim)
    assert mask.shape == (B, Himg // patch, Wimg // patch)
    assert pos.shape == (B, S, hidden_dim)
    assert bool(jnp.all(jnp.isfinite(memory)))
    print("KERNEL_OK")
</pallas_src>

<mosaic_0001>
module attributes {stable_mosaic.version = 11 : i64} {
  func.func @_fused_encoder_kernel(%arg0: i32, %arg1: memref<1x64x8xf32, #tpu.memory_space<vmem>>, %arg2: memref<64x32xf32, #tpu.memory_space<vmem>>, %arg3: memref<8x32xf32, #tpu.memory_space<vmem>>, %arg4: memref<1x32xf32, #tpu.memory_space<vmem>>, %arg5: memref<32x64xf32, #tpu.memory_space<vmem>>, %arg6: memref<1x64xf32, #tpu.memory_space<vmem>>, %arg7: memref<32x32xf32, #tpu.memory_space<vmem>>, %arg8: memref<1x32xf32, #tpu.memory_space<vmem>>, %arg9: memref<32x32xf32, #tpu.memory_space<vmem>>, %arg10: memref<1x32xf32, #tpu.memory_space<vmem>>, %arg11: memref<1x32xf32, #tpu.memory_space<vmem>>, %arg12: memref<1x32xf32, #tpu.memory_space<vmem>>, %arg13: memref<32x128xf32, #tpu.memory_space<vmem>>, %arg14: memref<1x128xf32, #tpu.memory_space<vmem>>, %arg15: memref<128x32xf32, #tpu.memory_space<vmem>>, %arg16: memref<1x32xf32, #tpu.memory_space<vmem>>, %arg17: memref<1x32xf32, #tpu.memory_space<vmem>>, %arg18: memref<1x32xf32, #tpu.memory_space<vmem>>, %arg19: memref<1x64x32xf32, #tpu.memory_space<vmem>>) attributes {dimension_semantics = [#tpu.dimension_semantics<parallel>], iteration_bounds = array<i64: 2>, scalar_prefetch = 0 : i64, scratch_operands = 0 : i64, tpu.core_type = #tpu.core_type<tc>, window_params = [{transform_indices = @transform_0, window_bounds = array<i64: 1, 64, 8>}, {pipeline_mode = #tpu.pipeline_mode<synchronous>, transform_indices = @transform_1, window_bounds = array<i64: 64, 32>}, {pipeline_mode = #tpu.pipeline_mode<synchronous>, transform_indices = @transform_2, window_bounds = array<i64: 8, 32>}, {pipeline_mode = #tpu.pipeline_mode<synchronous>, transform_indices = @transform_3, window_bounds = array<i64: 1, 32>}, {pipeline_mode = #tpu.pipeline_mode<synchronous>, transform_indices = @transform_4, window_bounds = array<i64: 32, 64>}, {pipeline_mode = #tpu.pipeline_mode<synchronous>, transform_indices = @transform_5, window_bounds = array<i64: 1, 64>}, {pipeline_mode = #tpu.pipeline_mode<synchronous>, transform_indices = @transform_6, window_bounds = array<i64: 32, 32>}, {pipeline_mode = #tpu.pipeline_mode<synchronous>, transform_indices = @transform_7, window_bounds = array<i64: 1, 32>}, {pipeline_mode = #tpu.pipeline_mode<synchronous>, transform_indices = @transform_8, window_bounds = array<i64: 32, 32>}, {pipeline_mode = #tpu.pipeline_mode<synchronous>, transform_indices = @transform_9, window_bounds = array<i64: 1, 32>}, {pipeline_mode = #tpu.pipeline_mode<synchronous>, transform_indices = @transform_10, window_bounds = array<i64: 1, 32>}, {pipeline_mode = #tpu.pipeline_mode<synchronous>, transform_indices = @transform_11, window_bounds = array<i64: 1, 32>}, {pipeline_mode = #tpu.pipeline_mode<synchronous>, transform_indices = @transform_12, window_bounds = array<i64: 32, 128>}, {pipeline_mode = #tpu.pipeline_mode<synchronous>, transform_indices = @transform_13, window_bounds = array<i64: 1, 128>}, {pipeline_mode = #tpu.pipeline_mode<synchronous>, transform_indices = @transform_14, window_bounds = array<i64: 128, 32>}, {pipeline_mode = #tpu.pipeline_mode<synchronous>, transform_indices = @transform_15, window_bounds = array<i64: 1, 32>}, {pipeline_mode = #tpu.pipeline_mode<synchronous>, transform_indices = @transform_16, window_bounds = array<i64: 1, 32>}, {pipeline_mode = #tpu.pipeline_mode<synchronous>, transform_indices = @transform_17, window_bounds = array<i64: 1, 32>}, {transform_indices = @transform_18, window_bounds = array<i64: 1, 64, 32>}]} {
    %c0 = arith.constant 0 : index
    %c0_0 = arith.constant 0 : index
    %c0_1 = arith.constant 0 : index
    %0 = vector.load %arg1[%c0, %c0_0, %c0_1] : memref<1x64x8xf32, #tpu.memory_space<vmem>>, vector<1x64x8xf32>
    %1 = vector.shape_cast %0 : vector<1x64x8xf32> to vector<64x8xf32>
    %c0_2 = arith.constant 0 : index
    %c0_3 = arith.constant 0 : index
    %2 = vector.load %arg2[%c0_2, %c0_3] : memref<64x32xf32, #tpu.memory_space<vmem>>, vector<64x32xf32>
    %c0_4 = arith.constant 0 : index
    %c0_5 = arith.constant 0 : index
    %3 = vector.load %arg3[%c0_4, %c0_5] : memref<8x32xf32, #tpu.memory_space<vmem>>, vector<8x32xf32>
    %4 = arith.truncf %1 : vector<64x8xf32> to vector<64x8xbf16>
    %5 = arith.truncf %3 : vector<8x32xf32> to vector<8x32xbf16>
    %cst = arith.constant dense<0.000000e+00> : vector<64x32xf32>
    %6 = tpu.matmul %4, %5, %cst {dimension_numbers = #tpu.dot_dimension_numbers<[1], [0], [0], [1], [0, 0, 1, 1], [], []>} : vector<64x8xbf16>, vector<8x32xbf16>, vector<64x32xf32> -> vector<64x32xf32>
    %c0_6 = arith.constant 0 : index
    %c0_7 = arith.constant 0 : index
    %7 = vector.load %arg4[%c0_6, %c0_7] : memref<1x32xf32, #tpu.memory_space<vmem>>, vector<1x32xf32>
    %8 = vector.broadcast %7 : vector<1x32xf32> to vector<64x32xf32>
    %9 = arith.addf %6, %8 : vector<64x32xf32>
    %10 = arith.addf %9, %2 : vector<64x32xf32>
    %c0_8 = arith.constant 0 : index
    %c0_9 = arith.constant 0 : index
    %11 = vector.load %arg5[%c0_8, %c0_9] : memref<32x64xf32, #tpu.memory_space<vmem>>, vector<32x64xf32>
    %12 = arith.truncf %10 : vector<64x32xf32> to vector<64x32xbf16>
    %13 = arith.truncf %11 : vector<32x64xf32> to vector<32x64xbf16>
    %cst_10 = arith.constant dense<0.000000e+00> : vector<64x64xf32>
    %14 = tpu.matmul %12, %13, %cst_10 {dimension_numbers = #tpu.dot_dimension_numbers<[1], [0], [0], [1], [0, 0, 1, 1], [], []>} : vector<64x32xbf16>, vector<32x64xbf16>, vector<64x64xf32> -> vector<64x64xf32>
    %c0_11 = arith.constant 0 : index
    %c0_12 = arith.constant 0 : index
    %15 = vector.load %arg6[%c0_11, %c0_12] : memref<1x64xf32, #tpu.memory_space<vmem>>, vector<1x64xf32>
    %16 = vector.broadcast %15 : vector<1x64xf32> to vector<64x64xf32>
    %17 = arith.addf %14, %16 : vector<64x64xf32>
    %18 = vector.extract_strided_slice %17 {offsets = [0, 0], sizes = [64, 32], strides = [1, 1]} : vector<64x64xf32> to vector<64x32xf32>
    %19 = vector.extract_strided_slice %17 {offsets = [0, 32], sizes = [64, 32], strides = [1, 1]} : vector<64x64xf32> to vector<64x32xf32>
    %c0_13 = arith.constant 0 : index
    %c0_14 = arith.constant 0 : index
    %20 = vector.load %arg7[%c0_13, %c0_14] : memref<32x32xf32, #tpu.memory_space<vmem>>, vector<32x32xf32>
    %21 = arith.truncf %9 : vector<64x32xf32> to vector<64x32xbf16>
    %22 = arith.truncf %20 : vector<32x32xf32> to vector<32x32xbf16>
    %cst_15 = arith.constant dense<0.000000e+00> : vector<64x32xf32>
    %23 = tpu.matmul %21, %22, %cst_15 {dimension_numbers = #tpu.dot_dimension_numbers<[1], [0], [0], [1], [0, 0, 1, 1], [], []>} : vector<64x32xbf16>, vector<32x32xbf16>, vector<64x32xf32> -> vector<64x32xf32>
    %c0_16 = arith.constant 0 : index
    %c0_17 = arith.constant 0 : index
    %24 = vector.load %arg8[%c0_16, %c0_17] : memref<1x32xf32, #tpu.memory_space<vmem>>, vector<1x32xf32>
    %25 = vector.broadcast %24 : vector<1x32xf32> to vector<64x32xf32>
    %26 = arith.addf %23, %25 : vector<64x32xf32>
    %27 = vector.extract_strided_slice %18 {offsets = [0, 0], sizes = [64, 8], strides = [1, 1]} : vector<64x32xf32> to vector<64x8xf32>
    %28 = vector.extract_strided_slice %19 {offsets = [0, 0], sizes = [64, 8], strides = [1, 1]} : vector<64x32xf32> to vector<64x8xf32>
    %29 = vector.extract_strided_slice %26 {offsets = [0, 0], sizes = [64, 8], strides = [1, 1]} : vector<64x32xf32> to vector<64x8xf32>
    %30 = arith.truncf %27 : vector<64x8xf32> to vector<64x8xbf16>
    %31 = arith.truncf %28 : vector<64x8xf32> to vector<64x8xbf16>
    %cst_18 = arith.constant dense<0.000000e+00> : vector<64x64xf32>
    %32 = tpu.matmul %30, %31, %cst_18 {dimension_numbers = #tpu.dot_dimension_numbers<[1], [1], [0], [0], [0, 0, 1, 0], [], []>} : vector<64x8xbf16>, vector<64x8xbf16>, vector<64x64xf32> -> vector<64x64xf32>
    %cst_19 = arith.constant 0.353553385 : f32
    %33 = vector.broadcast %cst_19 : f32 to vector<64x64xf32>
    %34 = arith.mulf %32, %33 : vector<64x64xf32>
    %cst_20 = arith.constant dense<0xFF800000> : vector<64xf32>
    %35 = vector.multi_reduction <maximumf>, %34, %cst_20 [1] : vector<64x64xf32> to vector<64xf32>
    %36 = vector.shape_cast %35 : vector<64xf32> to vector<64x1xf32>
    %37 = vector.broadcast %36 : vector<64x1xf32> to vector<64x64xf32>
    %38 = arith.subf %34, %37 : vector<64x64xf32>
    %39 = math.exp %38 : vector<64x64xf32>
    %cst_21 = arith.constant dense<0.000000e+00> : vector<64xf32>
    %40 = vector.multi_reduction <add>, %39, %cst_21 [1] : vector<64x64xf32> to vector<64xf32>
    %41 = vector.shape_cast %40 : vector<64xf32> to vector<64x1xf32>
    %42 = tpu.reciprocal %41 {approx = true} : vector<64x1xf32> -> vector<64x1xf32>
    %43 = vector.broadcast %42 : vector<64x1xf32> to vector<64x64xf32>
    %44 = arith.mulf %39, %43 : vector<64x64xf32>
    %45 = arith.truncf %44 : vector<64x64xf32> to vector<64x64xbf16>
    %46 = arith.truncf %29 : vector<64x8xf32> to vector<64x8xbf16>
    %cst_22 = arith.constant dense<0.000000e+00> : vector<64x8xf32>
    %47 = tpu.matmul %45, %46, %cst_22 {dimension_numbers = #tpu.dot_dimension_numbers<[1], [0], [0], [1], [0, 0, 1, 1], [], []>} : vector<64x64xbf16>, vector<64x8xbf16>, vector<64x8xf32> -> vector<64x8xf32>
    %48 = vector.extract_strided_slice %18 {offsets = [0, 8], sizes = [64, 8], strides = [1, 1]} : vector<64x32xf32> to vector<64x8xf32>
    %49 = vector.extract_strided_slice %19 {offsets = [0, 8], sizes = [64, 8], strides = [1, 1]} : vector<64x32xf32> to vector<64x8xf32>
    %50 = vector.extract_strided_slice %26 {offsets = [0, 8], sizes = [64, 8], strides = [1, 1]} : vector<64x32xf32> to vector<64x8xf32>
    %51 = arith.truncf %48 : vector<64x8xf32> to vector<64x8xbf16>
    %52 = arith.truncf %49 : vector<64x8xf32> to vector<64x8xbf16>
    %cst_23 = arith.constant dense<0.000000e+00> : vector<64x64xf32>
    %53 = tpu.matmul %51, %52, %cst_23 {dimension_numbers = #tpu.dot_dimension_numbers<[1], [1], [0], [0], [0, 0, 1, 0], [], []>} : vector<64x8xbf16>, vector<64x8xbf16>, vector<64x64xf32> -> vector<64x64xf32>
    %cst_24 = arith.constant 0.353553385 : f32
    %54 = vector.broadcast %cst_24 : f32 to vector<64x64xf32>
    %55 = arith.mulf %53, %54 : vector<64x64xf32>
    %cst_25 = arith.constant dense<0xFF800000> : vector<64xf32>
    %56 = vector.multi_reduction <maximumf>, %55, %cst_25 [1] : vector<64x64xf32> to vector<64xf32>
    %57 = vector.shape_cast %56 : vector<64xf32> to vector<64x1xf32>
    %58 = vector.broadcast %57 : vector<64x1xf32> to vector<64x64xf32>
    %59 = arith.subf %55, %58 : vector<64x64xf32>
    %60 = math.exp %59 : vector<64x64xf32>
    %cst_26 = arith.constant dense<0.000000e+00> : vector<64xf32>
    %61 = vector.multi_reduction <add>, %60, %cst_26 [1] : vector<64x64xf32> to vector<64xf32>
    %62 = vector.shape_cast %61 : vector<64xf32> to vector<64x1xf32>
    %63 = tpu.reciprocal %62 {approx = true} : vector<64x1xf32> -> vector<64x1xf32>
    %64 = vector.broadcast %63 : vector<64x1xf32> to vector<64x64xf32>
    %65 = arith.mulf %60, %64 : vector<64x64xf32>
    %66 = arith.truncf %65 : vector<64x64xf32> to vector<64x64xbf16>
    %67 = arith.truncf %50 : vector<64x8xf32> to vector<64x8xbf16>
    %cst_27 = arith.constant dense<0.000000e+00> : vector<64x8xf32>
    %68 = tpu.matmul %66, %67, %cst_27 {dimension_numbers = #tpu.dot_dimension_numbers<[1], [0], [0], [1], [0, 0, 1, 1], [], []>} : vector<64x64xbf16>, vector<64x8xbf16>, vector<64x8xf32> -> vector<64x8xf32>
    %69 = vector.extract_strided_slice %18 {offsets = [0, 16], sizes = [64, 8], strides = [1, 1]} : vector<64x32xf32> to vector<64x8xf32>
    %70 = vector.extract_strided_slice %19 {offsets = [0, 16], sizes = [64, 8], strides = [1, 1]} : vector<64x32xf32> to vector<64x8xf32>
    %71 = vector.extract_strided_slice %26 {offsets = [0, 16], sizes = [64, 8], strides = [1, 1]} : vector<64x32xf32> to vector<64x8xf32>
    %72 = arith.truncf %69 : vector<64x8xf32> to vector<64x8xbf16>
    %73 = arith.truncf %70 : vector<64x8xf32> to vector<64x8xbf16>
    %cst_28 = arith.constant dense<0.000000e+00> : vector<64x64xf32>
    %74 = tpu.matmul %72, %73, %cst_28 {dimension_numbers = #tpu.dot_dimension_numbers<[1], [1], [0], [0], [0, 0, 1, 0], [], []>} : vector<64x8xbf16>, vector<64x8xbf16>, vector<64x64xf32> -> vector<64x64xf32>
    %cst_29 = arith.constant 0.353553385 : f32
    %75 = vector.broadcast %cst_29 : f32 to vector<64x64xf32>
    %76 = arith.mulf %74, %75 : vector<64x64xf32>
    %cst_30 = arith.constant dense<0xFF800000> : vector<64xf32>
    %77 = vector.multi_reduction <maximumf>, %76, %cst_30 [1] : vector<64x64xf32> to vector<64xf32>
    %78 = vector.shape_cast %77 : vector<64xf32> to vector<64x1xf32>
    %79 = vector.broadcast %78 : vector<64x1xf32> to vector<64x64xf32>
    %80 = arith.subf %76, %79 : vector<64x64xf32>
    %81 = math.exp %80 : vector<64x64xf32>
    %cst_31 = arith.constant dense<0.000000e+00> : vector<64xf32>
    %82 = vector.multi_reduction <add>, %81, %cst_31 [1] : vector<64x64xf32> to vector<64xf32>
    %83 = vector.shape_cast %82 : vector<64xf32> to vector<64x1xf32>
    %84 = tpu.reciprocal %83 {approx = true} : vector<64x1xf32> -> vector<64x1xf32>
    %85 = vector.broadcast %84 : vector<64x1xf32> to vector<64x64xf32>
    %86 = arith.mulf %81, %85 : vector<64x64xf32>
    %87 = arith.truncf %86 : vector<64x64xf32> to vector<64x64xbf16>
    %88 = arith.truncf %71 : vector<64x8xf32> to vector<64x8xbf16>
    %cst_32 = arith.constant dense<0.000000e+00> : vector<64x8xf32>
    %89 = tpu.matmul %87, %88, %cst_32 {dimension_numbers = #tpu.dot_dimension_numbers<[1], [0], [0], [1], [0, 0, 1, 1], [], []>} : vector<64x64xbf16>, vector<64x8xbf16>, vector<64x8xf32> -> vector<64x8xf32>
    %90 = vector.extract_strided_slice %18 {offsets = [0, 24], sizes = [64, 8], strides = [1, 1]} : vector<64x32xf32> to vector<64x8xf32>
    %91 = vector.extract_strided_slice %19 {offsets = [0, 24], sizes = [64, 8], strides = [1, 1]} : vector<64x32xf32> to vector<64x8xf32>
    %92 = vector.extract_strided_slice %26 {offsets = [0, 24], sizes = [64, 8], strides = [1, 1]} : vector<64x32xf32> to vector<64x8xf32>
    %93 = arith.truncf %90 : vector<64x8xf32> to vector<64x8xbf16>
    %94 = arith.truncf %91 : vector<64x8xf32> to vector<64x8xbf16>
    %cst_33 = arith.constant dense<0.000000e+00> : vector<64x64xf32>
    %95 = tpu.matmul %93, %94, %cst_33 {dimension_numbers = #tpu.dot_dimension_numbers<[1], [1], [0], [0], [0, 0, 1, 0], [], []>} : vector<64x8xbf16>, vector<64x8xbf16>, vector<64x64xf32> -> vector<64x64xf32>
    %cst_34 = arith.constant 0.353553385 : f32
    %96 = vector.broadcast %cst_34 : f32 to vector<64x64xf32>
    %97 = arith.mulf %95, %96 : vector<64x64xf32>
    %cst_35 = arith.constant dense<0xFF800000> : vector<64xf32>
    %98 = vector.multi_reduction <maximumf>, %97, %cst_35 [1] : vector<64x64xf32> to vector<64xf32>
    %99 = vector.shape_cast %98 : vector<64xf32> to vector<64x1xf32>
    %100 = vector.broadcast %99 : vector<64x1xf32> to vector<64x64xf32>
    %101 = arith.subf %97, %100 : vector<64x64xf32>
    %102 = math.exp %101 : vector<64x64xf32>
    %cst_36 = arith.constant dense<0.000000e+00> : vector<64xf32>
    %103 = vector.multi_reduction <add>, %102, %cst_36 [1] : vector<64x64xf32> to vector<64xf32>
    %104 = vector.shape_cast %103 : vector<64xf32> to vector<64x1xf32>
    %105 = tpu.reciprocal %104 {approx = true} : vector<64x1xf32> -> vector<64x1xf32>
    %106 = vector.broadcast %105 : vector<64x1xf32> to vector<64x64xf32>
    %107 = arith.mulf %102, %106 : vector<64x64xf32>
    %108 = arith.truncf %107 : vector<64x64xf32> to vector<64x64xbf16>
    %109 = arith.truncf %92 : vector<64x8xf32> to vector<64x8xbf16>
    %cst_37 = arith.constant dense<0.000000e+00> : vector<64x8xf32>
    %110 = tpu.matmul %108, %109, %cst_37 {dimension_numbers = #tpu.dot_dimension_numbers<[1], [0], [0], [1], [0, 0, 1, 1], [], []>} : vector<64x64xbf16>, vector<64x8xbf16>, vector<64x8xf32> -> vector<64x8xf32>
    %111 = tpu.concatenate %47, %68, %89, %110 in 1 : vector<64x8xf32>, vector<64x8xf32>, vector<64x8xf32>, vector<64x8xf32> -> vector<64x32xf32>
    %c0_38 = arith.constant 0 : index
    %c0_39 = arith.constant 0 : index
    %112 = vector.load %arg9[%c0_38, %c0_39] : memref<32x32xf32, #tpu.memory_space<vmem>>, vector<32x32xf32>
    %113 = arith.truncf %111 : vector<64x32xf32> to vector<64x32xbf16>
    %114 = arith.truncf %112 : vector<32x32xf32> to vector<32x32xbf16>
    %cst_40 = arith.constant dense<0.000000e+00> : vector<64x32xf32>
    %115 = tpu.matmul %113, %114, %cst_40 {dimension_numbers = #tpu.dot_dimension_numbers<[1], [0], [0], [1], [0, 0, 1, 1], [], []>} : vector<64x32xbf16>, vector<32x32xbf16>, vector<64x32xf32> -> vector<64x32xf32>
    %116 = arith.addf %9, %115 : vector<64x32xf32>
    %c0_41 = arith.constant 0 : index
    %c0_42 = arith.constant 0 : index
    %117 = vector.load %arg10[%c0_41, %c0_42] : memref<1x32xf32, #tpu.memory_space<vmem>>, vector<1x32xf32>
    %118 = vector.broadcast %117 : vector<1x32xf32> to vector<64x32xf32>
    %119 = arith.addf %116, %118 : vector<64x32xf32>
    %c0_43 = arith.constant 0 : index
    %c0_44 = arith.constant 0 : index
    %120 = vector.load %arg11[%c0_43, %c0_44] : memref<1x32xf32, #tpu.memory_space<vmem>>, vector<1x32xf32>
    %c0_45 = arith.constant 0 : index
    %c0_46 = arith.constant 0 : index
    %121 = vector.load %arg12[%c0_45, %c0_46] : memref<1x32xf32, #tpu.memory_space<vmem>>, vector<1x32xf32>
    %cst_47 = arith.constant dense<0.000000e+00> : vector<64xf32>
    %122 = vector.multi_reduction <add>, %119, %cst_47 [1] : vector<64x32xf32> to vector<64xf32>
    %123 = vector.shape_cast %122 : vector<64xf32> to vector<64x1xf32>
    %cst_48 = arith.constant 3.200000e+01 : f32
    %124 = vector.broadcast %cst_48 : f32 to vector<64x1xf32>
    %125 = arith.divf %123, %124 : vector<64x1xf32>
    %126 = vector.broadcast %125 : vector<64x1xf32> to vector<64x32xf32>
    %127 = arith.subf %119, %126 : vector<64x32xf32>
    %128 = arith.mulf %127, %127 : vector<64x32xf32>
    %cst_49 = arith.constant dense<0.000000e+00> : vector<64xf32>
    %129 = vector.multi_reduction <add>, %128, %cst_49 [1] : vector<64x32xf32> to vector<64xf32>
    %130 = vector.shape_cast %129 : vector<64xf32> to vector<64x1xf32>
    %cst_50 = arith.constant 3.200000e+01 : f32
    %131 = vector.broadcast %cst_50 : f32 to vector<64x1xf32>
    %132 = arith.divf %130, %131 : vector<64x1xf32>
    %cst_51 = arith.constant 9.99999974E-6 : f32
    %133 = vector.broadcast %cst_51 : f32 to vector<64x1xf32>
    %134 = arith.addf %132, %133 : vector<64x1xf32>
    %135 = math.rsqrt %134 : vector<64x1xf32>
    %136 = vector.broadcast %135 : vector<64x1xf32> to vector<64x32xf32>
    %137 = arith.mulf %127, %136 : vector<64x32xf32>
    %138 = vector.broadcast %120 : vector<1x32xf32> to vector<64x32xf32>
    %139 = arith.mulf %137, %138 : vector<64x32xf32>
    %140 = vector.broadcast %121 : vector<1x32xf32> to vector<64x32xf32>
    %141 = arith.addf %139, %140 : vector<64x32xf32>
    %c0_52 = arith.constant 0 : index
    %c0_53 = arith.constant 0 : index
    %142 = vector.load %arg13[%c0_52, %c0_53] : memref<32x128xf32, #tpu.memory_space<vmem>>, vector<32x128xf32>
    %143 = arith.truncf %141 : vector<64x32xf32> to vector<64x32xbf16>
    %144 = arith.truncf %142 : vector<32x128xf32> to vector<32x128xbf16>
    %cst_54 = arith.constant dense<0.000000e+00> : vector<64x128xf32>
    %145 = tpu.matmul %143, %144, %cst_54 {dimension_numbers = #tpu.dot_dimension_numbers<[1], [0], [0], [1], [0, 0, 1, 1], [], []>} : vector<64x32xbf16>, vector<32x128xbf16>, vector<64x128xf32> -> vector<64x128xf32>
    %c0_55 = arith.constant 0 : index
    %c0_56 = arith.constant 0 : index
    %146 = vector.load %arg14[%c0_55, %c0_56] : memref<1x128xf32, #tpu.memory_space<vmem>>, vector<1x128xf32>
    %147 = vector.broadcast %146 : vector<1x128xf32> to vector<64x128xf32>
    %148 = arith.addf %145, %147 : vector<64x128xf32>
    %cst_57 = arith.constant 0.000000e+00 : f32
    %149 = vector.broadcast %cst_57 : f32 to vector<64x128xf32>
    %150 = arith.maximumf %148, %149 : vector<64x128xf32>
    %c0_58 = arith.constant 0 : index
    %c0_59 = arith.constant 0 : index
    %151 = vector.load %arg15[%c0_58, %c0_59] : memref<128x32xf32, #tpu.memory_space<vmem>>, vector<128x32xf32>
    %152 = arith.truncf %150 : vector<64x128xf32> to vector<64x128xbf16>
    %153 = arith.truncf %151 : vector<128x32xf32> to vector<128x32xbf16>
    %cst_60 = arith.constant dense<0.000000e+00> : vector<64x32xf32>
    %154 = tpu.matmul %152, %153, %cst_60 {dimension_numbers = #tpu.dot_dimension_numbers<[1], [0], [0], [1], [0, 0, 1, 1], [], []>} : vector<64x128xbf16>, vector<128x32xbf16>, vector<64x32xf32> -> vector<64x32xf32>
    %c0_61 = arith.constant 0 : index
    %c0_62 = arith.constant 0 : index
    %155 = vector.load %arg16[%c0_61, %c0_62] : memref<1x32xf32, #tpu.memory_space<vmem>>, vector<1x32xf32>
    %156 = vector.broadcast %155 : vector<1x32xf32> to vector<64x32xf32>
    %157 = arith.addf %154, %156 : vector<64x32xf32>
    %158 = arith.addf %141, %157 : vector<64x32xf32>
    %c0_63 = arith.constant 0 : index
    %c0_64 = arith.constant 0 : index
    %159 = vector.load %arg17[%c0_63, %c0_64] : memref<1x32xf32, #tpu.memory_space<vmem>>, vector<1x32xf32>
    %c0_65 = arith.constant 0 : index
    %c0_66 = arith.constant 0 : index
    %160 = vector.load %arg18[%c0_65, %c0_66] : memref<1x32xf32, #tpu.memory_space<vmem>>, vector<1x32xf32>
    %cst_67 = arith.constant dense<0.000000e+00> : vector<64xf32>
    %161 = vector.multi_reduction <add>, %158, %cst_67 [1] : vector<64x32xf32> to vector<64xf32>
    %162 = vector.shape_cast %161 : vector<64xf32> to vector<64x1xf32>
    %cst_68 = arith.constant 3.200000e+01 : f32
    %163 = vector.broadcast %cst_68 : f32 to vector<64x1xf32>
    %164 = arith.divf %162, %163 : vector<64x1xf32>
    %165 = vector.broadcast %164 : vector<64x1xf32> to vector<64x32xf32>
    %166 = arith.subf %158, %165 : vector<64x32xf32>
    %167 = arith.mulf %166, %166 : vector<64x32xf32>
    %cst_69 = arith.constant dense<0.000000e+00> : vector<64xf32>
    %168 = vector.multi_reduction <add>, %167, %cst_69 [1] : vector<64x32xf32> to vector<64xf32>
    %169 = vector.shape_cast %168 : vector<64xf32> to vector<64x1xf32>
    %cst_70 = arith.constant 3.200000e+01 : f32
    %170 = vector.broadcast %cst_70 : f32 to vector<64x1xf32>
    %171 = arith.divf %169, %170 : vector<64x1xf32>
    %cst_71 = arith.constant 9.99999974E-6 : f32
    %172 = vector.broadcast %cst_71 : f32 to vector<64x1xf32>
    %173 = arith.addf %171, %172 : vector<64x1xf32>
    %174 = math.rsqrt %173 : vector<64x1xf32>
    %175 = vector.broadcast %174 : vector<64x1xf32> to vector<64x32xf32>
    %176 = arith.mulf %166, %175 : vector<64x32xf32>
    %177 = vector.broadcast %159 : vector<1x32xf32> to vector<64x32xf32>
    %178 = arith.mulf %176, %177 : vector<64x32xf32>
    %179 = vector.broadcast %160 : vector<1x32xf32> to vector<64x32xf32>
    %180 = arith.addf %178, %179 : vector<64x32xf32>
    %c0_72 = arith.constant 0 : index
    %c0_73 = arith.constant 0 : index
    %c0_74 = arith.constant 0 : index
    %181 = vector.load %arg19[%c0_72, %c0_73, %c0_74] : memref<1x64x32xf32, #tpu.memory_space<vmem>>, vector<1x64x32xf32>
    %182 = vector.shape_cast %181 : vector<1x64x32xf32> to vector<64x32xf32>
    %183 = vector.shape_cast %180 : vector<64x32xf32> to vector<1x64x32xf32>
    tpu.vector_store %arg19[%c0_72, %c0_73, %c0_74], %183 {strides = array<i32>} : memref<1x64x32xf32, #tpu.memory_space<vmem>>, vector<1x64x32xf32>,
    return
  }
  func.func @transform_0(%arg0: i32) -> (i32, i32, i32) {
    %c0_i32 = arith.constant 0 : i32
    %c0_i32_0 = arith.constant 0 : i32
    %c0_i32_1 = arith.constant 0 : i32
    return %arg0, %c0_i32, %c0_i32_0 : i32, i32, i32
  }
  func.func @transform_1(%arg0: i32) -> (i32, i32) {
    %c0_i32 = arith.constant 0 : i32
    %c0_i32_0 = arith.constant 0 : i32
    %c0_i32_1 = arith.constant 0 : i32
    return %c0_i32, %c0_i32_0 : i32, i32
  }
  func.func @transform_2(%arg0: i32) -> (i32, i32) {
    %c0_i32 = arith.constant 0 : i32
    %c0_i32_0 = arith.constant 0 : i32
    %c0_i32_1 = arith.constant 0 : i32
    return %c0_i32, %c0_i32_0 : i32, i32
  }
  func.func @transform_3(%arg0: i32) -> (i32, i32) {
    %c0_i32 = arith.constant 0 : i32
    %c0_i32_0 = arith.constant 0 : i32
    %c0_i32_1 = arith.constant 0 : i32
    return %c0_i32, %c0_i32_0 : i32, i32
  }
  func.func @transform_4(%arg0: i32) -> (i32, i32) {
    %c0_i32 = arith.constant 0 : i32
    %c0_i32_0 = arith.constant 0 : i32
    %c0_i32_1 = arith.constant 0 : i32
    return %c0_i32, %c0_i32_0 : i32, i32
  }
  func.func @transform_5(%arg0: i32) -> (i32, i32) {
    %c0_i32 = arith.constant 0 : i32
    %c0_i32_0 = arith.constant 0 : i32
    %c0_i32_1 = arith.constant 0 : i32
    return %c0_i32, %c0_i32_0 : i32, i32
  }
  func.func @transform_6(%arg0: i32) -> (i32, i32) {
    %c0_i32 = arith.constant 0 : i32
    %c0_i32_0 = arith.constant 0 : i32
    %c0_i32_1 = arith.constant 0 : i32
    return %c0_i32, %c0_i32_0 : i32, i32
  }
  func.func @transform_7(%arg0: i32) -> (i32, i32) {
    %c0_i32 = arith.constant 0 : i32
    %c0_i32_0 = arith.constant 0 : i32
    %c0_i32_1 = arith.constant 0 : i32
    return %c0_i32, %c0_i32_0 : i32, i32
  }
  func.func @transform_8(%arg0: i32) -> (i32, i32) {
    %c0_i32 = arith.constant 0 : i32
    %c0_i32_0 = arith.constant 0 : i32
    %c0_i32_1 = arith.constant 0 : i32
    return %c0_i32, %c0_i32_0 : i32, i32
  }
  func.func @transform_9(%arg0: i32) -> (i32, i32) {
    %c0_i32 = arith.constant 0 : i32
    %c0_i32_0 = arith.constant 0 : i32
    %c0_i32_1 = arith.constant 0 : i32
    return %c0_i32, %c0_i32_0 : i32, i32
  }
  func.func @transform_10(%arg0: i32) -> (i32, i32) {
    %c0_i32 = arith.constant 0 : i32
    %c0_i32_0 = arith.constant 0 : i32
    %c0_i32_1 = arith.constant 0 : i32
    return %c0_i32, %c0_i32_0 : i32, i32
  }
  func.func @transform_11(%arg0: i32) -> (i32, i32) {
    %c0_i32 = arith.constant 0 : i32
    %c0_i32_0 = arith.constant 0 : i32
    %c0_i32_1 = arith.constant 0 : i32
    return %c0_i32, %c0_i32_0 : i32, i32
  }
  func.func @transform_12(%arg0: i32) -> (i32, i32) {
    %c0_i32 = arith.constant 0 : i32
    %c0_i32_0 = arith.constant 0 : i32
    %c0_i32_1 = arith.constant 0 : i32
    return %c0_i32, %c0_i32_0 : i32, i32
  }
  func.func @transform_13(%arg0: i32) -> (i32, i32) {
    %c0_i32 = arith.constant 0 : i32
    %c0_i32_0 = arith.constant 0 : i32
    %c0_i32_1 = arith.constant 0 : i32
    return %c0_i32, %c0_i32_0 : i32, i32
  }
  func.func @transform_14(%arg0: i32) -> (i32, i32) {
    %c0_i32 = arith.constant 0 : i32
    %c0_i32_0 = arith.constant 0 : i32
    %c0_i32_1 = arith.constant 0 : i32
    return %c0_i32, %c0_i32_0 : i32, i32
  }
  func.func @transform_15(%arg0: i32) -> (i32, i32) {
    %c0_i32 = arith.constant 0 : i32
    %c0_i32_0 = arith.constant 0 : i32
    %c0_i32_1 = arith.constant 0 : i32
    return %c0_i32, %c0_i32_0 : i32, i32
  }
  func.func @transform_16(%arg0: i32) -> (i32, i32) {
    %c0_i32 = arith.constant 0 : i32
    %c0_i32_0 = arith.constant 0 : i32
    %c0_i32_1 = arith.constant 0 : i32
    return %c0_i32, %c0_i32_0 : i32, i32
  }
  func.func @transform_17(%arg0: i32) -> (i32, i32) {
    %c0_i32 = arith.constant 0 : i32
    %c0_i32_0 = arith.constant 0 : i32
    %c0_i32_1 = arith.constant 0 : i32
    return %c0_i32, %c0_i32_0 : i32, i32
  }
  func.func @transform_18(%arg0: i32) -> (i32, i32, i32) {
    %c0_i32 = arith.constant 0 : i32
    %c0_i32_0 = arith.constant 0 : i32
    %c0_i32_1 = arith.constant 0 : i32
    return %arg0, %c0_i32, %c0_i32_0 : i32, i32, i32
  }
}

</mosaic_0001>

<llo_original>
// kernel: cos.4
$region0: #{cos.4}
  #allocation0 [shape = 's32[1]{0}', space=sflag, size = 0x4, scoped, tag = 'scoped memory for cos.4']
  %s0 = inlined_call_operand.vmem [shape: f32[8,8], index: 0, kind: input, shape index: {}]
  %s1 = inlined_call_operand.vmem [shape: f32[8,8], index: 1, kind: output, shape index: {}]
  %v2 = vld [vmem:[%s0] sm:$0xff]
  %v3 = vand.u32 2147483647, %v2
  %vm4 = vcmp.le.f32.partialorder %v3, 0.7853982
  %vm5 = vcmp.lt.s32.totalorder %v2, 0
  %v6 = vand.u32 %v2, 2139095040
  %v7 = vshrl.u32 %v6, 23
  %v8 = vsub.s32 %v7, 127
  %v9 = vand.u32 2147483647, %v2
  %v10 = vand.u32 %v9, 8388607
  %v11 = vor.u32 %v10, 8388608
  %v12 = vsub.s32 0, %v11
  %v13 = vadd.s32 %v8, 1
  %vm14 = vcmp.gt.s32.totalorder %v13, 0
  %v15 = vsel %vm14, %v13, 0
  %v16 = vshrl.u32 %v15, 5
  %v17 = vand.u32 %v15, 31
  %v18 = vsub.s32 32, %v17
  %v19 = vshrl.u32 683565275, %v18
  %v20 = vshll.u32 683565275, %v17
  %v21 = vshrl.u32 2475754826, %v18
  %v22 = vor.u32 %v20, %v21
  %v23 = vshll.u32 2475754826, %v17
  %v24 = vshrl.u32 2131351028, %v18
  %v25 = vor.u32 %v23, %v24
  %v26 = vshll.u32 2131351028, %v17
  %v27 = vshrl.u32 2102212464, %v18
  %v28 = vor.u32 %v26, %v27
  %v29 = vshll.u32 2102212464, %v17
  %v30 = vshrl.u32 920167782, %v18
  %v31 = vor.u32 %v29, %v30
  %v32 = vshll.u32 920167782, %v17
  %v33 = vshrl.u32 1326507024, %v18
  %v34 = vor.u32 %v32, %v33
  %vm35 = vcmp.lt.s32.totalorder %v16, 1
  %vm36 = vcmp.lt.s32.totalorder %v16, 2
  %vm37 = vcmp.lt.s32.totalorder %v16, 3
  %vm38 = vcmp.lt.s32.totalorder %v16, 4
  %v39 = vsel %vm35, %v19, %v22
  %v40 = vsel %vm38, %v28, 2102212464
  %v41 = vsel %vm37, %v25, %v40
  %v42 = vsel %vm36, %v39, %v41
  %v43 = vsel %vm35, %v22, %v25
  %v44 = vsel %vm38, %v31, 920167782
  %v45 = vsel %vm37, %v28, %v44
  %v46 = vsel %vm36, %v43, %v45
  %v47 = vsel %vm35, %v25, %v28
  %v48 = vsel %vm38, %v34, 1326507024
  %v49 = vsel %vm37, %v31, %v48
  %v50 = vsel %vm36, %v47, %v49
  %v51 = vshll.u32 %v11, 8
  %v52 = vmul.u32.u64.compose %v51, %v50
  %v53 = vextract.low.u32 %v52
  %v54 = vextract.high.u32 %v52
  %v55 = vmul.u32.u64.compose %v51, %v46
  %v56 = vextract.low.u32 %v55
  %v57 = vextract.high.u32 %v55
  %v58 = vmul.u32 %v51, %v42
  %v59 = vadd.s32 %v54, %v56
  %vm60 = vc.u32 %v54, %v56
  %v61 = vadd.s32 %v57, 1
  %v62 = vsel %vm60, %v61, %v57
  %v63 = vadd.s32 %v58, %v62
  %v64 = vadd.s32 %v63, 536870912
  %v65 = vshrl.u32 %v64, 30
  %v66 = vshll.u32 %v65, 30
  %v67 = vsub.s32 %v63, %v66
  %vm68 = vcmp.lt.s32.totalorder %v67, 0
  %v69 = vsub.s32 0, %v67
  %v70 = vsel %vm68, %v69, %v67
  %v71 = vclz %v70
  %v72 = vsub.s32 %v71, 2
  %vm73 = vcmp.gt.s32.totalorder 0, %v72
  %v74 = vsel %vm73, 0, %v72
  %v75 = vsub.s32 32, %v74
  %v76 = vshll.u32 %v67, %v74
  %v77 = vshrl.u32 %v59, %v75
  %v78 = vor.u32 %v76, %v77
  %v79 = vsub.s32 4294967266, %v74
  %v80 = vadd.s32 %v79, 127
  %v81 = vshll.u32 %v80, 23
  %v82 = vor.u32 4788187, %v81
  %v83 = vand.u32 2147483647, %v82
  %v85 = vcvt.s32.f32 %v78
  %v86 = vmul.f32 %v85, %v83
  %v87 = vxor.u32 %v86, 2147483648
  %v88 = vsel %vm5, %v87, %v86
  %v89 = vsub.s32 4, %v65
  %v90 = vsel %vm5, %v89, %v65
  %v91 = vsel %vm4, %v2, %v88
  %v92 = vsel %vm4, 0, %v90
  %v93 = vcosq.f32.pop %v91
  %v94 = vsinq.f32.pop %v91
  %vm95 = vweird.f32 %v2
  %v96 = vand.u32 %v92, 3
  %vm97 = vcmp.lt.s32.totalorder %v96, 2
  %vm98 = vcmp.eq.s32.totalorder %v96, 0
  %v99 = vxor.u32 %v94, 2147483648
  %v100 = vsel %vm98, %v93, %v99
  %vm101 = vcmp.eq.s32.totalorder %v96, 2
  %v102 = vxor.u32 %v93, 2147483648
  %v103 = vsel %vm101, %v102, %v94
  %v104 = vsel %vm97, %v100, %v103
  %v105 = vsel %vm95, nan, %v104
  %106 = vst [vmem:[%s1] sm:$0xff] %v105

// kernel: sin.4
$region0: #{sin.4}
  #allocation0 [shape = 's32[1]{0}', space=sflag, size = 0x4, scoped, tag = 'scoped memory for sin.4']
  %s0 = inlined_call_operand.vmem [shape: f32[8,8], index: 0, kind: input, shape index: {}]
  %s1 = inlined_call_operand.vmem [shape: f32[8,8], index: 1, kind: output, shape index: {}]
  %v2 = vld [vmem:[%s0] sm:$0xff]
  %v3 = vand.u32 2147483647, %v2
  %vm4 = vcmp.le.f32.partialorder %v3, 0.7853982
  %vm5 = vcmp.lt.s32.totalorder %v2, 0
  %v6 = vand.u32 %v2, 2139095040
  %v7 = vshrl.u32 %v6, 23
  %v8 = vsub.s32 %v7, 127
  %v9 = vand.u32 2147483647, %v2
  %v10 = vand.u32 %v9, 8388607
  %v11 = vor.u32 %v10, 8388608
  %v12 = vsub.s32 0, %v11
  %v13 = vadd.s32 %v8, 1
  %vm14 = vcmp.gt.s32.totalorder %v13, 0
  %v15 = vsel %vm14, %v13, 0
  %v16 = vshrl.u32 %v15, 5
  %v17 = vand.u32 %v15, 31
  %v18 = vsub.s32 32, %v17
  %v19 = vshrl.u32 683565275, %v18
  %v20 = vshll.u32 683565275, %v17
  %v21 = vshrl.u32 2475754826, %v18
  %v22 = vor.u32 %v20, %v21
  %v23 = vshll.u32 2475754826, %v17
  %v24 = vshrl.u32 2131351028, %v18
  %v25 = vor.u32 %v23, %v24
  %v26 = vshll.u32 2131351028, %v17
  %v27 = vshrl.u32 2102212464, %v18
  %v28 = vor.u32 %v26, %v27
  %v29 = vshll.u32 2102212464, %v17
  %v30 = vshrl.u32 920167782, %v18
  %v31 = vor.u32 %v29, %v30
  %v32 = vshll.u32 920167782, %v17
  %v33 = vshrl.u32 1326507024, %v18
  %v34 = vor.u32 %v32, %v33
  %vm35 = vcmp.lt.s32.totalorder %v16, 1
  %vm36 = vcmp.lt.s32.totalorder %v16, 2
  %vm37 = vcmp.lt.s32.totalorder %v16, 3
  %vm38 = vcmp.lt.s32.totalorder %v16, 4
  %v39 = vsel %vm35, %v19, %v22
  %v40 = vsel %vm38, %v28, 2102212464
  %v41 = vsel %vm37, %v25, %v40
  %v42 = vsel %vm36, %v39, %v41
  %v43 = vsel %vm35, %v22, %v25
  %v44 = vsel %vm38, %v31, 920167782
  %v45 = vsel %vm37, %v28, %v44
  %v46 = vsel %vm36, %v43, %v45
  %v47 = vsel %vm35, %v25, %v28
  %v48 = vsel %vm38, %v34, 1326507024
  %v49 = vsel %vm37, %v31, %v48
  %v50 = vsel %vm36, %v47, %v49
  %v51 = vshll.u32 %v11, 8
  %v52 = vmul.u32.u64.compose %v51, %v50
  %v53 = vextract.low.u32 %v52
  %v54 = vextract.high.u32 %v52
  %v55 = vmul.u32.u64.compose %v51, %v46
  %v56 = vextract.low.u32 %v55
  %v57 = vextract.high.u32 %v55
  %v58 = vmul.u32 %v51, %v42
  %v59 = vadd.s32 %v54, %v56
  %vm60 = vc.u32 %v54, %v56
  %v61 = vadd.s32 %v57, 1
  %v62 = vsel %vm60, %v61, %v57
  %v63 = vadd.s32 %v58, %v62
  %v64 = vadd.s32 %v63, 536870912
  %v65 = vshrl.u32 %v64, 30
  %v66 = vshll.u32 %v65, 30
  %v67 = vsub.s32 %v63, %v66
  %vm68 = vcmp.lt.s32.totalorder %v67, 0
  %v69 = vsub.s32 0, %v67
  %v70 = vsel %vm68, %v69, %v67
  %v71 = vclz %v70
  %v72 = vsub.s32 %v71, 2
  %vm73 = vcmp.gt.s32.totalorder 0, %v72
  %v74 = vsel %vm73, 0, %v72
  %v75 = vsub.s32 32, %v74
  %v76 = vshll.u32 %v67, %v74
  %v77 = vshrl.u32 %v59, %v75
  %v78 = vor.u32 %v76, %v77
  %v79 = vsub.s32 4294967266, %v74
  %v80 = vadd.s32 %v79, 127
  %v81 = vshll.u32 %v80, 23
  %v82 = vor.u32 4788187, %v81
  %v83 = vand.u32 2147483647, %v82
  %v85 = vcvt.s32.f32 %v78
  %v86 = vmul.f32 %v85, %v83
  %v87 = vxor.u32 %v86, 2147483648
  %v88 = vsel %vm5, %v87, %v86
  %v89 = vsub.s32 4, %v65
  %v90 = vsel %vm5, %v89, %v65
  %v91 = vsel %vm4, %v2, %v88
  %v92 = vsel %vm4, 0, %v90
  %v93 = vcosq.f32.pop %v91
  %v94 = vsinq.f32.pop %v91
  %vm95 = vweird.f32 %v2
  %v96 = vadd.s32 %v92, 3
  %v97 = vand.u32 %v96, 3
  %vm98 = vcmp.lt.s32.totalorder %v97, 2
  %vm99 = vcmp.eq.s32.totalorder %v97, 0
  %v100 = vxor.u32 %v94, 2147483648
  %v101 = vsel %vm99, %v93, %v100
  %vm102 = vcmp.eq.s32.totalorder %v97, 2
  %v103 = vxor.u32 %v93, 2147483648
  %v104 = vsel %vm102, %v103, %v94
  %v105 = vsel %vm98, %v101, %v104
  %v106 = vsel %vm95, nan, %v105
  %107 = vst [vmem:[%s1] sm:$0xff] %v106

// kernel: caption_encoder_forward.1
$region0: #{caption_encoder_forward.1}
  #allocation0 [shape = 'u32[]', space=smem, size = 0x4, offset = 0x4, fixed_abs, tag = 'smem constant byte address 0x4 - core index']
  #allocation1 [shape = 'u32[144,128]{1,0:T(1,128)}', space=vmem, size = 0x12000, scoped, tag = 'internal scratch']
  %s0 = inlined_call_operand.vmem [shape: f32[2,64,8], index: 0, kind: input, shape index: {}]
  %s1 = inlined_call_operand.vmem [shape: f32[64,32], index: 1, kind: input, shape index: {}]
  %s2 = inlined_call_operand.vmem [shape: f32[8,32], index: 2, kind: input, shape index: {}]
  %s3 = inlined_call_operand.vmem [shape: f32[1,32], index: 3, kind: input, shape index: {}]
  %s4 = inlined_call_operand.vmem [shape: f32[32,64], index: 4, kind: input, shape index: {}]
  %s5 = inlined_call_operand.vmem [shape: f32[1,64], index: 5, kind: input, shape index: {}]
  %s6 = inlined_call_operand.vmem [shape: f32[32,32], index: 6, kind: input, shape index: {}]
  %s7 = inlined_call_operand.vmem [shape: f32[1,32], index: 7, kind: input, shape index: {}]
  %s8 = inlined_call_operand.vmem [shape: f32[32,32], index: 8, kind: input, shape index: {}]
  %s9 = inlined_call_operand.vmem [shape: f32[1,32], index: 9, kind: input, shape index: {}]
  %s10 = inlined_call_operand.vmem [shape: f32[1,32], index: 10, kind: input, shape index: {}]
  %s11 = inlined_call_operand.vmem [shape: f32[1,32], index: 11, kind: input, shape index: {}]
  %s12 = inlined_call_operand.vmem [shape: f32[32,128], index: 12, kind: input, shape index: {}]
  %s13 = inlined_call_operand.vmem [shape: f32[1,128], index: 13, kind: input, shape index: {}]
  %s14 = inlined_call_operand.vmem [shape: f32[128,32], index: 14, kind: input, shape index: {}]
  %s15 = inlined_call_operand.vmem [shape: f32[1,32], index: 15, kind: input, shape index: {}]
  %s16 = inlined_call_operand.vmem [shape: f32[1,32], index: 16, kind: input, shape index: {}]
  %s17 = inlined_call_operand.vmem [shape: f32[1,32], index: 17, kind: input, shape index: {}]
  %s18 = inlined_call_operand.vmem [shape: f32[2,64,32], index: 18, kind: output, shape index: {}]
  %s19 = sld [smem:[#allocation0]]
  $region105: #{caption_encoder_forward.1} parent=0
    _
  %s21 = ssub.s32 1, %s19
  %s22 = scalar_select 0, %s21, %s19
  loop: start=0, step=1, limit=4
  $region2: #{caption_encoder_forward.1} parent=0 // loop_pre_header
    _
  $region3: #{caption_encoder_forward.1} parent=0 // loop_header
    %s24 = sphi 0, %s28
    %p25 = scmp.ge.s32.totalorder %s24, 4
    %s34 = sphi 0, %s36
    %s37 = sphi 0, %s34
    %s38 = sphi 0, %s37
    %s54 = sphi 0, %s38
    %s58 = sphi 0, %s58
    %s60 = sphi 0, %s58
    %s61 = sphi 0, %s60
    %s75 = sphi 0, %s61
    %s79 = sphi 0, %s79
    %s81 = sphi 0, %s79
    %s82 = sphi 0, %s81
    %s96 = sphi 0, %s82
    %s100 = sphi 0, %s100
    %s102 = sphi 0, %s100
    %s103 = sphi 0, %s102
    %s117 = sphi 0, %s103
    %s121 = sphi 0, %s121
    %s123 = sphi 0, %s121
    %s124 = sphi 0, %s123
    %s138 = sphi 0, %s124
    %s142 = sphi 0, %s142
    %s144 = sphi 0, %s142
    %s145 = sphi 0, %s144
    %s159 = sphi 0, %s145
    %s163 = sphi 0, %s163
    %s165 = sphi 0, %s163
    %s166 = sphi 0, %s165
    %s180 = sphi 0, %s166
    %s184 = sphi 0, %s184
    %s186 = sphi 0, %s184
    %s187 = sphi 0, %s186
    %s201 = sphi 0, %s187
    %s205 = sphi 0, %s205
    %s207 = sphi 0, %s205
    %s208 = sphi 0, %s207
    %s222 = sphi 0, %s208
    %s226 = sphi 0, %s226
    %s228 = sphi 0, %s226
    %s229 = sphi 0, %s228
    %s243 = sphi 0, %s229
    %s247 = sphi 0, %s247
    %s249 = sphi 0, %s247
    %s250 = sphi 0, %s249
    %s264 = sphi 0, %s250
    %s268 = sphi 0, %s268
    %s270 = sphi 0, %s268
    %s271 = sphi 0, %s270
    %s285 = sphi 0, %s271
    %s289 = sphi 0, %s289
    %s291 = sphi 0, %s289
    %s292 = sphi 0, %s291
    %s306 = sphi 0, %s292
    %s310 = sphi 0, %s310
    %s312 = sphi 0, %s310
    %s313 = sphi 0, %s312
    %s327 = sphi 0, %s313
    %s331 = sphi 0, %s331
    %s333 = sphi 0, %s331
    %s334 = sphi 0, %s333
    %s348 = sphi 0, %s334
    %s352 = sphi 0, %s352
    %s354 = sphi 0, %s352
    %s355 = sphi 0, %s354
    %s369 = sphi 0, %s355
    %s373 = sphi 0, %s373
    %s375 = sphi 0, %s373
    %s376 = sphi 0, %s375
    %s390 = sphi 0, %s376
    %s394 = sphi 0, %s394
    %s396 = sphi 0, %s394
    %s397 = sphi 0, %s396
    %s411 = sphi 0, %s397
    %s417 = sphi 0, %s419
    %s420 = sphi 0, %s417
    %s421 = sphi 0, %s420
    %s437 = sphi 0, %s421
  $region4: #{caption_encoder_forward.1} parent=0 // loop_header_branch
    %27 = sbr.rel (%p25) target = $region8
  $region5: #{caption_encoder_forward.1} parent=0 // loop_body
    %s29 = ssub.s32 %s24, 1
    %s30 = ssub.s32 %s24, 2
    %s31 = sadd.s32 %s24, 1
    %s32 = ssub.s32 %s24, %s31
    %p33 = scmp.eq.s32.totalorder %s32, 0
    %s35 = sadd.s32 %s34, 1
    %s36 = scalar_select %p33, %s34, %s35
    %p39 = pneg %p33
    %p40 = scmp.eq.s32.totalorder %s24, 1
    %p41 = por %p39, %p40
    %p42 = scmp.ne.s32.totalorder %s34, %s37
    %p43 = scmp.eq.s32.totalorder %s24, 0
    %p44 = por %p42, %p43
    %p45 = scmp.ne.s32.totalorder %s34, %s37
    %p46 = scmp.eq.s32.totalorder %s29, 1
    %p47 = por %p45, %p46
    %p48 = scmp.ne.s32.totalorder %s37, %s38
    %p49 = scmp.eq.s32.totalorder %s29, 0
    %p50 = por %p48, %p49
    %p51 = scmp.ne.s32.totalorder %s37, %s38
    %p52 = scmp.eq.s32.totalorder %s30, 1
    %p53 = por %p51, %p52
    %p55 = scmp.ne.s32.totalorder %s38, %s54
    %p56 = scmp.eq.s32.totalorder %s30, 0
    %p57 = por %p55, %p56
    %s59 = sadd.s32 %s58, 1
    %p62 = scmp.eq.s32.totalorder %s24, 1
    %p63 = scmp.ne.s32.totalorder %s58, %s60
    %p64 = scmp.eq.s32.totalorder %s24, 0
    %p65 = por %p63, %p64
    %p66 = scmp.ne.s32.totalorder %s58, %s60
    %p67 = scmp.eq.s32.totalorder %s29, 1
    %p68 = por %p66, %p67
    %p69 = scmp.ne.s32.totalorder %s60, %s61
    %p70 = scmp.eq.s32.totalorder %s29, 0
    %p71 = por %p69, %p70
    %p72 = scmp.ne.s32.totalorder %s60, %s61
    %p73 = scmp.eq.s32.totalorder %s30, 1
    %p74 = por %p72, %p73
    %p76 = scmp.ne.s32.totalorder %s61, %s75
    %p77 = scmp.eq.s32.totalorder %s30, 0
    %p78 = por %p76, %p77
    %s80 = sadd.s32 %s79, 1
    %p83 = scmp.eq.s32.totalorder %s24, 1
    %p84 = scmp.ne.s32.totalorder %s79, %s81
    %p85 = scmp.eq.s32.totalorder %s24, 0
    %p86 = por %p84, %p85
    %p87 = scmp.ne.s32.totalorder %s79, %s81
    %p88 = scmp.eq.s32.totalorder %s29, 1
    %p89 = por %p87, %p88
    %p90 = scmp.ne.s32.totalorder %s81, %s82
    %p91 = scmp.eq.s32.totalorder %s29, 0
    %p92 = por %p90, %p91
    %p93 = scmp.ne.s32.totalorder %s81, %s82
    %p94 = scmp.eq.s32.totalorder %s30, 1
    %p95 = por %p93, %p94
    %p97 = scmp.ne.s32.totalorder %s82, %s96
    %p98 = scmp.eq.s32.totalorder %s30, 0
    %p99 = por %p97, %p98
    %s101 = sadd.s32 %s100, 1
    %p104 = scmp.eq.s32.totalorder %s24, 1
    %p105 = scmp.ne.s32.totalorder %s100, %s102
    %p106 = scmp.eq.s32.totalorder %s24, 0
    %p107 = por %p105, %p106
    %p108 = scmp.ne.s32.totalorder %s100, %s102
    %p109 = scmp.eq.s32.totalorder %s29, 1
    %p110 = por %p108, %p109
    %p111 = scmp.ne.s32.totalorder %s102, %s103
    %p112 = scmp.eq.s32.totalorder %s29, 0
    %p113 = por %p111, %p112
    %p114 = scmp.ne.s32.totalorder %s102, %s103
    %p115 = scmp.eq.s32.totalorder %s30, 1
    %p116 = por %p114, %p115
    %p118 = scmp.ne.s32.totalorder %s103, %s117
    %p119 = scmp.eq.s32.totalorder %s30, 0
    %p120 = por %p118, %p119
    %s122 = sadd.s32 %s121, 1
    %p125 = scmp.eq.s32.totalorder %s24, 1
    %p126 = scmp.ne.s32.totalorder %s121, %s123
    %p127 = scmp.eq.s32.totalorder %s24, 0
    %p128 = por %p126, %p127
    %p129 = scmp.ne.s32.totalorder %s121, %s123
    %p130 = scmp.eq.s32.totalorder %s29, 1
    %p131 = por %p129, %p130
    %p132 = scmp.ne.s32.totalorder %s123, %s124
    %p133 = scmp.eq.s32.totalorder %s29, 0
    %p134 = por %p132, %p133
    %p135 = scmp.ne.s32.totalorder %s123, %s124
    %p136 = scmp.eq.s32.totalorder %s30, 1
    %p137 = por %p135, %p136
    %p139 = scmp.ne.s32.totalorder %s124, %s138
    %p140 = scmp.eq.s32.totalorder %s30, 0
    %p141 = por %p139, %p140
    %s143 = sadd.s32 %s142, 1
    %p146 = scmp.eq.s32.totalorder %s24, 1
    %p147 = scmp.ne.s32.totalorder %s142, %s144
    %p148 = scmp.eq.s32.totalorder %s24, 0
    %p149 = por %p147, %p148
    %p150 = scmp.ne.s32.totalorder %s142, %s144
    %p151 = scmp.eq.s32.totalorder %s29, 1
    %p152 = por %p150, %p151
    %p153 = scmp.ne.s32.totalorder %s144, %s145
    %p154 = scmp.eq.s32.totalorder %s29, 0
    %p155 = por %p153, %p154
    %p156 = scmp.ne.s32.totalorder %s144, %s145
    %p157 = scmp.eq.s32.totalorder %s30, 1
    %p158 = por %p156, %p157
    %p160 = scmp.ne.s32.totalorder %s145, %s159
    %p161 = scmp.eq.s32.totalorder %s30, 0
    %p162 = por %p160, %p161
    %s164 = sadd.s32 %s163, 1
    %p167 = scmp.eq.s32.totalorder %s24, 1
    %p168 = scmp.ne.s32.totalorder %s163, %s165
    %p169 = scmp.eq.s32.totalorder %s24, 0
    %p170 = por %p168, %p169
    %p171 = scmp.ne.s32.totalorder %s163, %s165
    %p172 = scmp.eq.s32.totalorder %s29, 1
    %p173 = por %p171, %p172
    %p174 = scmp.ne.s32.totalorder %s165, %s166
    %p175 = scmp.eq.s32.totalorder %s29, 0
    %p176 = por %p174, %p175
    %p177 = scmp.ne.s32.totalorder %s165, %s166
    %p178 = scmp.eq.s32.totalorder %s30, 1
    %p179 = por %p177, %p178
    %p181 = scmp.ne.s32.totalorder %s166, %s180
    %p182 = scmp.eq.s32.totalorder %s30, 0
    %p183 = por %p181, %p182
    %s185 = sadd.s32 %s184, 1
    %p188 = scmp.eq.s32.totalorder %s24, 1
    %p189 = scmp.ne.s32.totalorder %s184, %s186
    %p190 = scmp.eq.s32.totalorder %s24, 0
    %p191 = por %p189, %p190
    %p192 = scmp.ne.s32.totalorder %s184, %s186
    %p193 = scmp.eq.s32.totalorder %s29, 1
    %p194 = por %p192, %p193
    %p195 = scmp.ne.s32.totalorder %s186, %s187
    %p196 = scmp.eq.s32.totalorder %s29, 0
    %p197 = por %p195, %p196
    %p198 = scmp.ne.s32.totalorder %s186, %s187
    %p199 = scmp.eq.s32.totalorder %s30, 1
    %p200 = por %p198, %p199
    %p202 = scmp.ne.s32.totalorder %s187, %s201
    %p203 = scmp.eq.s32.totalorder %s30, 0
    %p204 = por %p202, %p203
    %s206 = sadd.s32 %s205, 1
    %p209 = scmp.eq.s32.totalorder %s24, 1
    %p210 = scmp.ne.s32.totalorder %s205, %s207
    %p211 = scmp.eq.s32.totalorder %s24, 0
    %p212 = por %p210, %p211
    %p213 = scmp.ne.s32.totalorder %s205, %s207
    %p214 = scmp.eq.s32.totalorder %s29, 1
    %p215 = por %p213, %p214
    %p216 = scmp.ne.s32.totalorder %s207, %s208
    %p217 = scmp.eq.s32.totalorder %s29, 0
    %p218 = por %p216, %p217
    %p219 = scmp.ne.s32.totalorder %s207, %s208
    %p220 = scmp.eq.s32.totalorder %s30, 1
    %p221 = por %p219, %p220
    %p223 = scmp.ne.s32.totalorder %s208, %s222
    %p224 = scmp.eq.s32.totalorder %s30, 0
    %p225 = por %p223, %p224
    %s227 = sadd.s32 %s226, 1
    %p230 = scmp.eq.s32.totalorder %s24, 1
    %p231 = scmp.ne.s32.totalorder %s226, %s228
    %p232 = scmp.eq.s32.totalorder %s24, 0
    %p233 = por %p231, %p232
    %p234 = scmp.ne.s32.totalorder %s226, %s228
    %p235 = scmp.eq.s32.totalorder %s29, 1
    %p236 = por %p234, %p235
    %p237 = scmp.ne.s32.totalorder %s228, %s229
    %p238 = scmp.eq.s32.totalorder %s29, 0
    %p239 = por %p237, %p238
    %p240 = scmp.ne.s32.totalorder %s228, %s229
    %p241 = scmp.eq.s32.totalorder %s30, 1
    %p242 = por %p240, %p241
    %p244 = scmp.ne.s32.totalorder %s229, %s243
    %p245 = scmp.eq.s32.totalorder %s30, 0
    %p246 = por %p244, %p245
    %s248 = sadd.s32 %s247, 1
    %p251 = scmp.eq.s32.totalorder %s24, 1
    %p252 = scmp.ne.s32.totalorder %s247, %s249
    %p253 = scmp.eq.s32.totalorder %s24, 0
    %p254 = por %p252, %p253
    %p255 = scmp.ne.s32.totalorder %s247, %s249
    %p256 = scmp.eq.s32.totalorder %s29, 1
    %p257 = por %p255, %p256
    %p258 = scmp.ne.s32.totalorder %s249, %s250
    %p259 = scmp.eq.s32.totalorder %s29, 0
    %p260 = por %p258, %p259
    %p261 = scmp.ne.s32.totalorder %s249, %s250
    %p262 = scmp.eq.s32.totalorder %s30, 1
    %p263 = por %p261, %p262
    %p265 = scmp.ne.s32.totalorder %s250, %s264
    %p266 = scmp.eq.s32.totalorder %s30, 0
    %p267 = por %p265, %p266
    %s269 = sadd.s32 %s268, 1
    %p272 = scmp.eq.s32.totalorder %s24, 1
    %p273 = scmp.ne.s32.totalorder %s268, %s270
    %p274 = scmp.eq.s32.totalorder %s24, 0
    %p275 = por %p273, %p274
    %p276 = scmp.ne.s32.totalorder %s268, %s270
    %p277 = scmp.eq.s32.totalorder %s29, 1
    %p278 = por %p276, %p277
    %p279 = scmp.ne.s32.totalorder %s270, %s271
    %p280 = scmp.eq.s32.totalorder %s29, 0
    %p281 = por %p279, %p280
    %p282 = scmp.ne.s32.totalorder %s270, %s271
    %p283 = scmp.eq.s32.totalorder %s30, 1
    %p284 = por %p282, %p283
    %p286 = scmp.ne.s32.totalorder %s271, %s285
    %p287 = scmp.eq.s32.totalorder %s30, 0
    %p288 = por %p286, %p287
    %s290 = sadd.s32 %s289, 1
    %p293 = scmp.eq.s32.totalorder %s24, 1
    %p294 = scmp.ne.s32.totalorder %s289, %s291
    %p295 = scmp.eq.s32.totalorder %s24, 0
    %p296 = por %p294, %p295
    %p297 = scmp.ne.s32.totalorder %s289, %s291
    %p298 = scmp.eq.s32.totalorder %s29, 1
    %p299 = por %p297, %p298
    %p300 = scmp.ne.s32.totalorder %s291, %s292
    %p301 = scmp.eq.s32.totalorder %s29, 0
    %p302 = por %p300, %p301
    %p303 = scmp.ne.s32.totalorder %s291, %s292
    %p304 = scmp.eq.s32.totalorder %s30, 1
    %p305 = por %p303, %p304
    %p307 = scmp.ne.s32.totalorder %s292, %s306
    %p308 = scmp.eq.s32.totalorder %s30, 0
    %p309 = por %p307, %p308
    %s311 = sadd.s32 %s310, 1
    %p314 = scmp.eq.s32.totalorder %s24, 1
    %p315 = scmp.ne.s32.totalorder %s310, %s312
    %p316 = scmp.eq.s32.totalorder %s24, 0
    %p317 = por %p315, %p316
    %p318 = scmp.ne.s32.totalorder %s310, %s312
    %p319 = scmp.eq.s32.totalorder %s29, 1
    %p320 = por %p318, %p319
    %p321 = scmp.ne.s32.totalorder %s312, %s313
    %p322 = scmp.eq.s32.totalorder %s29, 0
    %p323 = por %p321, %p322
    %p324 = scmp.ne.s32.totalorder %s312, %s313
    %p325 = scmp.eq.s32.totalorder %s30, 1
    %p326 = por %p324, %p325
    %p328 = scmp.ne.s32.totalorder %s313, %s327
    %p329 = scmp.eq.s32.totalorder %s30, 0
    %p330 = por %p328, %p329
    %s332 = sadd.s32 %s331, 1
    %p335 = scmp.eq.s32.totalorder %s24, 1
    %p336 = scmp.ne.s32.totalorder %s331, %s333
    %p337 = scmp.eq.s32.totalorder %s24, 0
    %p338 = por %p336, %p337
    %p339 = scmp.ne.s32.totalorder %s331, %s333
    %p340 = scmp.eq.s32.totalorder %s29, 1
    %p341 = por %p339, %p340
    %p342 = scmp.ne.s32.totalorder %s333, %s334
    %p343 = scmp.eq.s32.totalorder %s29, 0
    %p344 = por %p342, %p343
    %p345 = scmp.ne.s32.totalorder %s333, %s334
    %p346 = scmp.eq.s32.totalorder %s30, 1
    %p347 = por %p345, %p346
    %p349 = scmp.ne.s32.totalorder %s334, %s348
    %p350 = scmp.eq.s32.totalorder %s30, 0
    %p351 = por %p349, %p350
    %s353 = sadd.s32 %s352, 1
    %p356 = scmp.eq.s32.totalorder %s24, 1
    %p357 = scmp.ne.s32.totalorder %s352, %s354
    %p358 = scmp.eq.s32.totalorder %s24, 0
    %p359 = por %p357, %p358
    %p360 = scmp.ne.s32.totalorder %s352, %s354
    %p361 = scmp.eq.s32.totalorder %s29, 1
    %p362 = por %p360, %p361
    %p363 = scmp.ne.s32.totalorder %s354, %s355
    %p364 = scmp.eq.s32.totalorder %s29, 0
    %p365 = por %p363, %p364
    %p366 = scmp.ne.s32.totalorder %s354, %s355
    %p367 = scmp.eq.s32.totalorder %s30, 1
    %p368 = por %p366, %p367
    %p370 = scmp.ne.s32.totalorder %s355, %s369
    %p371 = scmp.eq.s32.totalorder %s30, 0
    %p372 = por %p370, %p371
    %s374 = sadd.s32 %s373, 1
    %p377 = scmp.eq.s32.totalorder %s24, 1
    %p378 = scmp.ne.s32.totalorder %s373, %s375
    %p379 = scmp.eq.s32.totalorder %s24, 0
    %p380 = por %p378, %p379
    %p381 = scmp.ne.s32.totalorder %s373, %s375
    %p382 = scmp.eq.s32.totalorder %s29, 1
    %p383 = por %p381, %p382
    %p384 = scmp.ne.s32.totalorder %s375, %s376
    %p385 = scmp.eq.s32.totalorder %s29, 0
    %p386 = por %p384, %p385
    %p387 = scmp.ne.s32.totalorder %s375, %s376
    %p388 = scmp.eq.s32.totalorder %s30, 1
    %p389 = por %p387, %p388
    %p391 = scmp.ne.s32.totalorder %s376, %s390
    %p392 = scmp.eq.s32.totalorder %s30, 0
    %p393 = por %p391, %p392
    %s395 = sadd.s32 %s394, 1
    %p398 = scmp.eq.s32.totalorder %s24, 1
    %p399 = scmp.ne.s32.totalorder %s394, %s396
    %p400 = scmp.eq.s32.totalorder %s24, 0
    %p401 = por %p399, %p400
    %p402 = scmp.ne.s32.totalorder %s394, %s396
    %p403 = scmp.eq.s32.totalorder %s29, 1
    %p404 = por %p402, %p403
    %p405 = scmp.ne.s32.totalorder %s396, %s397
    %p406 = scmp.eq.s32.totalorder %s29, 0
    %p407 = por %p405, %p406
    %p408 = scmp.ne.s32.totalorder %s396, %s397
    %p409 = scmp.eq.s32.totalorder %s30, 1
    %p410 = por %p408, %p409
    %p412 = scmp.ne.s32.totalorder %s397, %s411
    %p413 = scmp.eq.s32.totalorder %s30, 0
    %p414 = por %p412, %p413
    %s415 = ssub.s32 %s24, %s31
    %p416 = scmp.eq.s32.totalorder %s415, 0
    %s418 = sadd.s32 %s417, 1
    %s419 = scalar_select %p416, %s417, %s418
    %p422 = pneg %p416
    %p423 = scmp.eq.s32.totalorder %s24, 1
    %p424 = por %p422, %p423
    %p425 = scmp.ne.s32.totalorder %s417, %s420
    %p426 = scmp.eq.s32.totalorder %s24, 0
    %p427 = por %p425, %p426
    %p428 = scmp.ne.s32.totalorder %s417, %s420
    %p429 = scmp.eq.s32.totalorder %s29, 1
    %p430 = por %p428, %p429
    %p431 = scmp.ne.s32.totalorder %s420, %s421
    %p432 = scmp.eq.s32.totalorder %s29, 0
    %p433 = por %p431, %p432
    %p434 = scmp.ne.s32.totalorder %s420, %s421
    %p435 = scmp.eq.s32.totalorder %s30, 1
    %p436 = por %p434, %p435
    %p438 = scmp.ne.s32.totalorder %s421, %s437
    %p439 = scmp.eq.s32.totalorder %s30, 0
    %p440 = por %p438, %p439
    %p441 = scmp.le.s32.totalorder 1, %s24
    %p442 = scmp.lt.s32.totalorder %s24, 3
    %p443 = pnand %p441, %p442
    %p444 = pneg %p443
    // Predicated region
    $region9: #{caption_encoder_forward.1} parent=5 // pred_check
      _
    $region10: #{caption_encoder_forward.1} parent=5 // pred_check_branch
      %446 = sbr.rel (%p443) target = $region12
    $region11: #{caption_encoder_forward.1} parent=5 // pred_region
      %s447 = ssub.s32 %s24, 1
      // Predicated region
      $region13: #{caption_encoder_forward.1} parent=11 // pred_check
        %p448 = pneg %p71
      $region14: #{caption_encoder_forward.1} parent=11 // pred_check_branch
        %450 = sbr.rel (%p448) target = $region16
      $region15: #{caption_encoder_forward.1} parent=11 // pred_region
        _
      $region16: #{caption_encoder_forward.1} parent=11 // pred_fallthru
        _
      // Predicated region
      $region17: #{caption_encoder_forward.1} parent=11 // pred_check
        %p451 = pneg %p92
      $region18: #{caption_encoder_forward.1} parent=11 // pred_check_branch
        %453 = sbr.rel (%p451) target = $region20
      $region19: #{caption_encoder_forward.1} parent=11 // pred_region
        _
      $region20: #{caption_encoder_forward.1} parent=11 // pred_fallthru
        _
      // Predicated region
      $region21: #{caption_encoder_forward.1} parent=11 // pred_check
        %p454 = pneg %p113
      $region22: #{caption_encoder_forward.1} parent=11 // pred_check_branch
        %456 = sbr.rel (%p454) target = $region24
      $region23: #{caption_encoder_forward.1} parent=11 // pred_region
        _
      $region24: #{caption_encoder_forward.1} parent=11 // pred_fallthru
        _
      // Predicated region
      $region25: #{caption_encoder_forward.1} parent=11 // pred_check
        %p457 = pneg %p134
      $region26: #{caption_encoder_forward.1} parent=11 // pred_check_branch
        %459 = sbr.rel (%p457) target = $region28
      $region27: #{caption_encoder_forward.1} parent=11 // pred_region
        _
      $region28: #{caption_encoder_forward.1} parent=11 // pred_fallthru
        _
      // Predicated region
      $region29: #{caption_encoder_forward.1} parent=11 // pred_check
        %p460 = pneg %p155
      $region30: #{caption_encoder_forward.1} parent=11 // pred_check_branch
        %462 = sbr.rel (%p460) target = $region32
      $region31: #{caption_encoder_forward.1} parent=11 // pred_region
        _
      $region32: #{caption_encoder_forward.1} parent=11 // pred_fallthru
        _
      // Predicated region
      $region33: #{caption_encoder_forward.1} parent=11 // pred_check
        %p463 = pneg %p176
      $region34: #{caption_encoder_forward.1} parent=11 // pred_check_branch
        %465 = sbr.rel (%p463) target = $region36
      $region35: #{caption_encoder_forward.1} parent=11 // pred_region
        _
      $region36: #{caption_encoder_forward.1} parent=11 // pred_fallthru
        _
      // Predicated region
      $region37: #{caption_encoder_forward.1} parent=11 // pred_check
        %p466 = pneg %p197
      $region38: #{caption_encoder_forward.1} parent=11 // pred_check_branch
        %468 = sbr.rel (%p466) target = $region40
      $region39: #{caption_encoder_forward.1} parent=11 // pred_region
        _
      $region40: #{caption_encoder_forward.1} parent=11 // pred_fallthru
        _
      // Predicated region
      $region41: #{caption_encoder_forward.1} parent=11 // pred_check
        %p469 = pneg %p218
      $region42: #{caption_encoder_forward.1} parent=11 // pred_check_branch
        %471 = sbr.rel (%p469) target = $region44
      $region43: #{caption_encoder_forward.1} parent=11 // pred_region
        _
      $region44: #{caption_encoder_forward.1} parent=11 // pred_fallthru
        _
      // Predicated region
      $region45: #{caption_encoder_forward.1} parent=11 // pred_check
        %p472 = pneg %p239
      $region46: #{caption_encoder_forward.1} parent=11 // pred_check_branch
        %474 = sbr.rel (%p472) target = $region48
      $region47: #{caption_encoder_forward.1} parent=11 // pred_region
        _
      $region48: #{caption_encoder_forward.1} parent=11 // pred_fallthru
        _
      // Predicated region
      $region49: #{caption_encoder_forward.1} parent=11 // pred_check
        %p475 = pneg %p260
      $region50: #{caption_encoder_forward.1} parent=11 // pred_check_branch
        %477 = sbr.rel (%p475) target = $region52
      $region51: #{caption_encoder_forward.1} parent=11 // pred_region
        _
      $region52: #{caption_encoder_forward.1} parent=11 // pred_fallthru
        _
      // Predicated region
      $region53: #{caption_encoder_forward.1} parent=11 // pred_check
        %p478 = pneg %p281
      $region54: #{caption_encoder_forward.1} parent=11 // pred_check_branch
        %480 = sbr.rel (%p478) target = $region56
      $region55: #{caption_encoder_forward.1} parent=11 // pred_region
        _
      $region56: #{caption_encoder_forward.1} parent=11 // pred_fallthru
        _
      // Predicated region
      $region57: #{caption_encoder_forward.1} parent=11 // pred_check
        %p481 = pneg %p302
      $region58: #{caption_encoder_forward.1} parent=11 // pred_check_branch
        %483 = sbr.rel (%p481) target = $region60
      $region59: #{caption_encoder_forward.1} parent=11 // pred_region
        _
      $region60: #{caption_encoder_forward.1} parent=11 // pred_fallthru
        _
      // Predicated region
      $region61: #{caption_encoder_forward.1} parent=11 // pred_check
        %p484 = pneg %p323
      $region62: #{caption_encoder_forward.1} parent=11 // pred_check_branch
        %486 = sbr.rel (%p484) target = $region64
      $region63: #{caption_encoder_forward.1} parent=11 // pred_region
        _
      $region64: #{caption_encoder_forward.1} parent=11 // pred_fallthru
        _
      // Predicated region
      $region65: #{caption_encoder_forward.1} parent=11 // pred_check
        %p487 = pneg %p344
      $region66: #{caption_encoder_forward.1} parent=11 // pred_check_branch
        %489 = sbr.rel (%p487) target = $region68
      $region67: #{caption_encoder_forward.1} parent=11 // pred_region
        _
      $region68: #{caption_encoder_forward.1} parent=11 // pred_fallthru
        _
      // Predicated region
      $region69: #{caption_encoder_forward.1} parent=11 // pred_check
        %p490 = pneg %p365
      $region70: #{caption_encoder_forward.1} parent=11 // pred_check_branch
        %492 = sbr.rel (%p490) target = $region72
      $region71: #{caption_encoder_forward.1} parent=11 // pred_region
        _
      $region72: #{caption_encoder_forward.1} parent=11 // pred_fallthru
        _
      // Predicated region
      $region73: #{caption_encoder_forward.1} parent=11 // pred_check
        %p493 = pneg %p386
      $region74: #{caption_encoder_forward.1} parent=11 // pred_check_branch
        %495 = sbr.rel (%p493) target = $region76
      $region75: #{caption_encoder_forward.1} parent=11 // pred_region
        _
      $region76: #{caption_encoder_forward.1} parent=11 // pred_fallthru
        _
      // Predicated region
      $region77: #{caption_encoder_forward.1} parent=11 // pred_check
        %p496 = pneg %p407
      $region78: #{caption_encoder_forward.1} parent=11 // pred_check_branch
        %498 = sbr.rel (%p496) target = $region80
      $region79: #{caption_encoder_forward.1} parent=11 // pred_region
        _
      $region80: #{caption_encoder_forward.1} parent=11 // pred_fallthru
        _
    $region12: #{caption_encoder_forward.1} parent=5 // pred_fallthru
      _
    %p499 = scmp.lt.s32.totalorder %s24, 2
    // Predicated region
    $region81: #{caption_encoder_forward.1} parent=5 // pred_check
      %p500 = pneg %p499
    $region82: #{caption_encoder_forward.1} parent=5 // pred_check_branch
      %502 = sbr.rel (%p500) target = $region84
    $region83: #{caption_encoder_forward.1} parent=5 // pred_region
      // Predicated region
      $region85: #{caption_encoder_forward.1} parent=83 // pred_check
        %p503 = pneg %p44
      $region86: #{caption_encoder_forward.1} parent=83 // pred_check_branch
        %505 = sbr.rel (%p503) target = $region88
      $region87: #{caption_encoder_forward.1} parent=83 // pred_region
        %p506 = scmp.lt.s32.totalorder %s24, 1
        %s507 = scalar_select %p506, %s24, 1
        %s508 = smul.addr %s507, 8
        %s509 = smul.addr %s508, 8
        %s510 = scalar_lea.vmem %s0, %s509
      $region88: #{caption_encoder_forward.1} parent=83 // pred_fallthru
        _
    $region84: #{caption_encoder_forward.1} parent=5 // pred_fallthru
      _
    %p511 = scmp.le.s32.totalorder 1, %s24
    %p512 = scmp.lt.s32.totalorder %s24, 3
    %p513 = pnand %p511, %p512
    %p514 = pneg %p513
    // Predicated region
    $region89: #{caption_encoder_forward.1} parent=5 // pred_check
      _
    $region90: #{caption_encoder_forward.1} parent=5 // pred_check_branch
      %516 = sbr.rel (%p513) target = $region92
    $region91: #{caption_encoder_forward.1} parent=5 // pred_region
      %s517 = ssub.s32 %s24, 1
      %p518 = scmp.lt.s32.totalorder %s29, 1
      %s519 = scalar_select %p518, %s29, 1
      %s520 = smul.addr %s519, 8
      %s521 = smul.addr %s520, 8
      %s522 = scalar_lea.vmem %s0, %s521
      %p523 = pneg %p50
      %p524 = pneg %p47
      %p525 = pneg %p71
      %p526 = pneg %p68
      %p527 = pneg %p92
      %p528 = pneg %p89
      %p529 = pneg %p113
      %p530 = pneg %p110
      %p531 = pneg %p134
      %p532 = pneg %p131
      %p533 = pneg %p155
      %p534 = pneg %p152
      %p535 = pneg %p176
      %p536 = pneg %p173
      %p537 = pneg %p197
      %p538 = pneg %p194
      %p539 = pneg %p218
      %p540 = pneg %p215
      %p541 = pneg %p239
      %p542 = pneg %p236
      %p543 = pneg %p260
      %p544 = pneg %p257
      %p545 = pneg %p281
      %p546 = pneg %p278
      %p547 = pneg %p302
      %p548 = pneg %p299
      %p549 = pneg %p323
      %p550 = pneg %p320
      %p551 = pneg %p344
      %p552 = pneg %p341
      %p553 = pneg %p365
      %p554 = pneg %p362
      %p555 = pneg %p386
      %p556 = pneg %p383
      %p557 = pneg %p407
      %p558 = pneg %p404
      %p559 = pneg %p433
      %p560 = pneg %p430
      %p561 = scmp.lt.s32.totalorder %s29, 1
      %s562 = scalar_select %p561, %s29, 1
      %s563 = smul.addr %s562, 8
      %s564 = smul.addr %s563, 8
      %s565 = scalar_lea.vmem %s18, %s564
      %p566 = scmp.lt.s32.totalorder %s29, 1
      %s567 = scalar_select %p566, %s29, 1
      %s568 = smul.addr %s567, 8
      %s569 = smul.addr %s568, 8
      %s570 = scalar_lea.vmem %s0, %s569
      %p571 = scmp.lt.s32.totalorder %s29, 1
      %s572 = scalar_select %p571, %s29, 1
      %s573 = smul.addr %s572, 8
      %s574 = smul.addr %s573, 8
      %s575 = scalar_lea.vmem %s18, %s574
      %v577 = vld [vmem:[%s570] sm:$0xff]
      %v578 = vld [vmem:[%s570 + $0x8] sm:$0xff]
      %v579 = vld [vmem:[%s570 + $0x10] sm:$0xff]
      %v580 = vld [vmem:[%s570 + $0x18] sm:$0xff]
      %v581 = vld [vmem:[%s570 + $0x20] sm:$0xff]
      %v582 = vld [vmem:[%s570 + $0x28] sm:$0xff]
      %v583 = vld [vmem:[%s570 + $0x30] sm:$0xff]
      %v584 = vld [vmem:[%s570 + $0x38] sm:$0xff]
      %v585 = vld [vmem:[%s1] sm:$0xff]
      %v586 = vld [vmem:[%s1 + $0x8] sm:$0xff]
      %v587 = vld [vmem:[%s1 + $0x10] sm:$0xff]
      %v588 = vld [vmem:[%s1 + $0x18] sm:$0xff]
      %v589 = vld [vmem:[%s1 + $0x20] sm:$0xff]
      %v590 = vld [vmem:[%s1 + $0x28] sm:$0xff]
      %v591 = vld [vmem:[%s1 + $0x30] sm:$0xff]
      %v592 = vld [vmem:[%s1 + $0x38] sm:$0xff]
      %v593 = vld [vmem:[%s2] sm:$0xff]
      %v594 = vpack.c.bf16 %v578, %v577
      %v595 = vpack.c.bf16 %v580, %v579
      %v596 = vpack.c.bf16 %v582, %v581
      %v597 = vpack.c.bf16 %v584, %v583
      %v598 = vpack.c.bf16 %v593, %v593
      %v599 = vld [vmem:[%s3] sm:$0x1]
      %v601 = vlaneseq
      %v602 = vshrl.u32 %v601, 7
      %v603 = vsub.s32 0, %v602
      %v604 = vrot.slane %v599, %v603
      %vm606 = vcmask 64512
      %v608 = vsel %vm606, %v594, 0
      %v611 = vsel %vm606, %v595, 0
      %v614 = vsel %vm606, %v596, 0
      %v617 = vsel %vm606, %v597, 0
      %vm619 = vcmask 1043456
      %v621 = vsel %vm619, %v598, 0
      %623 = vmatprep.subr.bf16.mxu0 0
      %624 = vmatpush1.bf16.msra.mxu0 %v621
      %625 = vmatprep.subr.bf16.mxu0 0
      %626 = vmatpush1.bf16.msra.mxu0 0
      %627 = vmatprep.subr.bf16.mxu0 0
      %628 = vmatpush1.bf16.msra.mxu0 0
      %629 = vmatprep.subr.bf16.mxu0 0
      %630 = vmatpush1.bf16.msra.mxu0 0
      %631 = vmatprep.subr.bf16.mxu0 0
      %632 = vmatpush1.bf16.msra.mxu0 0
      %633 = vmatprep.subr.bf16.mxu0 0
      %634 = vmatpush1.bf16.msra.mxu0 0
      %635 = vmatprep.subr.bf16.mxu0 0
      %636 = vmatpush1.bf16.msra.mxu0 0
      %637 = vmatprep.subr.bf16.mxu0 0
      %638 = vmatpush1.bf16.msra.mxu0 0
      %639 = vmatprep.subr.bf16.mxu0 0
      %640 = vmatpush1.bf16.msra.mxu0 0
      %641 = vmatprep.subr.bf16.mxu0 0
      %642 = vmatpush1.bf16.msra.mxu0 0
      %643 = vmatprep.subr.bf16.mxu0 0
      %644 = vmatpush1.bf16.msra.mxu0 0
      %645 = vmatprep.subr.bf16.mxu0 0
      %646 = vmatpush1.bf16.msra.mxu0 0
      %647 = vmatprep.subr.bf16.mxu0 0
      %648 = vmatpush1.bf16.msra.mxu0 0
      %649 = vmatprep.subr.bf16.mxu0 0
      %650 = vmatpush1.bf16.msra.mxu0 0
      %651 = vmatprep.subr.bf16.mxu0 0
      %652 = vmatpush1.bf16.msra.mxu0 0
      %653 = vmatprep.subr.bf16.mxu0 0
      %654 = vmatpush1.bf16.msra.mxu0 0
      %655 = vmatprep.mubr.bf16.mxu0 0
      %656 = vmatmul.mubr.bf16.gmra.mrb[0].mxu0 %v608
      %v657 = vpop.f32.mrb[0].mxu0
      %v658 = vadd.f32 %v604, %v657
      %v659 = vpop.f32.mrb[0].mxu0
      %v660 = vpop.f32.mrb[0].mxu0
      %v661 = vadd.f32 %v604, %v660
      %v662 = vpop.f32.mrb[0].mxu0
      %663 = vmatprep.mubr.bf16.mxu0 0
      %664 = vmatmul.mubr.bf16.gmra.mrb[0].mxu0 %v611
      %v665 = vpop.f32.mrb[0].mxu0
      %v666 = vadd.f32 %v604, %v665
      %v667 = vpop.f32.mrb[0].mxu0
      %v668 = vpop.f32.mrb[0].mxu0
      %v669 = vadd.f32 %v604, %v668
      %v670 = vpop.f32.mrb[0].mxu0
      %671 = vmatprep.mubr.bf16.mxu0 0
      %672 = vmatmul.mubr.bf16.gmra.mrb[0].mxu0 %v614
      %v673 = vpop.f32.mrb[0].mxu0
      %v674 = vadd.f32 %v604, %v673
      %v675 = vpop.f32.mrb[0].mxu0
      %v676 = vpop.f32.mrb[0].mxu0
      %v677 = vadd.f32 %v604, %v676
      %v678 = vpop.f32.mrb[0].mxu0
      %679 = vmatprep.mubr.bf16.mxu0 0
      %680 = vmatmul.mubr.bf16.gmra.mrb[0].mxu0 %v617
      %v681 = vpop.f32.mrb[0].mxu0
      %v682 = vadd.f32 %v604, %v681
      %v683 = vpop.f32.mrb[0].mxu0
      %v684 = vpop.f32.mrb[0].mxu0
      %v685 = vadd.f32 %v604, %v684
      %v686 = vpop.f32.mrb[0].mxu0
      %687 = vdwg.mxu0
      %v688 = vadd.f32 %v658, %v585
      %v689 = vadd.f32 %v661, %v586
      %v690 = vadd.f32 %v666, %v587
      %v691 = vadd.f32 %v669, %v588
      %v692 = vadd.f32 %v674, %v589
      %v693 = vadd.f32 %v677, %v590
      %v694 = vadd.f32 %v682, %v591
      %v695 = vadd.f32 %v685, %v592
      %v696 = vld [vmem:[%s4] sm:$0xff]
      %v697 = vld [vmem:[%s4 + $0x8] sm:$0xff]
      %v698 = vld [vmem:[%s4 + $0x10] sm:$0xff]
      %v699 = vld [vmem:[%s4 + $0x18] sm:$0xff]
      %v700 = vpack.c.bf16 %v689, %v688
      %v701 = vpack.c.bf16 %v691, %v690
      %v702 = vpack.c.bf16 %v693, %v692
      %v703 = vpack.c.bf16 %v695, %v694
      %v704 = vpack.c.bf16 %v697, %v696
      %v705 = vpack.c.bf16 %v699, %v698
      %v706 = vld [vmem:[%s5] sm:$0x1]
      %v708 = vlaneseq
      %v709 = vshrl.u32 %v708, 7
      %v710 = vsub.s32 0, %v709
      %v711 = vrot.slane %v706, %v710
      %vm713 = vcmask 261120
      %v715 = vsel %vm713, %v700, 0
      %v718 = vsel %vm713, %v701, 0
      %v721 = vsel %vm713, %v702, 0
      %v724 = vsel %vm713, %v703, 0
      %726 = vmatprep.subr.bf16.mxu0 0
      %727 = vmatpush1.bf16.msra.mxu0 %v704
      %728 = vmatprep.subr.bf16.mxu0 0
      %729 = vmatpush1.bf16.msra.mxu0 %v705
      %730 = vmatprep.subr.bf16.mxu0 0
      %731 = vmatpush1.bf16.msra.mxu0 0
      %732 = vmatprep.subr.bf16.mxu0 0
      %733 = vmatpush1.bf16.msra.mxu0 0
      %734 = vmatprep.subr.bf16.mxu0 0
      %735 = vmatpush1.bf16.msra.mxu0 0
      %736 = vmatprep.subr.bf16.mxu0 0
      %737 = vmatpush1.bf16.msra.mxu0 0
      %738 = vmatprep.subr.bf16.mxu0 0
      %739 = vmatpush1.bf16.msra.mxu0 0
      %740 = vmatprep.subr.bf16.mxu0 0
      %741 = vmatpush1.bf16.msra.mxu0 0
      %742 = vmatprep.subr.bf16.mxu0 0
      %743 = vmatpush1.bf16.msra.mxu0 0
      %744 = vmatprep.subr.bf16.mxu0 0
      %745 = vmatpush1.bf16.msra.mxu0 0
      %746 = vmatprep.subr.bf16.mxu0 0
      %747 = vmatpush1.bf16.msra.mxu0 0
      %748 = vmatprep.subr.bf16.mxu0 0
      %749 = vmatpush1.bf16.msra.mxu0 0
      %750 = vmatprep.subr.bf16.mxu0 0
      %751 = vmatpush1.bf16.msra.mxu0 0
      %752 = vmatprep.subr.bf16.mxu0 0
      %753 = vmatpush1.bf16.msra.mxu0 0
      %754 = vmatprep.subr.bf16.mxu0 0
      %755 = vmatpush1.bf16.msra.mxu0 0
      %756 = vmatprep.subr.bf16.mxu0 0
      %757 = vmatpush1.bf16.msra.mxu0 0
      %758 = vmatprep.mubr.bf16.mxu0 0
      %759 = vmatmul.mubr.bf16.gmra.mrb[0].mxu0 %v715
      %v760 = vpop.f32.mrb[0].mxu0
      %v761 = vadd.f32 %v711, %v760
      %v762 = vpop.f32.mrb[0].mxu0
      %v763 = vpop.f32.mrb[0].mxu0
      %v764 = vadd.f32 %v711, %v763
      %v765 = vpop.f32.mrb[0].mxu0
      %766 = vmatprep.mubr.bf16.mxu0 0
      %767 = vmatmul.mubr.bf16.gmra.mrb[0].mxu0 %v718
      %v768 = vpop.f32.mrb[0].mxu0
      %v769 = vadd.f32 %v711, %v768
      %v770 = vpop.f32.mrb[0].mxu0
      %v771 = vpop.f32.mrb[0].mxu0
      %v772 = vadd.f32 %v711, %v771
      %v773 = vpop.f32.mrb[0].mxu0
      %774 = vmatprep.mubr.bf16.mxu0 0
      %775 = vmatmul.mubr.bf16.gmra.mrb[0].mxu0 %v721
      %v776 = vpop.f32.mrb[0].mxu0
      %v777 = vadd.f32 %v711, %v776
      %v778 = vpop.f32.mrb[0].mxu0
      %v779 = vpop.f32.mrb[0].mxu0
      %v780 = vadd.f32 %v711, %v779
      %v781 = vpop.f32.mrb[0].mxu0
      %782 = vmatprep.mubr.bf16.mxu0 0
      %783 = vmatmul.mubr.bf16.gmra.mrb[0].mxu0 %v724
      %v784 = vpop.f32.mrb[0].mxu0
      %v785 = vadd.f32 %v711, %v784
      %v786 = vpop.f32.mrb[0].mxu0
      %v787 = vpop.f32.mrb[0].mxu0
      %v788 = vadd.f32 %v711, %v787
      %v789 = vpop.f32.mrb[0].mxu0
      %790 = vdwg.mxu0
      %v791 = vld [vmem:[%s6] sm:$0xff]
      %v792 = vld [vmem:[%s6 + $0x8] sm:$0xff]
      %v793 = vld [vmem:[%s6 + $0x10] sm:$0xff]
      %v794 = vld [vmem:[%s6 + $0x18] sm:$0xff]
      %v795 = vpack.c.bf16 %v661, %v658
      %v796 = vpack.c.bf16 %v669, %v666
      %v797 = vpack.c.bf16 %v677, %v674
      %v798 = vpack.c.bf16 %v685, %v682
      %v799 = vpack.c.bf16 %v792, %v791
      %v800 = vpack.c.bf16 %v794, %v793
      %v801 = vld [vmem:[%s7] sm:$0x1]
      %v803 = vlaneseq
      %v804 = vshrl.u32 %v803, 7
      %v805 = vsub.s32 0, %v804
      %v806 = vrot.slane %v801, %v805
      %v809 = vsel %vm713, %v795, 0
      %v812 = vsel %vm713, %v796, 0
      %v815 = vsel %vm713, %v797, 0
      %v818 = vsel %vm713, %v798, 0
      %820 = vmatprep.subr.bf16.mxu0 0
      %821 = vmatpush1.bf16.msra.mxu0 %v799
      %822 = vmatprep.subr.bf16.mxu0 0
      %823 = vmatpush1.bf16.msra.mxu0 %v800
      %824 = vmatprep.subr.bf16.mxu0 0
      %825 = vmatpush1.bf16.msra.mxu0 0
      %826 = vmatprep.subr.bf16.mxu0 0
      %827 = vmatpush1.bf16.msra.mxu0 0
      %828 = vmatprep.subr.bf16.mxu0 0
      %829 = vmatpush1.bf16.msra.mxu0 0
      %830 = vmatprep.subr.bf16.mxu0 0
      %831 = vmatpush1.bf16.msra.mxu0 0
      %832 = vmatprep.subr.bf16.mxu0 0
      %833 = vmatpush1.bf16.msra.mxu0 0
      %834 = vmatprep.subr.bf16.mxu0 0
      %835 = vmatpush1.bf16.msra.mxu0 0
      %836 = vmatprep.subr.bf16.mxu0 0
      %837 = vmatpush1.bf16.msra.mxu0 0
      %838 = vmatprep.subr.bf16.mxu0 0
      %839 = vmatpush1.bf16.msra.mxu0 0
      %840 = vmatprep.subr.bf16.mxu0 0
      %841 = vmatpush1.bf16.msra.mxu0 0
      %842 = vmatprep.subr.bf16.mxu0 0
      %843 = vmatpush1.bf16.msra.mxu0 0
      %844 = vmatprep.subr.bf16.mxu0 0
      %845 = vmatpush1.bf16.msra.mxu0 0
      %846 = vmatprep.subr.bf16.mxu0 0
      %847 = vmatpush1.bf16.msra.mxu0 0
      %848 = vmatprep.subr.bf16.mxu0 0
      %849 = vmatpush1.bf16.msra.mxu0 0
      %850 = vmatprep.subr.bf16.mxu0 0
      %851 = vmatpush1.bf16.msra.mxu0 0
      %852 = vmatprep.mubr.bf16.mxu0 0
      %853 = vmatmul.mubr.bf16.gmra.mrb[0].mxu0 %v809
      %v854 = vpop.f32.mrb[0].mxu0
      %v855 = vadd.f32 %v806, %v854
      %v856 = vpop.f32.mrb[0].mxu0
      %v857 = vpop.f32.mrb[0].mxu0
      %v858 = vadd.f32 %v806, %v857
      %v859 = vpop.f32.mrb[0].mxu0
      %860 = vmatprep.mubr.bf16.mxu0 0
      %861 = vmatmul.mubr.bf16.gmra.mrb[0].mxu0 %v812
      %v862 = vpop.f32.mrb[0].mxu0
      %v863 = vadd.f32 %v806, %v862
      %v864 = vpop.f32.mrb[0].mxu0
      %v865 = vpop.f32.mrb[0].mxu0
      %v866 = vadd.f32 %v806, %v865
      %v867 = vpop.f32.mrb[0].mxu0
      %868 = vmatprep.mubr.bf16.mxu0 0
      %869 = vmatmul.mubr.bf16.gmra.mrb[0].mxu0 %v815
      %v870 = vpop.f32.mrb[0].mxu0
      %v871 = vadd.f32 %v806, %v870
      %v872 = vpop.f32.mrb[0].mxu0
      %v873 = vpop.f32.mrb[0].mxu0
      %v874 = vadd.f32 %v806, %v873
      %v875 = vpop.f32.mrb[0].mxu0
      %876 = vmatprep.mubr.bf16.mxu0 0
      %877 = vmatmul.mubr.bf16.gmra.mrb[0].mxu0 %v818
      %v878 = vpop.f32.mrb[0].mxu0
      %v879 = vadd.f32 %v806, %v878
      %v880 = vpop.f32.mrb[0].mxu0
      %v881 = vpop.f32.mrb[0].mxu0
      %v882 = vadd.f32 %v806, %v881
      %v883 = vpop.f32.mrb[0].mxu0
      %884 = vdwg.mxu0
      %v885 = vpack.c.bf16 %v764, %v761
      %v886 = vpack.c.bf16 %v772, %v769
      %v887 = vpack.c.bf16 %v780, %v777
      %v888 = vpack.c.bf16 %v788, %v785
      %893 = vrot.lane.b32.xlu0 %v885, 96
      %v894 = vpop.permute.xlu0 %893
      %895 = vrot.lane.b32.xlu0 %v886, 96
      %v896 = vpop.permute.xlu0 %895
      %897 = vrot.lane.b32.xlu0 %v887, 96
      %v898 = vpop.permute.xlu0 %897
      %899 = vrot.lane.b32.xlu0 %v888, 96
      %v900 = vpop.permute.xlu0 %899
      %v902 = vsel %vm606, %v885, 0
      %v905 = vsel %vm606, %v886, 0
      %v908 = vsel %vm606, %v887, 0
      %v911 = vsel %vm606, %v888, 0
      %v914 = vsel %vm606, %v894, 0
      %v917 = vsel %vm606, %v896, 0
      %v920 = vsel %vm606, %v898, 0
      %v923 = vsel %vm606, %v900, 0
      %925 = vmatprep.subr.bf16.mxu0 0
      %926 = vmatpush1.bf16.xpose.msra.mxu0 %v914
      %927 = vmatprep.subr.bf16.mxu0 0
      %928 = vmatpush1.bf16.xpose.msra.mxu0 %v917
      %929 = vmatprep.subr.bf16.mxu0 0
      %930 = vmatpush1.bf16.xpose.msra.mxu0 %v920
      %931 = vmatprep.subr.bf16.mxu0 0
      %932 = vmatpush1.bf16.xpose.msra.mxu0 %v923
      %933 = vmatprep.subr.bf16.mxu0 0
      %934 = vmatpush1.bf16.xpose.msra.mxu0 0
      %935 = vmatprep.subr.bf16.mxu0 0
      %936 = vmatpush1.bf16.xpose.msra.mxu0 0
      %937 = vmatprep.subr.bf16.mxu0 0
      %938 = vmatpush1.bf16.xpose.msra.mxu0 0
      %939 = vmatprep.subr.bf16.mxu0 0
      %940 = vmatpush1.bf16.xpose.msra.mxu0 0
      %941 = vmatprep.subr.bf16.mxu0 0
      %942 = vmatpush1.bf16.xpose.msra.mxu0 0
      %943 = vmatprep.subr.bf16.mxu0 0
      %944 = vmatpush1.bf16.xpose.msra.mxu0 0
      %945 = vmatprep.subr.bf16.mxu0 0
      %946 = vmatpush1.bf16.xpose.msra.mxu0 0
      %947 = vmatprep.subr.bf16.mxu0 0
      %948 = vmatpush1.bf16.xpose.msra.mxu0 0
      %949 = vmatprep.subr.bf16.mxu0 0
      %950 = vmatpush1.bf16.xpose.msra.mxu0 0
      %951 = vmatprep.subr.bf16.mxu0 0
      %952 = vmatpush1.bf16.xpose.msra.mxu0 0
      %953 = vmatprep.subr.bf16.mxu0 0
      %954 = vmatpush1.bf16.xpose.msra.mxu0 0
      %955 = vmatprep.subr.bf16.mxu0 0
      %956 = vmatpush1.bf16.xpose.msra.mxu0 0
      %957 = vmatprep.mubr.bf16.mxu0 0
      %958 = vmatmul.mubr.bf16.gmra.mrb[0].mxu0 %v902
      %v959 = vpop.f32.mrb[0].mxu0
      %v960 = vadd.f32 0.0, %v959
      %v961 = vpop.f32.mrb[0].mxu0
      %v962 = vpop.f32.mrb[0].mxu0
      %v963 = vadd.f32 0.0, %v962
      %v964 = vpop.f32.mrb[0].mxu0
      %965 = vmatprep.mubr.bf16.mxu0 0
      %966 = vmatmul.mubr.bf16.gmra.mrb[0].mxu0 %v905
      %v967 = vpop.f32.mrb[0].mxu0
      %v968 = vadd.f32 0.0, %v967
      %v969 = vpop.f32.mrb[0].mxu0
      %v970 = vpop.f32.mrb[0].mxu0
      %v971 = vadd.f32 0.0, %v970
      %v972 = vpop.f32.mrb[0].mxu0
      %973 = vmatprep.mubr.bf16.mxu0 0
      %974 = vmatmul.mubr.bf16.gmra.mrb[0].mxu0 %v908
      %v975 = vpop.f32.mrb[0].mxu0
      %v976 = vadd.f32 0.0, %v975
      %v977 = vpop.f32.mrb[0].mxu0
      %v978 = vpop.f32.mrb[0].mxu0
      %v979 = vadd.f32 0.0, %v978
      %v980 = vpop.f32.mrb[0].mxu0
      %981 = vmatprep.mubr.bf16.mxu0 0
      %982 = vmatmul.mubr.bf16.gmra.mrb[0].mxu0 %v911
      %v983 = vpop.f32.mrb[0].mxu0
      %v984 = vadd.f32 0.0, %v983
      %v985 = vpop.f32.mrb[0].mxu0
      %v986 = vpop.f32.mrb[0].mxu0
      %v987 = vadd.f32 0.0, %v986
      %v988 = vpop.f32.mrb[0].mxu0
      %989 = vdwg.mxu0
      %v990 = vmul.f32 %v960, 0.35355338
      %v991 = vmul.f32 %v963, 0.35355338
      %v992 = vmul.f32 %v968, 0.35355338
      %v993 = vmul.f32 %v971, 0.35355338
      %v994 = vmul.f32 %v976, 0.35355338
      %v995 = vmul.f32 %v979, 0.35355338
      %v996 = vmul.f32 %v984, 0.35355338
      %v997 = vmul.f32 %v987, 0.35355338
      %vm998 = vcmask 523264
      %v999 = vsel %vm998, %v990, -inf
      %1000 = vmax.xlane.f32.xlu0 %v999
      %v1001 = vpop.xlane.xlu0 %1000
      %v1002 = vsel %vm998, %v991, -inf
      %1003 = vmax.xlane.f32.xlu0 %v1002
      %v1004 = vpop.xlane.xlu0 %1003
      %v1005 = vsel %vm998, %v992, -inf
      %1006 = vmax.xlane.f32.xlu0 %v1005
      %v1007 = vpop.xlane.xlu0 %1006
      %v1008 = vsel %vm998, %v993, -inf
      %1009 = vmax.xlane.f32.xlu0 %v1008
      %v1010 = vpop.xlane.xlu0 %1009
      %v1011 = vsel %vm998, %v994, -inf
      %1012 = vmax.xlane.f32.xlu0 %v1011
      %v1013 = vpop.xlane.xlu0 %1012
      %v1014 = vsel %vm998, %v995, -inf
      %1015 = vmax.xlane.f32.xlu0 %v1014
      %v1016 = vpop.xlane.xlu0 %1015
      %v1017 = vsel %vm998, %v996, -inf
      %1018 = vmax.xlane.f32.xlu0 %v1017
      %v1019 = vpop.xlane.xlu0 %1018
      %v1020 = vsel %vm998, %v997, -inf
      %1021 = vmax.xlane.f32.xlu0 %v1020
      %v1022 = vpop.xlane.xlu0 %1021
      %v1023 = vsub.f32 %v990, %v1001
      %v1024 = vsub.f32 %v991, %v1004
      %v1025 = vsub.f32 %v992, %v1007
      %v1026 = vsub.f32 %v993, %v1010
      %v1027 = vsub.f32 %v994, %v1013
      %v1028 = vsub.f32 %v995, %v1016
      %v1029 = vsub.f32 %v996, %v1019
      %v1030 = vsub.f32 %v997, %v1022
      %v1031 = vmul.f32 %v1023, 1.442695
      %v1032 = vpow.pop %v1031
      %v1033 = vmul.f32 %v1024, 1.442695
      %v1034 = vpow.pop %v1033
      %v1035 = vmul.f32 %v1025, 1.442695
      %v1036 = vpow.pop %v1035
      %v1037 = vmul.f32 %v1026, 1.442695
      %v1038 = vpow.pop %v1037
      %v1039 = vmul.f32 %v1027, 1.442695
      %v1040 = vpow.pop %v1039
      %v1041 = vmul.f32 %v1028, 1.442695
      %v1042 = vpow.pop %v1041
      %v1043 = vmul.f32 %v1029, 1.442695
      %v1044 = vpow.pop %v1043
      %v1045 = vmul.f32 %v1030, 1.442695
      %v1046 = vpow.pop %v1045
      %v1047 = vsel %vm998, %v1032, 0.0
      %1048 = vadd.xlane.f32.xlu0 %v1047
      %v1049 = vpop.xlane.xlu0 %1048
      %v1050 = vsel %vm998, %v1034, 0.0
      %1051 = vadd.xlane.f32.xlu0 %v1050
      %v1052 = vpop.xlane.xlu0 %1051
      %v1053 = vsel %vm998, %v1036, 0.0
      %1054 = vadd.xlane.f32.xlu0 %v1053
      %v1055 = vpop.xlane.xlu0 %1054
      %v1056 = vsel %vm998, %v1038, 0.0
      %1057 = vadd.xlane.f32.xlu0 %v1056
      %v1058 = vpop.xlane.xlu0 %1057
      %v1059 = vsel %vm998, %v1040, 0.0
      %1060 = vadd.xlane.f32.xlu0 %v1059
      %v1061 = vpop.xlane.xlu0 %1060
      %v1062 = vsel %vm998, %v1042, 0.0
      %1063 = vadd.xlane.f32.xlu0 %v1062
      %v1064 = vpop.xlane.xlu0 %1063
      %v1065 = vsel %vm998, %v1044, 0.0
      %1066 = vadd.xlane.f32.xlu0 %v1065
      %v1067 = vpop.xlane.xlu0 %1066
      %v1068 = vsel %vm998, %v1046, 0.0
      %1069 = vadd.xlane.f32.xlu0 %v1068
      %v1070 = vpop.xlane.xlu0 %1069
      %v1071 = vrcp.pop %v1049
      %v1072 = vrcp.pop %v1052
      %v1073 = vrcp.pop %v1055
      %v1074 = vrcp.pop %v1058
      %v1075 = vrcp.pop %v1061
      %v1076 = vrcp.pop %v1064
      %v1077 = vrcp.pop %v1067
      %v1078 = vrcp.pop %v1070
      %v1079 = vmul.f32 %v1032, %v1071
      %v1080 = vmul.f32 %v1034, %v1072
      %v1081 = vmul.f32 %v1036, %v1073
      %v1082 = vmul.f32 %v1038, %v1074
      %v1083 = vmul.f32 %v1040, %v1075
      %v1084 = vmul.f32 %v1042, %v1076
      %v1085 = vmul.f32 %v1044, %v1077
      %v1086 = vmul.f32 %v1046, %v1078
      %v1087 = vpack.c.bf16 %v1080, %v1079
      %v1088 = vpack.c.bf16 %v1082, %v1081
      %v1089 = vpack.c.bf16 %v1084, %v1083
      %v1090 = vpack.c.bf16 %v1086, %v1085
      %v1091 = vpack.c.bf16 %v858, %v855
      %v1092 = vpack.c.bf16 %v866, %v863
      %v1093 = vpack.c.bf16 %v874, %v871
      %v1094 = vpack.c.bf16 %v882, %v879
      %v1096 = vsel %vm998, %v1087, 0
      %v1099 = vsel %vm998, %v1088, 0
      %v1102 = vsel %vm998, %v1089, 0
      %v1105 = vsel %vm998, %v1090, 0
      %1107 = vmatprep.subr.bf16.mxu0 0
      %1108 = vmatpush1.bf16.msra.mxu0 %v1091
      %1109 = vmatprep.subr.bf16.mxu0 0
      %1110 = vmatpush1.bf16.msra.mxu0 %v1092
      %1111 = vmatprep.subr.bf16.mxu0 0
      %1112 = vmatpush1.bf16.msra.mxu0 %v1093
      %1113 = vmatprep.subr.bf16.mxu0 0
      %1114 = vmatpush1.bf16.msra.mxu0 %v1094
      %1115 = vmatprep.subr.bf16.mxu0 0
      %1116 = vmatpush1.bf16.msra.mxu0 0
      %1117 = vmatprep.subr.bf16.mxu0 0
      %1118 = vmatpush1.bf16.msra.mxu0 0
      %1119 = vmatprep.subr.bf16.mxu0 0
      %1120 = vmatpush1.bf16.msra.mxu0 0
      %1121 = vmatprep.subr.bf16.mxu0 0
      %1122 = vmatpush1.bf16.msra.mxu0 0
      %1123 = vmatprep.subr.bf16.mxu0 0
      %1124 = vmatpush1.bf16.msra.mxu0 0
      %1125 = vmatprep.subr.bf16.mxu0 0
      %1126 = vmatpush1.bf16.msra.mxu0 0
      %1127 = vmatprep.subr.bf16.mxu0 0
      %1128 = vmatpush1.bf16.msra.mxu0 0
      %1129 = vmatprep.subr.bf16.mxu0 0
      %1130 = vmatpush1.bf16.msra.mxu0 0
      %1131 = vmatprep.subr.bf16.mxu0 0
      %1132 = vmatpush1.bf16.msra.mxu0 0
      %1133 = vmatprep.subr.bf16.mxu0 0
      %1134 = vmatpush1.bf16.msra.mxu0 0
      %1135 = vmatprep.subr.bf16.mxu0 0
      %1136 = vmatpush1.bf16.msra.mxu0 0
      %1137 = vmatprep.subr.bf16.mxu0 0
      %1138 = vmatpush1.bf16.msra.mxu0 0
      %1139 = vmatprep.mubr.bf16.mxu0 0
      %1140 = vmatmul.mubr.bf16.gmra.mrb[0].mxu0 %v1096
      %v1141 = vpop.f32.mrb[0].mxu0
      %v1142 = vadd.f32 0.0, %v1141
      %v1143 = vpop.f32.mrb[0].mxu0
      %v1144 = vpop.f32.mrb[0].mxu0
      %v1145 = vadd.f32 0.0, %v1144
      %v1146 = vpop.f32.mrb[0].mxu0
      %1147 = vmatprep.mubr.bf16.mxu0 0
      %1148 = vmatmul.mubr.bf16.gmra.mrb[0].mxu0 %v1099
      %v1149 = vpop.f32.mrb[0].mxu0
      %v1150 = vadd.f32 0.0, %v1149
      %v1151 = vpop.f32.mrb[0].mxu0
      %v1152 = vpop.f32.mrb[0].mxu0
      %v1153 = vadd.f32 0.0, %v1152
      %v1154 = vpop.f32.mrb[0].mxu0
      %1155 = vmatprep.mubr.bf16.mxu0 0
      %1156 = vmatmul.mubr.bf16.gmra.mrb[0].mxu0 %v1102
      %v1157 = vpop.f32.mrb[0].mxu0
      %v1158 = vadd.f32 0.0, %v1157
      %v1159 = vpop.f32.mrb[0].mxu0
      %v1160 = vpop.f32.mrb[0].mxu0
      %v1161 = vadd.f32 0.0, %v1160
      %v1162 = vpop.f32.mrb[0].mxu0
      %1163 = vmatprep.mubr.bf16.mxu0 0
      %1164 = vmatmul.mubr.bf16.gmra.mrb[0].mxu0 %v1105
      %v1165 = vpop.f32.mrb[0].mxu0
      %v1166 = vadd.f32 0.0, %v1165
      %v1167 = vpop.f32.mrb[0].mxu0
      %v1168 = vpop.f32.mrb[0].mxu0
      %v1169 = vadd.f32 0.0, %v1168
      %v1170 = vpop.f32.mrb[0].mxu0
      %1171 = vdwg.mxu0
      %1172 = vrot.lane.b32.xlu0 %v885, 120
      %v1173 = vpop.permute.xlu0 %1172
      %1174 = vrot.lane.b32.xlu0 %v886, 120
      %v1175 = vpop.permute.xlu0 %1174
      %1176 = vrot.lane.b32.xlu0 %v887, 120
      %v1177 = vpop.permute.xlu0 %1176
      %1178 = vrot.lane.b32.xlu0 %v888, 120
      %v1179 = vpop.permute.xlu0 %1178
      %1180 = vrot.lane.b32.xlu0 %v885, 88
      %v1181 = vpop.permute.xlu0 %1180
      %1182 = vrot.lane.b32.xlu0 %v886, 88
      %v1183 = vpop.permute.xlu0 %1182
      %1184 = vrot.lane.b32.xlu0 %v887, 88
      %v1185 = vpop.permute.xlu0 %1184
      %1186 = vrot.lane.b32.xlu0 %v888, 88
      %v1187 = vpop.permute.xlu0 %1186
      %v1189 = vsel %vm606, %v1173, 0
      %v1192 = vsel %vm606, %v1175, 0
      %v1195 = vsel %vm606, %v1177, 0
      %v1198 = vsel %vm606, %v1179, 0
      %v1201 = vsel %vm606, %v1181, 0
      %v1204 = vsel %vm606, %v1183, 0
      %v1207 = vsel %vm606, %v1185, 0
      %v1210 = vsel %vm606, %v1187, 0
      %1212 = vmatprep.subr.bf16.mxu0 0
      %1213 = vmatpush1.bf16.xpose.msra.mxu0 %v1201
      %1214 = vmatprep.subr.bf16.mxu0 0
      %1215 = vmatpush1.bf16.xpose.msra.mxu0 %v1204
      %1216 = vmatprep.subr.bf16.mxu0 0
      %1217 = vmatpush1.bf16.xpose.msra.mxu0 %v1207
      %1218 = vmatprep.subr.bf16.mxu0 0
      %1219 = vmatpush1.bf16.xpose.msra.mxu0 %v1210
      %1220 = vmatprep.subr.bf16.mxu0 0
      %1221 = vmatpush1.bf16.xpose.msra.mxu0 0
      %1222 = vmatprep.subr.bf16.mxu0 0
      %1223 = vmatpush1.bf16.xpose.msra.mxu0 0
      %1224 = vmatprep.subr.bf16.mxu0 0
      %1225 = vmatpush1.bf16.xpose.msra.mxu0 0
      %1226 = vmatprep.subr.bf16.mxu0 0
      %1227 = vmatpush1.bf16.xpose.msra.mxu0 0
      %1228 = vmatprep.subr.bf16.mxu0 0
      %1229 = vmatpush1.bf16.xpose.msra.mxu0 0
      %1230 = vmatprep.subr.bf16.mxu0 0
      %1231 = vmatpush1.bf16.xpose.msra.mxu0 0
      %1232 = vmatprep.subr.bf16.mxu0 0
      %1233 = vmatpush1.bf16.xpose.msra.mxu0 0
      %1234 = vmatprep.subr.bf16.mxu0 0
      %1235 = vmatpush1.bf16.xpose.msra.mxu0 0
      %1236 = vmatprep.subr.bf16.mxu0 0
      %1237 = vmatpush1.bf16.xpose.msra.mxu0 0
      %1238 = vmatprep.subr.bf16.mxu0 0
      %1239 = vmatpush1.bf16.xpose.msra.mxu0 0
      %1240 = vmatprep.subr.bf16.mxu0 0
      %1241 = vmatpush1.bf16.xpose.msra.mxu0 0
      %1242 = vmatprep.subr.bf16.mxu0 0
      %1243 = vmatpush1.bf16.xpose.msra.mxu0 0
      %1244 = vmatprep.mubr.bf16.mxu0 0
      %1245 = vmatmul.mubr.bf16.gmra.mrb[0].mxu0 %v1189
      %v1246 = vpop.f32.mrb[0].mxu0
      %v1247 = vadd.f32 0.0, %v1246
      %v1248 = vpop.f32.mrb[0].mxu0
      %v1249 = vpop.f32.mrb[0].mxu0
      %v1250 = vadd.f32 0.0, %v1249
      %v1251 = vpop.f32.mrb[0].mxu0
      %1252 = vmatprep.mubr.bf16.mxu0 0
      %1253 = vmatmul.mubr.bf16.gmra.mrb[0].mxu0 %v1192
      %v1254 = vpop.f32.mrb[0].mxu0
      %v1255 = vadd.f32 0.0, %v1254
      %v1256 = vpop.f32.mrb[0].mxu0
      %v1257 = vpop.f32.mrb[0].mxu0
      %v1258 = vadd.f32 0.0, %v1257
      %v1259 = vpop.f32.mrb[0].mxu0
      %1260 = vmatprep.mubr.bf16.mxu0 0
      %1261 = vmatmul.mubr.bf16.gmra.mrb[0].mxu0 %v1195
      %v1262 = vpop.f32.mrb[0].mxu0
      %v1263 = vadd.f32 0.0, %v1262
      %v1264 = vpop.f32.mrb[0].mxu0
      %v1265 = vpop.f32.mrb[0].mxu0
      %v1266 = vadd.f32 0.0, %v1265
      %v1267 = vpop.f32.mrb[0].mxu0
      %1268 = vmatprep.mubr.bf16.mxu0 0
      %1269 = vmatmul.mubr.bf16.gmra.mrb[0].mxu0 %v1198
      %v1270 = vpop.f32.mrb[0].mxu0
      %v1271 = vadd.f32 0.0, %v1270
      %v1272 = vpop.f32.mrb[0].mxu0
      %v1273 = vpop.f32.mrb[0].mxu0
      %v1274 = vadd.f32 0.0, %v1273
      %v1275 = vpop.f32.mrb[0].mxu0
      %1276 = vdwg.mxu0
      %v1277 = vmul.f32 %v1247, 0.35355338
      %v1278 = vmul.f32 %v1250, 0.35355338
      %v1279 = vmul.f32 %v1255, 0.35355338
      %v1280 = vmul.f32 %v1258, 0.35355338
      %v1281 = vmul.f32 %v1263, 0.35355338
      %v1282 = vmul.f32 %v1266, 0.35355338
      %v1283 = vmul.f32 %v1271, 0.35355338
      %v1284 = vmul.f32 %v1274, 0.35355338
      %v1285 = vsel %vm998, %v1277, -inf
      %1286 = vmax.xlane.f32.xlu0 %v1285
      %v1287 = vpop.xlane.xlu0 %1286
      %v1288 = vsel %vm998, %v1278, -inf
      %1289 = vmax.xlane.f32.xlu0 %v1288
      %v1290 = vpop.xlane.xlu0 %1289
      %v1291 = vsel %vm998, %v1279, -inf
      %1292 = vmax.xlane.f32.xlu0 %v1291
      %v1293 = vpop.xlane.xlu0 %1292
      %v1294 = vsel %vm998, %v1280, -inf
      %1295 = vmax.xlane.f32.xlu0 %v1294
      %v1296 = vpop.xlane.xlu0 %1295
      %v1297 = vsel %vm998, %v1281, -inf
      %1298 = vmax.xlane.f32.xlu0 %v1297
      %v1299 = vpop.xlane.xlu0 %1298
      %v1300 = vsel %vm998, %v1282, -inf
      %1301 = vmax.xlane.f32.xlu0 %v1300
      %v1302 = vpop.xlane.xlu0 %1301
      %v1303 = vsel %vm998, %v1283, -inf
      %1304 = vmax.xlane.f32.xlu0 %v1303
      %v1305 = vpop.xlane.xlu0 %1304
      %v1306 = vsel %vm998, %v1284, -inf
      %1307 = vmax.xlane.f32.xlu0 %v1306
      %v1308 = vpop.xlane.xlu0 %1307
      %v1309 = vsub.f32 %v1277, %v1287
      %v1310 = vsub.f32 %v1278, %v1290
      %v1311 = vsub.f32 %v1279, %v1293
      %v1312 = vsub.f32 %v1280, %v1296
      %v1313 = vsub.f32 %v1281, %v1299
      %v1314 = vsub.f32 %v1282, %v1302
      %v1315 = vsub.f32 %v1283, %v1305
      %v1316 = vsub.f32 %v1284, %v1308
      %v1317 = vmul.f32 %v1309, 1.442695
      %v1318 = vpow.pop %v1317
      %v1319 = vmul.f32 %v1310, 1.442695
      %v1320 = vpow.pop %v1319
      %v1321 = vmul.f32 %v1311, 1.442695
      %v1322 = vpow.pop %v1321
      %v1323 = vmul.f32 %v1312, 1.442695
      %v1324 = vpow.pop %v1323
      %v1325 = vmul.f32 %v1313, 1.442695
      %v1326 = vpow.pop %v1325
      %v1327 = vmul.f32 %v1314, 1.442695
      %v1328 = vpow.pop %v1327
      %v1329 = vmul.f32 %v1315, 1.442695
      %v1330 = vpow.pop %v1329
      %v1331 = vmul.f32 %v1316, 1.442695
      %v1332 = vpow.pop %v1331
      %v1333 = vsel %vm998, %v1318, 0.0
      %1334 = vadd.xlane.f32.xlu0 %v1333
      %v1335 = vpop.xlane.xlu0 %1334
      %v1336 = vsel %vm998, %v1320, 0.0
      %1337 = vadd.xlane.f32.xlu0 %v1336
      %v1338 = vpop.xlane.xlu0 %1337
      %v1339 = vsel %vm998, %v1322, 0.0
      %1340 = vadd.xlane.f32.xlu0 %v1339
      %v1341 = vpop.xlane.xlu0 %1340
      %v1342 = vsel %vm998, %v1324, 0.0
      %1343 = vadd.xlane.f32.xlu0 %v1342
      %v1344 = vpop.xlane.xlu0 %1343
      %v1345 = vsel %vm998, %v1326, 0.0
      %1346 = vadd.xlane.f32.xlu0 %v1345
      %v1347 = vpop.xlane.xlu0 %1346
      %v1348 = vsel %vm998, %v1328, 0.0
      %1349 = vadd.xlane.f32.xlu0 %v1348
      %v1350 = vpop.xlane.xlu0 %1349
      %v1351 = vsel %vm998, %v1330, 0.0
      %1352 = vadd.xlane.f32.xlu0 %v1351
      %v1353 = vpop.xlane.xlu0 %1352
      %v1354 = vsel %vm998, %v1332, 0.0
      %1355 = vadd.xlane.f32.xlu0 %v1354
      %v1356 = vpop.xlane.xlu0 %1355
      %v1357 = vrcp.pop %v1335
      %v1358 = vrcp.pop %v1338
      %v1359 = vrcp.pop %v1341
      %v1360 = vrcp.pop %v1344
      %v1361 = vrcp.pop %v1347
      %v1362 = vrcp.pop %v1350
      %v1363 = vrcp.pop %v1353
      %v1364 = vrcp.pop %v1356
      %v1365 = vmul.f32 %v1318, %v1357
      %v1366 = vmul.f32 %v1320, %v1358
      %v1367 = vmul.f32 %v1322, %v1359
      %v1368 = vmul.f32 %v1324, %v1360
      %v1369 = vmul.f32 %v1326, %v1361
      %v1370 = vmul.f32 %v1328, %v1362
      %v1371 = vmul.f32 %v1330, %v1363
      %v1372 = vmul.f32 %v1332, %v1364
      %v1373 = vpack.c.bf16 %v1366, %v1365
      %v1374 = vpack.c.bf16 %v1368, %v1367
      %v1375 = vpack.c.bf16 %v1370, %v1369
      %v1376 = vpack.c.bf16 %v1372, %v1371
      %1381 = vrot.lane.b32.xlu0 %v1091, 120
      %v1382 = vpop.permute.xlu0 %1381
      %1383 = vrot.lane.b32.xlu0 %v1092, 120
      %v1384 = vpop.permute.xlu0 %1383
      %1385 = vrot.lane.b32.xlu0 %v1093, 120
      %v1386 = vpop.permute.xlu0 %1385
      %1387 = vrot.lane.b32.xlu0 %v1094, 120
      %v1388 = vpop.permute.xlu0 %1387
      %v1394 = vsel %vm998, %v1373, 0
      %v1397 = vsel %vm998, %v1374, 0
      %v1400 = vsel %vm998, %v1375, 0
      %v1403 = vsel %vm998, %v1376, 0
      %1405 = vmatprep.subr.bf16.mxu0 0
      %1406 = vmatpush1.bf16.msra.mxu0 %v1382
      %1407 = vmatprep.subr.bf16.mxu0 0
      %1408 = vmatpush1.bf16.msra.mxu0 %v1384
      %1409 = vmatprep.subr.bf16.mxu0 0
      %1410 = vmatpush1.bf16.msra.mxu0 %v1386
      %1411 = vmatprep.subr.bf16.mxu0 0
      %1412 = vmatpush1.bf16.msra.mxu0 %v1388
      %1413 = vmatprep.subr.bf16.mxu0 0
      %1414 = vmatpush1.bf16.msra.mxu0 0
      %1415 = vmatprep.subr.bf16.mxu0 0
      %1416 = vmatpush1.bf16.msra.mxu0 0
      %1417 = vmatprep.subr.bf16.mxu0 0
      %1418 = vmatpush1.bf16.msra.mxu0 0
      %1419 = vmatprep.subr.bf16.mxu0 0
      %1420 = vmatpush1.bf16.msra.mxu0 0
      %1421 = vmatprep.subr.bf16.mxu0 0
      %1422 = vmatpush1.bf16.msra.mxu0 0
      %1423 = vmatprep.subr.bf16.mxu0 0
      %1424 = vmatpush1.bf16.msra.mxu0 0
      %1425 = vmatprep.subr.bf16.mxu0 0
      %1426 = vmatpush1.bf16.msra.mxu0 0
      %1427 = vmatprep.subr.bf16.mxu0 0
      %1428 = vmatpush1.bf16.msra.mxu0 0
      %1429 = vmatprep.subr.bf16.mxu0 0
      %1430 = vmatpush1.bf16.msra.mxu0 0
      %1431 = vmatprep.subr.bf16.mxu0 0
      %1432 = vmatpush1.bf16.msra.mxu0 0
      %1433 = vmatprep.subr.bf16.mxu0 0
      %1434 = vmatpush1.bf16.msra.mxu0 0
      %1435 = vmatprep.subr.bf16.mxu0 0
      %1436 = vmatpush1.bf16.msra.mxu0 0
      %1437 = vmatprep.mubr.bf16.mxu0 0
      %1438 = vmatmul.mubr.bf16.gmra.mrb[0].mxu0 %v1394
      %v1439 = vpop.f32.mrb[0].mxu0
      %v1440 = vadd.f32 0.0, %v1439
      %v1441 = vpop.f32.mrb[0].mxu0
      %v1442 = vpop.f32.mrb[0].mxu0
      %v1443 = vadd.f32 0.0, %v1442
      %v1444 = vpop.f32.mrb[0].mxu0
      %1445 = vmatprep.mubr.bf16.mxu0 0
      %1446 = vmatmul.mubr.bf16.gmra.mrb[0].mxu0 %v1397
      %v1447 = vpop.f32.mrb[0].mxu0
      %v1448 = vadd.f32 0.0, %v1447
      %v1449 = vpop.f32.mrb[0].mxu0
      %v1450 = vpop.f32.mrb[0].mxu0
      %v1451 = vadd.f32 0.0, %v1450
      %v1452 = vpop.f32.mrb[0].mxu0
      %1453 = vmatprep.mubr.bf16.mxu0 0
      %1454 = vmatmul.mubr.bf16.gmra.mrb[0].mxu0 %v1400
      %v1455 = vpop.f32.mrb[0].mxu0
      %v1456 = vadd.f32 0.0, %v1455
      %v1457 = vpop.f32.mrb[0].mxu0
      %v1458 = vpop.f32.mrb[0].mxu0
      %v1459 = vadd.f32 0.0, %v1458
      %v1460 = vpop.f32.mrb[0].mxu0
      %1461 = vmatprep.mubr.bf16.mxu0 0
      %1462 = vmatmul.mubr.bf16.gmra.mrb[0].mxu0 %v1403
      %v1463 = vpop.f32.mrb[0].mxu0
      %v1464 = vadd.f32 0.0, %v1463
      %v1465 = vpop.f32.mrb[0].mxu0
      %v1466 = vpop.f32.mrb[0].mxu0
      %v1467 = vadd.f32 0.0, %v1466
      %v1468 = vpop.f32.mrb[0].mxu0
      %1469 = vdwg.mxu0
      %1470 = vrot.lane.b32.xlu0 %v885, 112
      %v1471 = vpop.permute.xlu0 %1470
      %1472 = vrot.lane.b32.xlu0 %v886, 112
      %v1473 = vpop.permute.xlu0 %1472
      %1474 = vrot.lane.b32.xlu0 %v887, 112
      %v1475 = vpop.permute.xlu0 %1474
      %1476 = vrot.lane.b32.xlu0 %v888, 112
      %v1477 = vpop.permute.xlu0 %1476
      %1478 = vrot.lane.b32.xlu0 %v885, 80
      %v1479 = vpop.permute.xlu0 %1478
      %1480 = vrot.lane.b32.xlu0 %v886, 80
      %v1481 = vpop.permute.xlu0 %1480
      %1482 = vrot.lane.b32.xlu0 %v887, 80
      %v1483 = vpop.permute.xlu0 %1482
      %1484 = vrot.lane.b32.xlu0 %v888, 80
      %v1485 = vpop.permute.xlu0 %1484
      %v1487 = vsel %vm606, %v1471, 0
      %v1490 = vsel %vm606, %v1473, 0
      %v1493 = vsel %vm606, %v1475, 0
      %v1496 = vsel %vm606, %v1477, 0
      %v1499 = vsel %vm606, %v1479, 0
      %v1502 = vsel %vm606, %v1481, 0
      %v1505 = vsel %vm606, %v1483, 0
      %v1508 = vsel %vm606, %v1485, 0
      %1510 = vmatprep.subr.bf16.mxu0 0
      %1511 = vmatpush1.bf16.xpose.msra.mxu0 %v1499
      %1512 = vmatprep.subr.bf16.mxu0 0
      %1513 = vmatpush1.bf16.xpose.msra.mxu0 %v1502
      %1514 = vmatprep.subr.bf16.mxu0 0
      %1515 = vmatpush1.bf16.xpose.msra.mxu0 %v1505
      %1516 = vmatprep.subr.bf16.mxu0 0
      %1517 = vmatpush1.bf16.xpose.msra.mxu0 %v1508
      %1518 = vmatprep.subr.bf16.mxu0 0
      %1519 = vmatpush1.bf16.xpose.msra.mxu0 0
      %1520 = vmatprep.subr.bf16.mxu0 0
      %1521 = vmatpush1.bf16.xpose.msra.mxu0 0
      %1522 = vmatprep.subr.bf16.mxu0 0
      %1523 = vmatpush1.bf16.xpose.msra.mxu0 0
      %1524 = vmatprep.subr.bf16.mxu0 0
      %1525 = vmatpush1.bf16.xpose.msra.mxu0 0
      %1526 = vmatprep.subr.bf16.mxu0 0
      %1527 = vmatpush1.bf16.xpose.msra.mxu0 0
      %1528 = vmatprep.subr.bf16.mxu0 0
      %1529 = vmatpush1.bf16.xpose.msra.mxu0 0
      %1530 = vmatprep.subr.bf16.mxu0 0
      %1531 = vmatpush1.bf16.xpose.msra.mxu0 0
      %1532 = vmatprep.subr.bf16.mxu0 0
      %1533 = vmatpush1.bf16.xpose.msra.mxu0 0
      %1534 = vmatprep.subr.bf16.mxu0 0
      %1535 = vmatpush1.bf16.xpose.msra.mxu0 0
      %1536 = vmatprep.subr.bf16.mxu0 0
      %1537 = vmatpush1.bf16.xpose.msra.mxu0 0
      %1538 = vmatprep.subr.bf16.mxu0 0
      %1539 = vmatpush1.bf16.xpose.msra.mxu0 0
      %1540 = vmatprep.subr.bf16.mxu0 0
      %1541 = vmatpush1.bf16.xpose.msra.mxu0 0
      %1542 = vmatprep.mubr.bf16.mxu0 0
      %1543 = vmatmul.mubr.bf16.gmra.mrb[0].mxu0 %v1487
      %v1544 = vpop.f32.mrb[0].mxu0
      %v1545 = vadd.f32 0.0, %v1544
      %v1546 = vpop.f32.mrb[0].mxu0
      %v1547 = vpop.f32.mrb[0].mxu0
      %v1548 = vadd.f32 0.0, %v1547
      %v1549 = vpop.f32.mrb[0].mxu0
      %1550 = vmatprep.mubr.bf16.mxu0 0
      %1551 = vmatmul.mubr.bf16.gmra.mrb[0].mxu0 %v1490
      %v1552 = vpop.f32.mrb[0].mxu0
      %v1553 = vadd.f32 0.0, %v1552
      %v1554 = vpop.f32.mrb[0].mxu0
      %v1555 = vpop.f32.mrb[0].mxu0
      %v1556 = vadd.f32 0.0, %v1555
      %v1557 = vpop.f32.mrb[0].mxu0
      %1558 = vmatprep.mubr.bf16.mxu0 0
      %1559 = vmatmul.mubr.bf16.gmra.mrb[0].mxu0 %v1493
      %v1560 = vpop.f32.mrb[0].mxu0
      %v1561 = vadd.f32 0.0, %v1560
      %v1562 = vpop.f32.mrb[0].mxu0
      %v1563 = vpop.f32.mrb[0].mxu0
      %v1564 = vadd.f32 0.0, %v1563
      %v1565 = vpop.f32.mrb[0].mxu0
      %1566 = vmatprep.mubr.bf16.mxu0 0
      %1567 = vmatmul.mubr.bf16.gmra.mrb[0].mxu0 %v1496
      %v1568 = vpop.f32.mrb[0].mxu0
      %v1569 = vadd.f32 0.0, %v1568
      %v1570 = vpop.f32.mrb[0].mxu0
      %v1571 = vpop.f32.mrb[0].mxu0
      %v1572 = vadd.f32 0.0, %v1571
      %v1573 = vpop.f32.mrb[0].mxu0
      %1574 = vdwg.mxu0
      %v1575 = vmul.f32 %v1545, 0.35355338
      %v1576 = vmul.f32 %v1548, 0.35355338
      %v1577 = vmul.f32 %v1553, 0.35355338
      %v1578 = vmul.f32 %v1556, 0.35355338
      %v1579 = vmul.f32 %v1561, 0.35355338
      %v1580 = vmul.f32 %v1564, 0.35355338
      %v1581 = vmul.f32 %v1569, 0.35355338
      %v1582 = vmul.f32 %v1572, 0.35355338
      %v1583 = vsel %vm998, %v1575, -inf
      %1584 = vmax.xlane.f32.xlu0 %v1583
      %v1585 = vpop.xlane.xlu0 %1584
      %v1586 = vsel %vm998, %v1576, -inf
      %1587 = vmax.xlane.f32.xlu0 %v1586
      %v1588 = vpop.xlane.xlu0 %1587
      %v1589 = vsel %vm998, %v1577, -inf
      %1590 = vmax.xlane.f32.xlu0 %v1589
      %v1591 = vpop.xlane.xlu0 %1590
      %v1592 = vsel %vm998, %v1578, -inf
      %1593 = vmax.xlane.f32.xlu0 %v1592
      %v1594 = vpop.xlane.xlu0 %1593
      %v1595 = vsel %vm998, %v1579, -inf
      %1596 = vmax.xlane.f32.xlu0 %v1595
      %v1597 = vpop.xlane.xlu0 %1596
      %v1598 = vsel %vm998, %v1580, -inf
      %1599 = vmax.xlane.f32.xlu0 %v1598
      %v1600 = vpop.xlane.xlu0 %1599
      %v1601 = vsel %vm998, %v1581, -inf
      %1602 = vmax.xlane.f32.xlu0 %v1601
      %v1603 = vpop.xlane.xlu0 %1602
      %v1604 = vsel %vm998, %v1582, -inf
      %1605 = vmax.xlane.f32.xlu0 %v1604
      %v1606 = vpop.xlane.xlu0 %1605
      %v1607 = vsub.f32 %v1575, %v1585
      %v1608 = vsub.f32 %v1576, %v1588
      %v1609 = vsub.f32 %v1577, %v1591
      %v1610 = vsub.f32 %v1578, %v1594
      %v1611 = vsub.f32 %v1579, %v1597
      %v1612 = vsub.f32 %v1580, %v1600
      %v1613 = vsub.f32 %v1581, %v1603
      %v1614 = vsub.f32 %v1582, %v1606
      %v1615 = vmul.f32 %v1607, 1.442695
      %v1616 = vpow.pop %v1615
      %v1617 = vmul.f32 %v1608, 1.442695
      %v1618 = vpow.pop %v1617
      %v1619 = vmul.f32 %v1609, 1.442695
      %v1620 = vpow.pop %v1619
      %v1621 = vmul.f32 %v1610, 1.442695
      %v1622 = vpow.pop %v1621
      %v1623 = vmul.f32 %v1611, 1.442695
      %v1624 = vpow.pop %v1623
      %v1625 = vmul.f32 %v1612, 1.442695
      %v1626 = vpow.pop %v1625
      %v1627 = vmul.f32 %v1613, 1.442695
      %v1628 = vpow.pop %v1627
      %v1629 = vmul.f32 %v1614, 1.442695
      %v1630 = vpow.pop %v1629
      %v1631 = vsel %vm998, %v1616, 0.0
      %1632 = vadd.xlane.f32.xlu0 %v1631
      %v1633 = vpop.xlane.xlu0 %1632
      %v1634 = vsel %vm998, %v1618, 0.0
      %1635 = vadd.xlane.f32.xlu0 %v1634
      %v1636 = vpop.xlane.xlu0 %1635
      %v1637 = vsel %vm998, %v1620, 0.0
      %1638 = vadd.xlane.f32.xlu0 %v1637
      %v1639 = vpop.xlane.xlu0 %1638
      %v1640 = vsel %vm998, %v1622, 0.0
      %1641 = vadd.xlane.f32.xlu0 %v1640
      %v1642 = vpop.xlane.xlu0 %1641
      %v1643 = vsel %vm998, %v1624, 0.0
      %1644 = vadd.xlane.f32.xlu0 %v1643
      %v1645 = vpop.xlane.xlu0 %1644
      %v1646 = vsel %vm998, %v1626, 0.0
      %1647 = vadd.xlane.f32.xlu0 %v1646
      %v1648 = vpop.xlane.xlu0 %1647
      %v1649 = vsel %vm998, %v1628, 0.0
      %1650 = vadd.xlane.f32.xlu0 %v1649
      %v1651 = vpop.xlane.xlu0 %1650
      %v1652 = vsel %vm998, %v1630, 0.0
      %1653 = vadd.xlane.f32.xlu0 %v1652
      %v1654 = vpop.xlane.xlu0 %1653
      %v1655 = vrcp.pop %v1633
      %v1656 = vrcp.pop %v1636
      %v1657 = vrcp.pop %v1639
      %v1658 = vrcp.pop %v1642
      %v1659 = vrcp.pop %v1645
      %v1660 = vrcp.pop %v1648
      %v1661 = vrcp.pop %v1651
      %v1662 = vrcp.pop %v1654
      %v1663 = vmul.f32 %v1616, %v1655
      %v1664 = vmul.f32 %v1618, %v1656
      %v1665 = vmul.f32 %v1620, %v1657
      %v1666 = vmul.f32 %v1622, %v1658
      %v1667 = vmul.f32 %v1624, %v1659
      %v1668 = vmul.f32 %v1626, %v1660
      %v1669 = vmul.f32 %v1628, %v1661
      %v1670 = vmul.f32 %v1630, %v1662
      %v1671 = vpack.c.bf16 %v1664, %v1663
      %v1672 = vpack.c.bf16 %v1666, %v1665
      %v1673 = vpack.c.bf16 %v1668, %v1667
      %v1674 = vpack.c.bf16 %v1670, %v1669
      %1675 = vrot.lane.b32.xlu0 %v1091, 112
      %v1676 = vpop.permute.xlu0 %1675
      %1677 = vrot.lane.b32.xlu0 %v1092, 112
      %v1678 = vpop.permute.xlu0 %1677
      %1679 = vrot.lane.b32.xlu0 %v1093, 112
      %v1680 = vpop.permute.xlu0 %1679
      %1681 = vrot.lane.b32.xlu0 %v1094, 112
      %v1682 = vpop.permute.xlu0 %1681
      %v1688 = vsel %vm998, %v1671, 0
      %v1691 = vsel %vm998, %v1672, 0
      %v1694 = vsel %vm998, %v1673, 0
      %v1697 = vsel %vm998, %v1674, 0
      %1699 = vmatprep.subr.bf16.mxu0 0
      %1700 = vmatpush1.bf16.msra.mxu0 %v1676
      %1701 = vmatprep.subr.bf16.mxu0 0
      %1702 = vmatpush1.bf16.msra.mxu0 %v1678
      %1703 = vmatprep.subr.bf16.mxu0 0
      %1704 = vmatpush1.bf16.msra.mxu0 %v1680
      %1705 = vmatprep.subr.bf16.mxu0 0
      %1706 = vmatpush1.bf16.msra.mxu0 %v1682
      %1707 = vmatprep.subr.bf16.mxu0 0
      %1708 = vmatpush1.bf16.msra.mxu0 0
      %1709 = vmatprep.subr.bf16.mxu0 0
      %1710 = vmatpush1.bf16.msra.mxu0 0
      %1711 = vmatprep.subr.bf16.mxu0 0
      %1712 = vmatpush1.bf16.msra.mxu0 0
      %1713 = vmatprep.subr.bf16.mxu0 0
      %1714 = vmatpush1.bf16.msra.mxu0 0
      %1715 = vmatprep.subr.bf16.mxu0 0
      %1716 = vmatpush1.bf16.msra.mxu0 0
      %1717 = vmatprep.subr.bf16.mxu0 0
      %1718 = vmatpush1.bf16.msra.mxu0 0
      %1719 = vmatprep.subr.bf16.mxu0 0
      %1720 = vmatpush1.bf16.msra.mxu0 0
      %1721 = vmatprep.subr.bf16.mxu0 0
      %1722 = vmatpush1.bf16.msra.mxu0 0
      %1723 = vmatprep.subr.bf16.mxu0 0
      %1724 = vmatpush1.bf16.msra.mxu0 0
      %1725 = vmatprep.subr.bf16.mxu0 0
      %1726 = vmatpush1.bf16.msra.mxu0 0
      %1727 = vmatprep.subr.bf16.mxu0 0
      %1728 = vmatpush1.bf16.msra.mxu0 0
      %1729 = vmatprep.subr.bf16.mxu0 0
      %1730 = vmatpush1.bf16.msra.mxu0 0
      %1731 = vmatprep.mubr.bf16.mxu0 0
      %1732 = vmatmul.mubr.bf16.gmra.mrb[0].mxu0 %v1688
      %v1733 = vpop.f32.mrb[0].mxu0
      %v1734 = vadd.f32 0.0, %v1733
      %v1735 = vpop.f32.mrb[0].mxu0
      %v1736 = vpop.f32.mrb[0].mxu0
      %v1737 = vadd.f32 0.0, %v1736
      %v1738 = vpop.f32.mrb[0].mxu0
      %1739 = vmatprep.mubr.bf16.mxu0 0
      %1740 = vmatmul.mubr.bf16.gmra.mrb[0].mxu0 %v1691
      %v1741 = vpop.f32.mrb[0].mxu0
      %v1742 = vadd.f32 0.0, %v1741
      %v1743 = vpop.f32.mrb[0].mxu0
      %v1744 = vpop.f32.mrb[0].mxu0
      %v1745 = vadd.f32 0.0, %v1744
      %v1746 = vpop.f32.mrb[0].mxu0
      %1747 = vmatprep.mubr.bf16.mxu0 0
      %1748 = vmatmul.mubr.bf16.gmra.mrb[0].mxu0 %v1694
      %v1749 = vpop.f32.mrb[0].mxu0
      %v1750 = vadd.f32 0.0, %v1749
      %v1751 = vpop.f32.mrb[0].mxu0
      %v1752 = vpop.f32.mrb[0].mxu0
      %v1753 = vadd.f32 0.0, %v1752
      %v1754 = vpop.f32.mrb[0].mxu0
      %1755 = vmatprep.mubr.bf16.mxu0 0
      %1756 = vmatmul.mubr.bf16.gmra.mrb[0].mxu0 %v1697
      %v1757 = vpop.f32.mrb[0].mxu0
      %v1758 = vadd.f32 0.0, %v1757
      %v1759 = vpop.f32.mrb[0].mxu0
      %v1760 = vpop.f32.mrb[0].mxu0
      %v1761 = vadd.f32 0.0, %v1760
      %v1762 = vpop.f32.mrb[0].mxu0
      %1763 = vdwg.mxu0
      %1764 = vrot.lane.b32.xlu0 %v885, 104
      %v1765 = vpop.permute.xlu0 %1764
      %1766 = vrot.lane.b32.xlu0 %v886, 104
      %v1767 = vpop.permute.xlu0 %1766
      %1768 = vrot.lane.b32.xlu0 %v887, 104
      %v1769 = vpop.permute.xlu0 %1768
      %1770 = vrot.lane.b32.xlu0 %v888, 104
      %v1771 = vpop.permute.xlu0 %1770
      %1772 = vrot.lane.b32.xlu0 %v885, 72
      %v1773 = vpop.permute.xlu0 %1772
      %1774 = vrot.lane.b32.xlu0 %v886, 72
      %v1775 = vpop.permute.xlu0 %1774
      %1776 = vrot.lane.b32.xlu0 %v887, 72
      %v1777 = vpop.permute.xlu0 %1776
      %1778 = vrot.lane.b32.xlu0 %v888, 72
      %v1779 = vpop.permute.xlu0 %1778
      %v1781 = vsel %vm606, %v1765, 0
      %v1784 = vsel %vm606, %v1767, 0
      %v1787 = vsel %vm606, %v1769, 0
      %v1790 = vsel %vm606, %v1771, 0
      %v1793 = vsel %vm606, %v1773, 0
      %v1796 = vsel %vm606, %v1775, 0
      %v1799 = vsel %vm606, %v1777, 0
      %v1802 = vsel %vm606, %v1779, 0
      %1804 = vmatprep.subr.bf16.mxu0 0
      %1805 = vmatpush1.bf16.xpose.msra.mxu0 %v1793
      %1806 = vmatprep.subr.bf16.mxu0 0
      %1807 = vmatpush1.bf16.xpose.msra.mxu0 %v1796
      %1808 = vmatprep.subr.bf16.mxu0 0
      %1809 = vmatpush1.bf16.xpose.msra.mxu0 %v1799
      %1810 = vmatprep.subr.bf16.mxu0 0
      %1811 = vmatpush1.bf16.xpose.msra.mxu0 %v1802
      %1812 = vmatprep.subr.bf16.mxu0 0
      %1813 = vmatpush1.bf16.xpose.msra.mxu0 0
      %1814 = vmatprep.subr.bf16.mxu0 0
      %1815 = vmatpush1.bf16.xpose.msra.mxu0 0
      %1816 = vmatprep.subr.bf16.mxu0 0
      %1817 = vmatpush1.bf16.xpose.msra.mxu0 0
      %1818 = vmatprep.subr.bf16.mxu0 0
      %1819 = vmatpush1.bf16.xpose.msra.mxu0 0
      %1820 = vmatprep.subr.bf16.mxu0 0
      %1821 = vmatpush1.bf16.xpose.msra.mxu0 0
      %1822 = vmatprep.subr.bf16.mxu0 0
      %1823 = vmatpush1.bf16.xpose.msra.mxu0 0
      %1824 = vmatprep.subr.bf16.mxu0 0
      %1825 = vmatpush1.bf16.xpose.msra.mxu0 0
      %1826 = vmatprep.subr.bf16.mxu0 0
      %1827 = vmatpush1.bf16.xpose.msra.mxu0 0
      %1828 = vmatprep.subr.bf16.mxu0 0
      %1829 = vmatpush1.bf16.xpose.msra.mxu0 0
      %1830 = vmatprep.subr.bf16.mxu0 0
      %1831 = vmatpush1.bf16.xpose.msra.mxu0 0
      %1832 = vmatprep.subr.bf16.mxu0 0
      %1833 = vmatpush1.bf16.xpose.msra.mxu0 0
      %1834 = vmatprep.subr.bf16.mxu0 0
      %1835 = vmatpush1.bf16.xpose.msra.mxu0 0
      %1836 = vmatprep.mubr.bf16.mxu0 0
      %1837 = vmatmul.mubr.bf16.gmra.mrb[0].mxu0 %v1781
      %v1838 = vpop.f32.mrb[0].mxu0
      %v1839 = vadd.f32 0.0, %v1838
      %v1840 = vpop.f32.mrb[0].mxu0
      %v1841 = vpop.f32.mrb[0].mxu0
      %v1842 = vadd.f32 0.0, %v1841
      %v1843 = vpop.f32.mrb[0].mxu0
      %1844 = vmatprep.mubr.bf16.mxu0 0
      %1845 = vmatmul.mubr.bf16.gmra.mrb[0].mxu0 %v1784
      %v1846 = vpop.f32.mrb[0].mxu0
      %v1847 = vadd.f32 0.0, %v1846
      %v1848 = vpop.f32.mrb[0].mxu0
      %v1849 = vpop.f32.mrb[0].mxu0
      %v1850 = vadd.f32 0.0, %v1849
      %v1851 = vpop.f32.mrb[0].mxu0
      %1852 = vmatprep.mubr.bf16.mxu0 0
      %1853 = vmatmul.mubr.bf16.gmra.mrb[0].mxu0 %v1787
      %v1854 = vpop.f32.mrb[0].mxu0
      %v1855 = vadd.f32 0.0, %v1854
      %v1856 = vpop.f32.mrb[0].mxu0
      %v1857 = vpop.f32.mrb[0].mxu0
      %v1858 = vadd.f32 0.0, %v1857
      %v1859 = vpop.f32.mrb[0].mxu0
      %1860 = vmatprep.mubr.bf16.mxu0 0
      %1861 = vmatmul.mubr.bf16.gmra.mrb[0].mxu0 %v1790
      %v1862 = vpop.f32.mrb[0].mxu0
      %v1863 = vadd.f32 0.0, %v1862
      %v1864 = vpop.f32.mrb[0].mxu0
      %v1865 = vpop.f32.mrb[0].mxu0
      %v1866 = vadd.f32 0.0, %v1865
      %v1867 = vpop.f32.mrb[0].mxu0
      %1868 = vdwg.mxu0
      %v1869 = vmul.f32 %v1839, 0.35355338
      %v1870 = vmul.f32 %v1842, 0.35355338
      %v1871 = vmul.f32 %v1847, 0.35355338
      %v1872 = vmul.f32 %v1850, 0.35355338
      %v1873 = vmul.f32 %v1855, 0.35355338
      %v1874 = vmul.f32 %v1858, 0.35355338
      %v1875 = vmul.f32 %v1863, 0.35355338
      %v1876 = vmul.f32 %v1866, 0.35355338
      %v1877 = vsel %vm998, %v1869, -inf
      %1878 = vmax.xlane.f32.xlu0 %v1877
      %v1879 = vpop.xlane.xlu0 %1878
      %v1880 = vsel %vm998, %v1870, -inf
      %1881 = vmax.xlane.f32.xlu0 %v1880
      %v1882 = vpop.xlane.xlu0 %1881
      %v1883 = vsel %vm998, %v1871, -inf
      %1884 = vmax.xlane.f32.xlu0 %v1883
      %v1885 = vpop.xlane.xlu0 %1884
      %v1886 = vsel %vm998, %v1872, -inf
      %1887 = vmax.xlane.f32.xlu0 %v1886
      %v1888 = vpop.xlane.xlu0 %1887
      %v1889 = vsel %vm998, %v1873, -inf
      %1890 = vmax.xlane.f32.xlu0 %v1889
      %v1891 = vpop.xlane.xlu0 %1890
      %v1892 = vsel %vm998, %v1874, -inf
      %1893 = vmax.xlane.f32.xlu0 %v1892
      %v1894 = vpop.xlane.xlu0 %1893
      %v1895 = vsel %vm998, %v1875, -inf
      %1896 = vmax.xlane.f32.xlu0 %v1895
      %v1897 = vpop.xlane.xlu0 %1896
      %v1898 = vsel %vm998, %v1876, -inf
      %1899 = vmax.xlane.f32.xlu0 %v1898
      %v1900 = vpop.xlane.xlu0 %1899
      %v1901 = vsub.f32 %v1869, %v1879
      %v1902 = vsub.f32 %v1870, %v1882
      %v1903 = vsub.f32 %v1871, %v1885
      %v1904 = vsub.f32 %v1872, %v1888
      %v1905 = vsub.f32 %v1873, %v1891
      %v1906 = vsub.f32 %v1874, %v1894
      %v1907 = vsub.f32 %v1875, %v1897
      %v1908 = vsub.f32 %v1876, %v1900
      %v1909 = vmul.f32 %v1901, 1.442695
      %v1910 = vpow.pop %v1909
      %v1911 = vmul.f32 %v1902, 1.442695
      %v1912 = vpow.pop %v1911
      %v1913 = vmul.f32 %v1903, 1.442695
      %v1914 = vpow.pop %v1913
      %v1915 = vmul.f32 %v1904, 1.442695
      %v1916 = vpow.pop %v1915
      %v1917 = vmul.f32 %v1905, 1.442695
      %v1918 = vpow.pop %v1917
      %v1919 = vmul.f32 %v1906, 1.442695
      %v1920 = vpow.pop %v1919
      %v1921 = vmul.f32 %v1907, 1.442695
      %v1922 = vpow.pop %v1921
      %v1923 = vmul.f32 %v1908, 1.442695
      %v1924 = vpow.pop %v1923
      %v1925 = vsel %vm998, %v1910, 0.0
      %1926 = vadd.xlane.f32.xlu0 %v1925
      %v1927 = vpop.xlane.xlu0 %1926
      %v1928 = vsel %vm998, %v1912, 0.0
      %1929 = vadd.xlane.f32.xlu0 %v1928
      %v1930 = vpop.xlane.xlu0 %1929
      %v1931 = vsel %vm998, %v1914, 0.0
      %1932 = vadd.xlane.f32.xlu0 %v1931
      %v1933 = vpop.xlane.xlu0 %1932
      %v1934 = vsel %vm998, %v1916, 0.0
      %1935 = vadd.xlane.f32.xlu0 %v1934
      %v1936 = vpop.xlane.xlu0 %1935
      %v1937 = vsel %vm998, %v1918, 0.0
      %1938 = vadd.xlane.f32.xlu0 %v1937
      %v1939 = vpop.xlane.xlu0 %1938
      %v1940 = vsel %vm998, %v1920, 0.0
      %1941 = vadd.xlane.f32.xlu0 %v1940
      %v1942 = vpop.xlane.xlu0 %1941
      %v1943 = vsel %vm998, %v1922, 0.0
      %1944 = vadd.xlane.f32.xlu0 %v1943
      %v1945 = vpop.xlane.xlu0 %1944
      %v1946 = vsel %vm998, %v1924, 0.0
      %1947 = vadd.xlane.f32.xlu0 %v1946
      %v1948 = vpop.xlane.xlu0 %1947
      %v1949 = vrcp.pop %v1927
      %v1950 = vrcp.pop %v1930
      %v1951 = vrcp.pop %v1933
      %v1952 = vrcp.pop %v1936
      %v1953 = vrcp.pop %v1939
      %v1954 = vrcp.pop %v1942
      %v1955 = vrcp.pop %v1945
      %v1956 = vrcp.pop %v1948
      %v1957 = vmul.f32 %v1910, %v1949
      %v1958 = vmul.f32 %v1912, %v1950
      %v1959 = vmul.f32 %v1914, %v1951
      %v1960 = vmul.f32 %v1916, %v1952
      %v1961 = vmul.f32 %v1918, %v1953
      %v1962 = vmul.f32 %v1920, %v1954
      %v1963 = vmul.f32 %v1922, %v1955
      %v1964 = vmul.f32 %v1924, %v1956
      %v1965 = vpack.c.bf16 %v1958, %v1957
      %v1966 = vpack.c.bf16 %v1960, %v1959
      %v1967 = vpack.c.bf16 %v1962, %v1961
      %v1968 = vpack.c.bf16 %v1964, %v1963
      %1969 = vrot.lane.b32.xlu0 %v1091, 104
      %v1970 = vpop.permute.xlu0 %1969
      %1971 = vrot.lane.b32.xlu0 %v1092, 104
      %v1972 = vpop.permute.xlu0 %1971
      %1973 = vrot.lane.b32.xlu0 %v1093, 104
      %v1974 = vpop.permute.xlu0 %1973
      %1975 = vrot.lane.b32.xlu0 %v1094, 104
      %v1976 = vpop.permute.xlu0 %1975
      %v1982 = vsel %vm998, %v1965, 0
      %v1985 = vsel %vm998, %v1966, 0
      %v1988 = vsel %vm998, %v1967, 0
      %v1991 = vsel %vm998, %v1968, 0
      %1993 = vmatprep.subr.bf16.mxu0 0
      %1994 = vmatpush1.bf16.msra.mxu0 %v1970
      %1995 = vmatprep.subr.bf16.mxu0 0
      %1996 = vmatpush1.bf16.msra.mxu0 %v1972
      %1997 = vmatprep.subr.bf16.mxu0 0
      %1998 = vmatpush1.bf16.msra.mxu0 %v1974
      %1999 = vmatprep.subr.bf16.mxu0 0
      %2000 = vmatpush1.bf16.msra.mxu0 %v1976
      %2001 = vmatprep.subr.bf16.mxu0 0
      %2002 = vmatpush1.bf16.msra.mxu0 0
      %2003 = vmatprep.subr.bf16.mxu0 0
      %2004 = vmatpush1.bf16.msra.mxu0 0
      %2005 = vmatprep.subr.bf16.mxu0 0
      %2006 = vmatpush1.bf16.msra.mxu0 0
      %2007 = vmatprep.subr.bf16.mxu0 0
      %2008 = vmatpush1.bf16.msra.mxu0 0
      %2009 = vmatprep.subr.bf16.mxu0 0
      %2010 = vmatpush1.bf16.msra.mxu0 0
      %2011 = vmatprep.subr.bf16.mxu0 0
      %2012 = vmatpush1.bf16.msra.mxu0 0
      %2013 = vmatprep.subr.bf16.mxu0 0
      %2014 = vmatpush1.bf16.msra.mxu0 0
      %2015 = vmatprep.subr.bf16.mxu0 0
      %2016 = vmatpush1.bf16.msra.mxu0 0
      %2017 = vmatprep.subr.bf16.mxu0 0
      %2018 = vmatpush1.bf16.msra.mxu0 0
      %2019 = vmatprep.subr.bf16.mxu0 0
      %2020 = vmatpush1.bf16.msra.mxu0 0
      %2021 = vmatprep.subr.bf16.mxu0 0
      %2022 = vmatpush1.bf16.msra.mxu0 0
      %2023 = vmatprep.subr.bf16.mxu0 0
      %2024 = vmatpush1.bf16.msra.mxu0 0
      %2025 = vmatprep.mubr.bf16.mxu0 0
      %2026 = vmatmul.mubr.bf16.gmra.mrb[0].mxu0 %v1982
      %v2027 = vpop.f32.mrb[0].mxu0
      %v2028 = vadd.f32 0.0, %v2027
      %v2029 = vpop.f32.mrb[0].mxu0
      %v2030 = vpop.f32.mrb[0].mxu0
      %v2031 = vadd.f32 0.0, %v2030
      %v2032 = vpop.f32.mrb[0].mxu0
      %2033 = vmatprep.mubr.bf16.mxu0 0
      %2034 = vmatmul.mubr.bf16.gmra.mrb[0].mxu0 %v1985
      %v2035 = vpop.f32.mrb[0].mxu0
      %v2036 = vadd.f32 0.0, %v2035
      %v2037 = vpop.f32.mrb[0].mxu0
      %v2038 = vpop.f32.mrb[0].mxu0
      %v2039 = vadd.f32 0.0, %v2038
      %v2040 = vpop.f32.mrb[0].mxu0
      %2041 = vmatprep.mubr.bf16.mxu0 0
      %2042 = vmatmul.mubr.bf16.gmra.mrb[0].mxu0 %v1988
      %v2043 = vpop.f32.mrb[0].mxu0
      %v2044 = vadd.f32 0.0, %v2043
      %v2045 = vpop.f32.mrb[0].mxu0
      %v2046 = vpop.f32.mrb[0].mxu0
      %v2047 = vadd.f32 0.0, %v2046
      %v2048 = vpop.f32.mrb[0].mxu0
      %2049 = vmatprep.mubr.bf16.mxu0 0
      %2050 = vmatmul.mubr.bf16.gmra.mrb[0].mxu0 %v1991
      %v2051 = vpop.f32.mrb[0].mxu0
      %v2052 = vadd.f32 0.0, %v2051
      %v2053 = vpop.f32.mrb[0].mxu0
      %v2054 = vpop.f32.mrb[0].mxu0
      %v2055 = vadd.f32 0.0, %v2054
      %v2056 = vpop.f32.mrb[0].mxu0
      %2057 = vdwg.mxu0
      %2066 = vrot.lane.b32.xlu0 %v1440, 8
      %v2067 = vpop.permute.xlu0 %2066
      %2068 = vrot.lane.b32.xlu0 %v1443, 8
      %v2069 = vpop.permute.xlu0 %2068
      %2070 = vrot.lane.b32.xlu0 %v1448, 8
      %v2071 = vpop.permute.xlu0 %2070
      %2072 = vrot.lane.b32.xlu0 %v1451, 8
      %v2073 = vpop.permute.xlu0 %2072
      %2074 = vrot.lane.b32.xlu0 %v1456, 8
      %v2075 = vpop.permute.xlu0 %2074
      %2076 = vrot.lane.b32.xlu0 %v1459, 8
      %v2077 = vpop.permute.xlu0 %2076
      %2078 = vrot.lane.b32.xlu0 %v1464, 8
      %v2079 = vpop.permute.xlu0 %2078
      %2080 = vrot.lane.b32.xlu0 %v1467, 8
      %v2081 = vpop.permute.xlu0 %2080
      %2098 = vrot.lane.b32.xlu0 %v1734, 16
      %v2099 = vpop.permute.xlu0 %2098
      %2100 = vrot.lane.b32.xlu0 %v1737, 16
      %v2101 = vpop.permute.xlu0 %2100
      %2102 = vrot.lane.b32.xlu0 %v1742, 16
      %v2103 = vpop.permute.xlu0 %2102
      %2104 = vrot.lane.b32.xlu0 %v1745, 16
      %v2105 = vpop.permute.xlu0 %2104
      %2106 = vrot.lane.b32.xlu0 %v1750, 16
      %v2107 = vpop.permute.xlu0 %2106
      %2108 = vrot.lane.b32.xlu0 %v1753, 16
      %v2109 = vpop.permute.xlu0 %2108
      %2110 = vrot.lane.b32.xlu0 %v1758, 16
      %v2111 = vpop.permute.xlu0 %2110
      %2112 = vrot.lane.b32.xlu0 %v1761, 16
      %v2113 = vpop.permute.xlu0 %2112
      %2130 = vrot.lane.b32.xlu0 %v2028, 24
      %v2131 = vpop.permute.xlu0 %2130
      %2132 = vrot.lane.b32.xlu0 %v2031, 24
      %v2133 = vpop.permute.xlu0 %2132
      %2134 = vrot.lane.b32.xlu0 %v2036, 24
      %v2135 = vpop.permute.xlu0 %2134
      %2136 = vrot.lane.b32.xlu0 %v2039, 24
      %v2137 = vpop.permute.xlu0 %2136
      %2138 = vrot.lane.b32.xlu0 %v2044, 24
      %v2139 = vpop.permute.xlu0 %2138
      %2140 = vrot.lane.b32.xlu0 %v2047, 24
      %v2141 = vpop.permute.xlu0 %2140
      %2142 = vrot.lane.b32.xlu0 %v2052, 24
      %v2143 = vpop.permute.xlu0 %2142
      %2144 = vrot.lane.b32.xlu0 %v2055, 24
      %v2145 = vpop.permute.xlu0 %2144
      %v2154 = vsel %vm606, %v1142, %v2067
      %v2155 = vsel %vm606, %v1145, %v2069
      %v2156 = vsel %vm606, %v1150, %v2071
      %v2157 = vsel %vm606, %v1153, %v2073
      %v2158 = vsel %vm606, %v1158, %v2075
      %v2159 = vsel %vm606, %v1161, %v2077
      %v2160 = vsel %vm606, %v1166, %v2079
      %v2161 = vsel %vm606, %v1169, %v2081
      %vm2162 = vcmask 130048
      %v2163 = vsel %vm2162, %v2154, %v2099
      %v2164 = vsel %vm2162, %v2155, %v2101
      %v2165 = vsel %vm2162, %v2156, %v2103
      %v2166 = vsel %vm2162, %v2157, %v2105
      %v2167 = vsel %vm2162, %v2158, %v2107
      %v2168 = vsel %vm2162, %v2159, %v2109
      %v2169 = vsel %vm2162, %v2160, %v2111
      %v2170 = vsel %vm2162, %v2161, %v2113
      %vm2171 = vcmask 195584
      %v2172 = vsel %vm2171, %v2163, %v2131
      %v2173 = vsel %vm2171, %v2164, %v2133
      %v2174 = vsel %vm2171, %v2165, %v2135
      %v2175 = vsel %vm2171, %v2166, %v2137
      %v2176 = vsel %vm2171, %v2167, %v2139
      %v2177 = vsel %vm2171, %v2168, %v2141
      %v2178 = vsel %vm2171, %v2169, %v2143
      %v2179 = vsel %vm2171, %v2170, %v2145
      %v2180 = vld [vmem:[%s8] sm:$0xff]
      %v2181 = vld [vmem:[%s8 + $0x8] sm:$0xff]
      %v2182 = vld [vmem:[%s8 + $0x10] sm:$0xff]
      %v2183 = vld [vmem:[%s8 + $0x18] sm:$0xff]
      %v2184 = vpack.c.bf16 %v2173, %v2172
      %v2185 = vpack.c.bf16 %v2175, %v2174
      %v2186 = vpack.c.bf16 %v2177, %v2176
      %v2187 = vpack.c.bf16 %v2179, %v2178
      %v2188 = vpack.c.bf16 %v2181, %v2180
      %v2189 = vpack.c.bf16 %v2183, %v2182
      %v2191 = vsel %vm713, %v2184, 0
      %v2194 = vsel %vm713, %v2185, 0
      %v2197 = vsel %vm713, %v2186, 0
      %v2200 = vsel %vm713, %v2187, 0
      %2202 = vmatprep.subr.bf16.mxu0 0
      %2203 = vmatpush1.bf16.msra.mxu0 %v2188
      %2204 = vmatprep.subr.bf16.mxu0 0
      %2205 = vmatpush1.bf16.msra.mxu0 %v2189
      %2206 = vmatprep.subr.bf16.mxu0 0
      %2207 = vmatpush1.bf16.msra.mxu0 0
      %2208 = vmatprep.subr.bf16.mxu0 0
      %2209 = vmatpush1.bf16.msra.mxu0 0
      %2210 = vmatprep.subr.bf16.mxu0 0
      %2211 = vmatpush1.bf16.msra.mxu0 0
      %2212 = vmatprep.subr.bf16.mxu0 0
      %2213 = vmatpush1.bf16.msra.mxu0 0
      %2214 = vmatprep.subr.bf16.mxu0 0
      %2215 = vmatpush1.bf16.msra.mxu0 0
      %2216 = vmatprep.subr.bf16.mxu0 0
      %2217 = vmatpush1.bf16.msra.mxu0 0
      %2218 = vmatprep.subr.bf16.mxu0 0
      %2219 = vmatpush1.bf16.msra.mxu0 0
      %2220 = vmatprep.subr.bf16.mxu0 0
      %2221 = vmatpush1.bf16.msra.mxu0 0
      %2222 = vmatprep.subr.bf16.mxu0 0
      %2223 = vmatpush1.bf16.msra.mxu0 0
      %2224 = vmatprep.subr.bf16.mxu0 0
      %2225 = vmatpush1.bf16.msra.mxu0 0
      %2226 = vmatprep.subr.bf16.mxu0 0
      %2227 = vmatpush1.bf16.msra.mxu0 0
      %2228 = vmatprep.subr.bf16.mxu0 0
      %2229 = vmatpush1.bf16.msra.mxu0 0
      %2230 = vmatprep.subr.bf16.mxu0 0
      %2231 = vmatpush1.bf16.msra.mxu0 0
      %2232 = vmatprep.subr.bf16.mxu0 0
      %2233 = vmatpush1.bf16.msra.mxu0 0
      %2234 = vmatprep.mubr.bf16.mxu0 0
      %2235 = vmatmul.mubr.bf16.gmra.mrb[0].mxu0 %v2191
      %v2236 = vpop.f32.mrb[0].mxu0
      %v2237 = vadd.f32 0.0, %v2236
      %v2238 = vpop.f32.mrb[0].mxu0
      %v2239 = vpop.f32.mrb[0].mxu0
      %v2240 = vadd.f32 0.0, %v2239
      %v2241 = vpop.f32.mrb[0].mxu0
      %2242 = vmatprep.mubr.bf16.mxu0 0
      %2243 = vmatmul.mubr.bf16.gmra.mrb[0].mxu0 %v2194
      %v2244 = vpop.f32.mrb[0].mxu0
      %v2245 = vadd.f32 0.0, %v2244
      %v2246 = vpop.f32.mrb[0].mxu0
      %v2247 = vpop.f32.mrb[0].mxu0
      %v2248 = vadd.f32 0.0, %v2247
      %v2249 = vpop.f32.mrb[0].mxu0
      %2250 = vmatprep.mubr.bf16.mxu0 0
      %2251 = vmatmul.mubr.bf16.gmra.mrb[0].mxu0 %v2197
      %v2252 = vpop.f32.mrb[0].mxu0
      %v2253 = vadd.f32 0.0, %v2252
      %v2254 = vpop.f32.mrb[0].mxu0
      %v2255 = vpop.f32.mrb[0].mxu0
      %v2256 = vadd.f32 0.0, %v2255
      %v2257 = vpop.f32.mrb[0].mxu0
      %2258 = vmatprep.mubr.bf16.mxu0 0
      %2259 = vmatmul.mubr.bf16.gmra.mrb[0].mxu0 %v2200
      %v2260 = vpop.f32.mrb[0].mxu0
      %v2261 = vadd.f32 0.0, %v2260
      %v2262 = vpop.f32.mrb[0].mxu0
      %v2263 = vpop.f32.mrb[0].mxu0
      %v2264 = vadd.f32 0.0, %v2263
      %v2265 = vpop.f32.mrb[0].mxu0
      %2266 = vdwg.mxu0
      %v2267 = vadd.f32 %v658, %v2237
      %v2268 = vadd.f32 %v661, %v2240
      %v2269 = vadd.f32 %v666, %v2245
      %v2270 = vadd.f32 %v669, %v2248
      %v2271 = vadd.f32 %v674, %v2253
      %v2272 = vadd.f32 %v677, %v2256
      %v2273 = vadd.f32 %v682, %v2261
      %v2274 = vadd.f32 %v685, %v2264
      %v2275 = vld [vmem:[%s9] sm:$0x1]
      %v2277 = vlaneseq
      %v2278 = vshrl.u32 %v2277, 7
      %v2279 = vsub.s32 0, %v2278
      %v2280 = vrot.slane %v2275, %v2279
      %v2282 = vadd.f32 %v2267, %v2280
      %v2283 = vadd.f32 %v2268, %v2280
      %v2284 = vadd.f32 %v2269, %v2280
      %v2285 = vadd.f32 %v2270, %v2280
      %v2286 = vadd.f32 %v2271, %v2280
      %v2287 = vadd.f32 %v2272, %v2280
      %v2288 = vadd.f32 %v2273, %v2280
      %v2289 = vadd.f32 %v2274, %v2280
      %v2290 = vld [vmem:[%s10] sm:$0x1]
      %v2291 = vld [vmem:[%s11] sm:$0x1]
      %v2292 = vsel %vm713, %v2282, 0.0
      %2293 = vadd.xlane.f32.xlu0 %v2292
      %v2294 = vpop.xlane.xlu0 %2293
      %v2295 = vsel %vm713, %v2283, 0.0
      %2296 = vadd.xlane.f32.xlu0 %v2295
      %v2297 = vpop.xlane.xlu0 %2296
      %v2298 = vsel %vm713, %v2284, 0.0
      %2299 = vadd.xlane.f32.xlu0 %v2298
      %v2300 = vpop.xlane.xlu0 %2299
      %v2301 = vsel %vm713, %v2285, 0.0
      %2302 = vadd.xlane.f32.xlu0 %v2301
      %v2303 = vpop.xlane.xlu0 %2302
      %v2304 = vsel %vm713, %v2286, 0.0
      %2305 = vadd.xlane.f32.xlu0 %v2304
      %v2306 = vpop.xlane.xlu0 %2305
      %v2307 = vsel %vm713, %v2287, 0.0
      %2308 = vadd.xlane.f32.xlu0 %v2307
      %v2309 = vpop.xlane.xlu0 %2308
      %v2310 = vsel %vm713, %v2288, 0.0
      %2311 = vadd.xlane.f32.xlu0 %v2310
      %v2312 = vpop.xlane.xlu0 %2311
      %v2313 = vsel %vm713, %v2289, 0.0
      %2314 = vadd.xlane.f32.xlu0 %v2313
      %v2315 = vpop.xlane.xlu0 %2314
      %v2316 = vrcp.pop 32.0
      %v2317 = vmul.f32 %v2294, %v2316
      %v2318 = vmul.f32 %v2297, %v2316
      %v2319 = vmul.f32 %v2300, %v2316
      %v2320 = vmul.f32 %v2303, %v2316
      %v2321 = vmul.f32 %v2306, %v2316
      %v2322 = vmul.f32 %v2309, %v2316
      %v2323 = vmul.f32 %v2312, %v2316
      %v2324 = vmul.f32 %v2315, %v2316
      %v2325 = vsub.f32 %v2282, %v2317
      %v2326 = vsub.f32 %v2283, %v2318
      %v2327 = vsub.f32 %v2284, %v2319
      %v2328 = vsub.f32 %v2285, %v2320
      %v2329 = vsub.f32 %v2286, %v2321
      %v2330 = vsub.f32 %v2287, %v2322
      %v2331 = vsub.f32 %v2288, %v2323
      %v2332 = vsub.f32 %v2289, %v2324
      %v2333 = vmul.f32 %v2325, %v2325
      %v2334 = vmul.f32 %v2326, %v2326
      %v2335 = vmul.f32 %v2327, %v2327
      %v2336 = vmul.f32 %v2328, %v2328
      %v2337 = vmul.f32 %v2329, %v2329
      %v2338 = vmul.f32 %v2330, %v2330
      %v2339 = vmul.f32 %v2331, %v2331
      %v2340 = vmul.f32 %v2332, %v2332
      %v2341 = vsel %vm713, %v2333, 0.0
      %2342 = vadd.xlane.f32.xlu0 %v2341
      %v2343 = vpop.xlane.xlu0 %2342
      %v2344 = vsel %vm713, %v2334, 0.0
      %2345 = vadd.xlane.f32.xlu0 %v2344
      %v2346 = vpop.xlane.xlu0 %2345
      %v2347 = vsel %vm713, %v2335, 0.0
      %2348 = vadd.xlane.f32.xlu0 %v2347
      %v2349 = vpop.xlane.xlu0 %2348
      %v2350 = vsel %vm713, %v2336, 0.0
      %2351 = vadd.xlane.f32.xlu0 %v2350
      %v2352 = vpop.xlane.xlu0 %2351
      %v2353 = vsel %vm713, %v2337, 0.0
      %2354 = vadd.xlane.f32.xlu0 %v2353
      %v2355 = vpop.xlane.xlu0 %2354
      %v2356 = vsel %vm713, %v2338, 0.0
      %2357 = vadd.xlane.f32.xlu0 %v2356
      %v2358 = vpop.xlane.xlu0 %2357
      %v2359 = vsel %vm713, %v2339, 0.0
      %2360 = vadd.xlane.f32.xlu0 %v2359
      %v2361 = vpop.xlane.xlu0 %2360
      %v2362 = vsel %vm713, %v2340, 0.0
      %2363 = vadd.xlane.f32.xlu0 %v2362
      %v2364 = vpop.xlane.xlu0 %2363
      %v2365 = vmul.f32 %v2343, %v2316
      %v2366 = vmul.f32 %v2346, %v2316
      %v2367 = vmul.f32 %v2349, %v2316
      %v2368 = vmul.f32 %v2352, %v2316
      %v2369 = vmul.f32 %v2355, %v2316
      %v2370 = vmul.f32 %v2358, %v2316
      %v2371 = vmul.f32 %v2361, %v2316
      %v2372 = vmul.f32 %v2364, %v2316
      %v2373 = vadd.f32 %v2365, 1e-05
      %v2374 = vadd.f32 %v2366, 1e-05
      %v2375 = vadd.f32 %v2367, 1e-05
      %v2376 = vadd.f32 %v2368, 1e-05
      %v2377 = vadd.f32 %v2369, 1e-05
      %v2378 = vadd.f32 %v2370, 1e-05
      %v2379 = vadd.f32 %v2371, 1e-05
      %v2380 = vadd.f32 %v2372, 1e-05
      %v2381 = vrsqrt.pop %v2373
      %v2382 = vrsqrt.pop %v2374
      %v2383 = vrsqrt.pop %v2375
      %v2384 = vrsqrt.pop %v2376
      %v2385 = vrsqrt.pop %v2377
      %v2386 = vrsqrt.pop %v2378
      %v2387 = vrsqrt.pop %v2379
      %v2388 = vrsqrt.pop %v2380
      %v2389 = vmul.f32 %v2325, %v2381
      %v2390 = vmul.f32 %v2326, %v2382
      %v2391 = vmul.f32 %v2327, %v2383
      %v2392 = vmul.f32 %v2328, %v2384
      %v2393 = vmul.f32 %v2329, %v2385
      %v2394 = vmul.f32 %v2330, %v2386
      %v2395 = vmul.f32 %v2331, %v2387
      %v2396 = vmul.f32 %v2332, %v2388
      %v2398 = vlaneseq
      %v2399 = vshrl.u32 %v2398, 7
      %v2400 = vsub.s32 0, %v2399
      %v2401 = vrot.slane %v2290, %v2400
      %v2403 = vmul.f32 %v2389, %v2401
      %v2404 = vmul.f32 %v2390, %v2401
      %v2405 = vmul.f32 %v2391, %v2401
      %v2406 = vmul.f32 %v2392, %v2401
      %v2407 = vmul.f32 %v2393, %v2401
      %v2408 = vmul.f32 %v2394, %v2401
      %v2409 = vmul.f32 %v2395, %v2401
      %v2410 = vmul.f32 %v2396, %v2401
      %v2412 = vlaneseq
      %v2413 = vshrl.u32 %v2412, 7
      %v2414 = vsub.s32 0, %v2413
      %v2415 = vrot.slane %v2291, %v2414
      %v2417 = vadd.f32 %v2403, %v2415
      %v2418 = vadd.f32 %v2404, %v2415
      %v2419 = vadd.f32 %v2405, %v2415
      %v2420 = vadd.f32 %v2406, %v2415
      %v2421 = vadd.f32 %v2407, %v2415
      %v2422 = vadd.f32 %v2408, %v2415
      %v2423 = vadd.f32 %v2409, %v2415
      %v2424 = vadd.f32 %v2410, %v2415
      %v2425 = vld [vmem:[%s12] sm:$0xff]
      %v2426 = vld [vmem:[%s12 + $0x8] sm:$0xff]
      %v2427 = vld [vmem:[%s12 + $0x10] sm:$0xff]
      %v2428 = vld [vmem:[%s12 + $0x18] sm:$0xff]
      %v2429 = vpack.c.bf16 %v2418, %v2417
      %v2430 = vpack.c.bf16 %v2420, %v2419
      %v2431 = vpack.c.bf16 %v2422, %v2421
      %v2432 = vpack.c.bf16 %v2424, %v2423
      %v2433 = vpack.c.bf16 %v2426, %v2425
      %v2434 = vpack.c.bf16 %v2428, %v2427
      %v2435 = vld [vmem:[%s13] sm:$0x1]
      %v2437 = vlaneseq
      %v2438 = vshrl.u32 %v2437, 7
      %v2439 = vsub.s32 0, %v2438
      %v2440 = vrot.slane %v2435, %v2439
      %v2443 = vsel %vm713, %v2429, 0
      %v2446 = vsel %vm713, %v2430, 0
      %v2449 = vsel %vm713, %v2431, 0
      %v2452 = vsel %vm713, %v2432, 0
      %2454 = vmatprep.subr.bf16.mxu0 0
      %2455 = vmatpush1.bf16.msra.mxu0 %v2433
      %2456 = vmatprep.subr.bf16.mxu0 0
      %2457 = vmatpush1.bf16.msra.mxu0 %v2434
      %2458 = vmatprep.subr.bf16.mxu0 0
      %2459 = vmatpush1.bf16.msra.mxu0 0
      %2460 = vmatprep.subr.bf16.mxu0 0
      %2461 = vmatpush1.bf16.msra.mxu0 0
      %2462 = vmatprep.subr.bf16.mxu0 0
      %2463 = vmatpush1.bf16.msra.mxu0 0
      %2464 = vmatprep.subr.bf16.mxu0 0
      %2465 = vmatpush1.bf16.msra.mxu0 0
      %2466 = vmatprep.subr.bf16.mxu0 0
      %2467 = vmatpush1.bf16.msra.mxu0 0
      %2468 = vmatprep.subr.bf16.mxu0 0
      %2469 = vmatpush1.bf16.msra.mxu0 0
      %2470 = vmatprep.subr.bf16.mxu0 0
      %2471 = vmatpush1.bf16.msra.mxu0 0
      %2472 = vmatprep.subr.bf16.mxu0 0
      %2473 = vmatpush1.bf16.msra.mxu0 0
      %2474 = vmatprep.subr.bf16.mxu0 0
      %2475 = vmatpush1.bf16.msra.mxu0 0
      %2476 = vmatprep.subr.bf16.mxu0 0
      %2477 = vmatpush1.bf16.msra.mxu0 0
      %2478 = vmatprep.subr.bf16.mxu0 0
      %2479 = vmatpush1.bf16.msra.mxu0 0
      %2480 = vmatprep.subr.bf16.mxu0 0
      %2481 = vmatpush1.bf16.msra.mxu0 0
      %2482 = vmatprep.subr.bf16.mxu0 0
      %2483 = vmatpush1.bf16.msra.mxu0 0
      %2484 = vmatprep.subr.bf16.mxu0 0
      %2485 = vmatpush1.bf16.msra.mxu0 0
      %2486 = vmatprep.mubr.bf16.mxu0 0
      %2487 = vmatmul.mubr.bf16.gmra.mrb[0].mxu0 %v2443
      %v2488 = vpop.f32.mrb[0].mxu0
      %v2489 = vadd.f32 %v2440, %v2488
      %v2490 = vpop.f32.mrb[0].mxu0
      %v2491 = vpop.f32.mrb[0].mxu0
      %v2492 = vadd.f32 %v2440, %v2491
      %v2493 = vpop.f32.mrb[0].mxu0
      %2494 = vmatprep.mubr.bf16.mxu0 0
      %2495 = vmatmul.mubr.bf16.gmra.mrb[0].mxu0 %v2446
      %v2496 = vpop.f32.mrb[0].mxu0
      %v2497 = vadd.f32 %v2440, %v2496
      %v2498 = vpop.f32.mrb[0].mxu0
      %v2499 = vpop.f32.mrb[0].mxu0
      %v2500 = vadd.f32 %v2440, %v2499
      %v2501 = vpop.f32.mrb[0].mxu0
      %2502 = vmatprep.mubr.bf16.mxu0 0
      %2503 = vmatmul.mubr.bf16.gmra.mrb[0].mxu0 %v2449
      %v2504 = vpop.f32.mrb[0].mxu0
      %v2505 = vadd.f32 %v2440, %v2504
      %v2506 = vpop.f32.mrb[0].mxu0
      %v2507 = vpop.f32.mrb[0].mxu0
      %v2508 = vadd.f32 %v2440, %v2507
      %v2509 = vpop.f32.mrb[0].mxu0
      %2510 = vmatprep.mubr.bf16.mxu0 0
      %2511 = vmatmul.mubr.bf16.gmra.mrb[0].mxu0 %v2452
      %v2512 = vpop.f32.mrb[0].mxu0
      %v2513 = vadd.f32 %v2440, %v2512
      %v2514 = vpop.f32.mrb[0].mxu0
      %v2515 = vpop.f32.mrb[0].mxu0
      %v2516 = vadd.f32 %v2440, %v2515
      %v2517 = vpop.f32.mrb[0].mxu0
      %2518 = vdwg.mxu0
      %v2519 = vmax.f32 %v2489, 0.0
      %v2520 = vmax.f32 %v2492, 0.0
      %v2521 = vmax.f32 %v2497, 0.0
      %v2522 = vmax.f32 %v2500, 0.0
      %v2523 = vmax.f32 %v2505, 0.0
      %v2524 = vmax.f32 %v2508, 0.0
      %v2525 = vmax.f32 %v2513, 0.0
      %v2526 = vmax.f32 %v2516, 0.0
      %v2527 = vld [vmem:[%s14] sm:$0xff]
      %v2528 = vld [vmem:[%s14 + $0x8] sm:$0xff]
      %v2529 = vld [vmem:[%s14 + $0x10] sm:$0xff]
      %v2530 = vld [vmem:[%s14 + $0x18] sm:$0xff]
      %v2531 = vld [vmem:[%s14 + $0x20] sm:$0xff]
      %v2532 = vld [vmem:[%s14 + $0x28] sm:$0xff]
      %v2533 = vld [vmem:[%s14 + $0x30] sm:$0xff]
      %v2534 = vld [vmem:[%s14 + $0x38] sm:$0xff]
      %v2535 = vld [vmem:[%s14 + $0x40] sm:$0xff]
      %v2536 = vld [vmem:[%s14 + $0x48] sm:$0xff]
      %v2537 = vld [vmem:[%s14 + $0x50] sm:$0xff]
      %v2538 = vld [vmem:[%s14 + $0x58] sm:$0xff]
      %v2539 = vld [vmem:[%s14 + $0x60] sm:$0xff]
      %v2540 = vld [vmem:[%s14 + $0x68] sm:$0xff]
      %v2541 = vld [vmem:[%s14 + $0x70] sm:$0xff]
      %v2542 = vld [vmem:[%s14 + $0x78] sm:$0xff]
      %v2543 = vpack.c.bf16 %v2520, %v2519
      %v2544 = vpack.c.bf16 %v2522, %v2521
      %v2545 = vpack.c.bf16 %v2524, %v2523
      %v2546 = vpack.c.bf16 %v2526, %v2525
      %v2547 = vpack.c.bf16 %v2528, %v2527
      %v2548 = vpack.c.bf16 %v2530, %v2529
      %v2549 = vpack.c.bf16 %v2532, %v2531
      %v2550 = vpack.c.bf16 %v2534, %v2533
      %v2551 = vpack.c.bf16 %v2536, %v2535
      %v2552 = vpack.c.bf16 %v2538, %v2537
      %v2553 = vpack.c.bf16 %v2540, %v2539
      %v2554 = vpack.c.bf16 %v2542, %v2541
      %v2555 = vld [vmem:[%s15] sm:$0x1]
      %v2557 = vlaneseq
      %v2558 = vshrl.u32 %v2557, 7
      %v2559 = vsub.s32 0, %v2558
      %v2560 = vrot.slane %v2555, %v2559
      %2562 = vmatprep.subr.bf16.mxu0 0
      %2563 = vmatpush1.bf16.msra.mxu0 %v2547
      %2564 = vmatprep.subr.bf16.mxu0 0
      %2565 = vmatpush1.bf16.msra.mxu0 %v2548
      %2566 = vmatprep.subr.bf16.mxu0 0
      %2567 = vmatpush1.bf16.msra.mxu0 %v2549
      %2568 = vmatprep.subr.bf16.mxu0 0
      %2569 = vmatpush1.bf16.msra.mxu0 %v2550
      %2570 = vmatprep.subr.bf16.mxu0 0
      %2571 = vmatpush1.bf16.msra.mxu0 %v2551
      %2572 = vmatprep.subr.bf16.mxu0 0
      %2573 = vmatpush1.bf16.msra.mxu0 %v2552
      %2574 = vmatprep.subr.bf16.mxu0 0
      %2575 = vmatpush1.bf16.msra.mxu0 %v2553
      %2576 = vmatprep.subr.bf16.mxu0 0
      %2577 = vmatpush1.bf16.msra.mxu0 %v2554
      %2578 = vmatprep.subr.bf16.mxu0 0
      %2579 = vmatpush1.bf16.msra.mxu0 0
      %2580 = vmatprep.subr.bf16.mxu0 0
      %2581 = vmatpush1.bf16.msra.mxu0 0
      %2582 = vmatprep.subr.bf16.mxu0 0
      %2583 = vmatpush1.bf16.msra.mxu0 0
      %2584 = vmatprep.subr.bf16.mxu0 0
      %2585 = vmatpush1.bf16.msra.mxu0 0
      %2586 = vmatprep.subr.bf16.mxu0 0
      %2587 = vmatpush1.bf16.msra.mxu0 0
      %2588 = vmatprep.subr.bf16.mxu0 0
      %2589 = vmatpush1.bf16.msra.mxu0 0
      %2590 = vmatprep.subr.bf16.mxu0 0
      %2591 = vmatpush1.bf16.msra.mxu0 0
      %2592 = vmatprep.subr.bf16.mxu0 0
      %2593 = vmatpush1.bf16.msra.mxu0 0
      %2594 = vmatprep.mubr.bf16.mxu0 0
      %2595 = vmatmul.mubr.bf16.gmra.mrb[0].mxu0 %v2543
      %v2596 = vpop.f32.mrb[0].mxu0
      %v2597 = vadd.f32 %v2560, %v2596
      %v2598 = vpop.f32.mrb[0].mxu0
      %v2599 = vpop.f32.mrb[0].mxu0
      %v2600 = vadd.f32 %v2560, %v2599
      %v2601 = vpop.f32.mrb[0].mxu0
      %2602 = vmatprep.mubr.bf16.mxu0 0
      %2603 = vmatmul.mubr.bf16.gmra.mrb[0].mxu0 %v2544
      %v2604 = vpop.f32.mrb[0].mxu0
      %v2605 = vadd.f32 %v2560, %v2604
      %v2606 = vpop.f32.mrb[0].mxu0
      %v2607 = vpop.f32.mrb[0].mxu0
      %v2608 = vadd.f32 %v2560, %v2607
      %v2609 = vpop.f32.mrb[0].mxu0
      %2610 = vmatprep.mubr.bf16.mxu0 0
      %2611 = vmatmul.mubr.bf16.gmra.mrb[0].mxu0 %v2545
      %v2612 = vpop.f32.mrb[0].mxu0
      %v2613 = vadd.f32 %v2560, %v2612
      %v2614 = vpop.f32.mrb[0].mxu0
      %v2615 = vpop.f32.mrb[0].mxu0
      %v2616 = vadd.f32 %v2560, %v2615
      %v2617 = vpop.f32.mrb[0].mxu0
      %2618 = vmatprep.mubr.bf16.mxu0 0
      %2619 = vmatmul.mubr.bf16.gmra.mrb[0].mxu0 %v2546
      %v2620 = vpop.f32.mrb[0].mxu0
      %v2621 = vadd.f32 %v2560, %v2620
      %v2622 = vpop.f32.mrb[0].mxu0
      %v2623 = vpop.f32.mrb[0].mxu0
      %v2624 = vadd.f32 %v2560, %v2623
      %v2625 = vpop.f32.mrb[0].mxu0
      %2626 = vdwg.mxu0
      %v2627 = vadd.f32 %v2417, %v2597
      %v2628 = vadd.f32 %v2418, %v2600
      %v2629 = vadd.f32 %v2419, %v2605
      %v2630 = vadd.f32 %v2420, %v2608
      %v2631 = vadd.f32 %v2421, %v2613
      %v2632 = vadd.f32 %v2422, %v2616
      %v2633 = vadd.f32 %v2423, %v2621
      %v2634 = vadd.f32 %v2424, %v2624
      %v2635 = vld [vmem:[%s16] sm:$0x1]
      %v2636 = vld [vmem:[%s17] sm:$0x1]
      %v2637 = vsel %vm713, %v2627, 0.0
      %2638 = vadd.xlane.f32.xlu0 %v2637
      %v2639 = vpop.xlane.xlu0 %2638
      %v2640 = vsel %vm713, %v2628, 0.0
      %2641 = vadd.xlane.f32.xlu0 %v2640
      %v2642 = vpop.xlane.xlu0 %2641
      %v2643 = vsel %vm713, %v2629, 0.0
      %2644 = vadd.xlane.f32.xlu0 %v2643
      %v2645 = vpop.xlane.xlu0 %2644
      %v2646 = vsel %vm713, %v2630, 0.0
      %2647 = vadd.xlane.f32.xlu0 %v2646
      %v2648 = vpop.xlane.xlu0 %2647
      %v2649 = vsel %vm713, %v2631, 0.0
      %2650 = vadd.xlane.f32.xlu0 %v2649
      %v2651 = vpop.xlane.xlu0 %2650
      %v2652 = vsel %vm713, %v2632, 0.0
      %2653 = vadd.xlane.f32.xlu0 %v2652
      %v2654 = vpop.xlane.xlu0 %2653
      %v2655 = vsel %vm713, %v2633, 0.0
      %2656 = vadd.xlane.f32.xlu0 %v2655
      %v2657 = vpop.xlane.xlu0 %2656
      %v2658 = vsel %vm713, %v2634, 0.0
      %2659 = vadd.xlane.f32.xlu0 %v2658
      %v2660 = vpop.xlane.xlu0 %2659
      %v2661 = vmul.f32 %v2639, %v2316
      %v2662 = vmul.f32 %v2642, %v2316
      %v2663 = vmul.f32 %v2645, %v2316
      %v2664 = vmul.f32 %v2648, %v2316
      %v2665 = vmul.f32 %v2651, %v2316
      %v2666 = vmul.f32 %v2654, %v2316
      %v2667 = vmul.f32 %v2657, %v2316
      %v2668 = vmul.f32 %v2660, %v2316
      %v2669 = vsub.f32 %v2627, %v2661
      %v2670 = vsub.f32 %v2628, %v2662
      %v2671 = vsub.f32 %v2629, %v2663
      %v2672 = vsub.f32 %v2630, %v2664
      %v2673 = vsub.f32 %v2631, %v2665
      %v2674 = vsub.f32 %v2632, %v2666
      %v2675 = vsub.f32 %v2633, %v2667
      %v2676 = vsub.f32 %v2634, %v2668
      %v2677 = vmul.f32 %v2669, %v2669
      %v2678 = vmul.f32 %v2670, %v2670
      %v2679 = vmul.f32 %v2671, %v2671
      %v2680 = vmul.f32 %v2672, %v2672
      %v2681 = vmul.f32 %v2673, %v2673
      %v2682 = vmul.f32 %v2674, %v2674
      %v2683 = vmul.f32 %v2675, %v2675
      %v2684 = vmul.f32 %v2676, %v2676
      %v2685 = vsel %vm713, %v2677, 0.0
      %2686 = vadd.xlane.f32.xlu0 %v2685
      %v2687 = vpop.xlane.xlu0 %2686
      %v2688 = vsel %vm713, %v2678, 0.0
      %2689 = vadd.xlane.f32.xlu0 %v2688
      %v2690 = vpop.xlane.xlu0 %2689
      %v2691 = vsel %vm713, %v2679, 0.0
      %2692 = vadd.xlane.f32.xlu0 %v2691
      %v2693 = vpop.xlane.xlu0 %2692
      %v2694 = vsel %vm713, %v2680, 0.0
      %2695 = vadd.xlane.f32.xlu0 %v2694
      %v2696 = vpop.xlane.xlu0 %2695
      %v2697 = vsel %vm713, %v2681, 0.0
      %2698 = vadd.xlane.f32.xlu0 %v2697
      %v2699 = vpop.xlane.xlu0 %2698
      %v2700 = vsel %vm713, %v2682, 0.0
      %2701 = vadd.xlane.f32.xlu0 %v2700
      %v2702 = vpop.xlane.xlu0 %2701
      %v2703 = vsel %vm713, %v2683, 0.0
      %2704 = vadd.xlane.f32.xlu0 %v2703
      %v2705 = vpop.xlane.xlu0 %2704
      %v2706 = vsel %vm713, %v2684, 0.0
      %2707 = vadd.xlane.f32.xlu0 %v2706
      %v2708 = vpop.xlane.xlu0 %2707
      %v2709 = vmul.f32 %v2687, %v2316
      %v2710 = vmul.f32 %v2690, %v2316
      %v2711 = vmul.f32 %v2693, %v2316
      %v2712 = vmul.f32 %v2696, %v2316
      %v2713 = vmul.f32 %v2699, %v2316
      %v2714 = vmul.f32 %v2702, %v2316
      %v2715 = vmul.f32 %v2705, %v2316
      %v2716 = vmul.f32 %v2708, %v2316
      %v2717 = vadd.f32 %v2709, 1e-05
      %v2718 = vadd.f32 %v2710, 1e-05
      %v2719 = vadd.f32 %v2711, 1e-05
      %v2720 = vadd.f32 %v2712, 1e-05
      %v2721 = vadd.f32 %v2713, 1e-05
      %v2722 = vadd.f32 %v2714, 1e-05
      %v2723 = vadd.f32 %v2715, 1e-05
      %v2724 = vadd.f32 %v2716, 1e-05
      %v2725 = vrsqrt.pop %v2717
      %v2726 = vrsqrt.pop %v2718
      %v2727 = vrsqrt.pop %v2719
      %v2728 = vrsqrt.pop %v2720
      %v2729 = vrsqrt.pop %v2721
      %v2730 = vrsqrt.pop %v2722
      %v2731 = vrsqrt.pop %v2723
      %v2732 = vrsqrt.pop %v2724
      %v2733 = vmul.f32 %v2669, %v2725
      %v2734 = vmul.f32 %v2670, %v2726
      %v2735 = vmul.f32 %v2671, %v2727
      %v2736 = vmul.f32 %v2672, %v2728
      %v2737 = vmul.f32 %v2673, %v2729
      %v2738 = vmul.f32 %v2674, %v2730
      %v2739 = vmul.f32 %v2675, %v2731
      %v2740 = vmul.f32 %v2676, %v2732
      %v2742 = vlaneseq
      %v2743 = vshrl.u32 %v2742, 7
      %v2744 = vsub.s32 0, %v2743
      %v2745 = vrot.slane %v2635, %v2744
      %v2747 = vmul.f32 %v2733, %v2745
      %v2748 = vmul.f32 %v2734, %v2745
      %v2749 = vmul.f32 %v2735, %v2745
      %v2750 = vmul.f32 %v2736, %v2745
      %v2751 = vmul.f32 %v2737, %v2745
      %v2752 = vmul.f32 %v2738, %v2745
      %v2753 = vmul.f32 %v2739, %v2745
      %v2754 = vmul.f32 %v2740, %v2745
      %v2756 = vlaneseq
      %v2757 = vshrl.u32 %v2756, 7
      %v2758 = vsub.s32 0, %v2757
      %v2759 = vrot.slane %v2636, %v2758
      %v2761 = vadd.f32 %v2747, %v2759
      %v2762 = vadd.f32 %v2748, %v2759
      %v2763 = vadd.f32 %v2749, %v2759
      %v2764 = vadd.f32 %v2750, %v2759
      %v2765 = vadd.f32 %v2751, %v2759
      %v2766 = vadd.f32 %v2752, %v2759
      %v2767 = vadd.f32 %v2753, %v2759
      %v2768 = vadd.f32 %v2754, %v2759
      %2769 = vst.msk [vmem:[%s575] sm:$0xff] %vm713, %v2761
      %2770 = vst.msk [vmem:[%s575 + $0x8] sm:$0xff] %vm713, %v2762
      %2771 = vst.msk [vmem:[%s575 + $0x10] sm:$0xff] %vm713, %v2763
      %2772 = vst.msk [vmem:[%s575 + $0x18] sm:$0xff] %vm713, %v2764
      %2773 = vst.msk [vmem:[%s575 + $0x20] sm:$0xff] %vm713, %v2765
      %2774 = vst.msk [vmem:[%s575 + $0x28] sm:$0xff] %vm713, %v2766
      %2775 = vst.msk [vmem:[%s575 + $0x30] sm:$0xff] %vm713, %v2767
      %2776 = vst.msk [vmem:[%s575 + $0x38] sm:$0xff] %vm713, %v2768
      %p2777 = scmp.lt.s32.totalorder %s29, 1
      %s2778 = scalar_select %p2777, %s29, 1
      %s2779 = smul.addr %s2778, 8
      %s2780 = smul.addr %s2779, 8
      %s2781 = scalar_lea.vmem %s18, %s2780
      // Predicated region
      $region93: #{caption_encoder_forward.1} parent=91 // pred_check
        %p2782 = pneg %p430
      $region94: #{caption_encoder_forward.1} parent=91 // pred_check_branch
        %2784 = sbr.rel (%p2782) target = $region96
      $region95: #{caption_encoder_forward.1} parent=91 // pred_region
        _
      $region96: #{caption_encoder_forward.1} parent=91 // pred_fallthru
        _
    $region92: #{caption_encoder_forward.1} parent=5 // pred_fallthru
      _
    %p2785 = scmp.le.s32.totalorder 2, %s24
    // Predicated region
    $region97: #{caption_encoder_forward.1} parent=5 // pred_check
      %p2786 = pneg %p2785
    $region98: #{caption_encoder_forward.1} parent=5 // pred_check_branch
      %2788 = sbr.rel (%p2786) target = $region100
    $region99: #{caption_encoder_forward.1} parent=5 // pred_region
      %s2789 = ssub.s32 %s24, 2
      // Predicated region
      $region101: #{caption_encoder_forward.1} parent=99 // pred_check
        %p2790 = pneg %p436
      $region102: #{caption_encoder_forward.1} parent=99 // pred_check_branch
        %2792 = sbr.rel (%p2790) target = $region104
      $region103: #{caption_encoder_forward.1} parent=99 // pred_region
        %p2793 = scmp.lt.s32.totalorder %s30, 1
        %s2794 = scalar_select %p2793, %s30, 1
        %s2795 = smul.addr %s2794, 8
        %s2796 = smul.addr %s2795, 8
        %s2797 = scalar_lea.vmem %s18, %s2796
      $region104: #{caption_encoder_forward.1} parent=99 // pred_fallthru
        _
    $region100: #{caption_encoder_forward.1} parent=5 // pred_fallthru
      _
  $region6: #{caption_encoder_forward.1} parent=0 // loop_footer
    %s28 = sadd.s32 1, %s24
  $region7: #{caption_encoder_forward.1} parent=0 // loop_footer_branch
    %23 = sbr.rel target = $region3
  $region8: #{caption_encoder_forward.1} parent=0 // loop_exit
    _

</llo_original>
